<compile_context>
chip_gen: v6e
topology: v6e:2x2x1
jax: 0.10.0
libtpu: 0.0.40
codegen_flags: <defaults>
</compile_context>

<pallas_src>
import functools

import jax
import jax.numpy as jnp
from jax.experimental import pallas as pl
from jax.experimental.pallas import tpu as pltpu


def _round_up(x, m):
    return (x + m - 1) // m * m


def _pad2(x, rows, cols):
    r, c = x.shape
    if r == rows and c == cols:
        return x
    return jnp.pad(x, ((0, rows - r), (0, cols - c)))


def _pick_vmem_limit():
    # v7x has 64 MiB physical VMEM per TensorCore; v5e/v6e have 128 MiB.  Scale the
    # scoped limit with the part (<= ~48 MiB on v7x, up to 96 MiB on v5e/v6e); fall
    # back to a 48 MiB cap that is safe on every current generation.
    try:
        cap = int(pltpu.get_tpu_info().vmem_capacity_bytes)
        return max(32 * 1024 * 1024, min(cap * 3 // 4, 96 * 1024 * 1024))
    except Exception:  # conservative, works everywhere
        return 48 * 1024 * 1024


_VMEM_LIMIT = _pick_vmem_limit()

# Tile caps (bf16 inputs, f32 accumulator).  Worst-case VMEM footprint with these caps
# (cproj matmul with fused LN at width 1024: A/B/res double-buffered + acc + 2 outputs)
# is ~20-30 MiB, comfortably inside the limit above on every generation.
_TM_CAP, _TN_CAP, _TK_CAP = 512, 512, 2048


def _pick_tile(dim, cap, align):
    """Pick a tile size for one dimension.  Returns (tile, padded_dim).

    Prefers an exact divisor so no pad/slice HBM copies are needed; a full-dim tile is
    always legal regardless of alignment."""
    if dim <= cap:
        return dim, dim
    limit = (cap // align) * align
    floor = max(align, limit // 4)
    t = limit
    while t >= floor:
        if dim % t == 0:
            return t, dim
        t -= align
    return limit, _round_up(dim, limit)


# ------------------------- fused matmul (+bias/gelu/res/LN) -------------------------

def _mm_kernel(*refs, act, has_bias, has_res, fuse_ln, eps, single_k):
    it = iter(refs)
    a_ref = next(it)
    b_ref = next(it)
    bias_ref = next(it) if has_bias else None
    res_ref = next(it) if has_res else None
    g_ref = beta_ref = None
    if fuse_ln:
        g_ref = next(it)
        beta_ref = next(it)
    o_ref = next(it)
    ln_ref = next(it) if fuse_ln else None
    acc_ref = None if single_k else next(it)

    def epilogue(acc):
        y = acc
        if has_bias:
            y = y + bias_ref[...].astype(jnp.float32)
        if act == "quick_gelu":
            # CLIP QuickGELU: x * sigmoid(1.702 * x)  (sigmoid runs on the EUP)
            y = y * jax.nn.sigmoid(1.702 * y)
        if has_res:
            y = y + res_ref[...].astype(jnp.float32)
        o_ref[...] = y.astype(o_ref.dtype)
        if fuse_ln:
            # tn == N, so the full feature row is in this tile and LN reduces locally.
            mean = jnp.mean(y, axis=-1, keepdims=True)
            var = jnp.mean(jnp.square(y - mean), axis=-1, keepdims=True)
            z = (y - mean) * jax.lax.rsqrt(var + eps)
            z = z * g_ref[...].astype(jnp.float32) + beta_ref[...].astype(jnp.float32)
            ln_ref[...] = z.astype(ln_ref.dtype)

    if single_k:
        epilogue(jnp.dot(a_ref[...], b_ref[...], preferred_element_type=jnp.float32))
    else:
        @pl.when(pl.program_id(2) == 0)
        def _():
            acc_ref[...] = jnp.zeros_like(acc_ref)

        acc_ref[...] += jnp.dot(a_ref[...], b_ref[...],
                                preferred_element_type=jnp.float32)

        @pl.when(pl.program_id(2) == pl.num_programs(2) - 1)
        def _():
            epilogue(acc_ref[...])


def matmul_fused(a, b, bias=None, res=None, act=None, ln=None,
                 out_dtype=jnp.bfloat16, ln_dtype=jnp.bfloat16, eps=1e-5):
    """(M, K) @ (K, N) [+ bias] [QuickGELU] [+ res], optionally emitting LayerNorm(out).

    When `ln=(gamma, beta)` is given the kernel also returns LN(out) as a second array
    (tn is forced to N so the LN reduction stays inside one tile).
    """
    M, K = a.shape
    K2, N = b.shape
    assert K == K2
    has_bias = bias is not None
    has_res = res is not None
    fuse_ln = ln is not None

    tm, Mp = _pick_tile(M, _TM_CAP, 8)
    if fuse_ln:
        tn, Np = N, N                       # full feature row per tile
    else:
        tn, Np = _pick_tile(N, _TN_CAP, 128)
    tk, Kp = _pick_tile(K, _TK_CAP, 128)
    nm, nj, nk = Mp // tm, Np // tn, Kp // tk
    single_k = nk == 1

    a_p = a.astype(jnp.bfloat16)
    if (Mp, Kp) != (M, K):
        a_p = _pad2(a_p, Mp, Kp)
    b_p = b.astype(jnp.bfloat16)
    if (Kp, Np) != (K, N):
        b_p = _pad2(b_p, Kp, Np)

    inputs = [a_p, b_p]
    in_specs = [pl.BlockSpec((tm, tk), lambda i, j, k: (i, k)),
                pl.BlockSpec((tk, tn), lambda i, j, k: (k, j))]
    if has_bias:
        bias_p = _pad2(bias.astype(jnp.float32).reshape(1, N), 1, Np)
        inputs.append(bias_p)
        in_specs.append(pl.BlockSpec((1, tn), lambda i, j, k: (0, j)))
    if has_res:
        res_p = res.astype(jnp.bfloat16)
        if (Mp, Np) != (M, N):
            res_p = _pad2(res_p, Mp, Np)
        inputs.append(res_p)
        in_specs.append(pl.BlockSpec((tm, tn), lambda i, j, k: (i, j)))
    if fuse_ln:
        gamma, beta = ln
        inputs.append(gamma.astype(jnp.float32).reshape(1, N))
        in_specs.append(pl.BlockSpec((1, tn), lambda i, j, k: (0, j)))
        inputs.append(beta.astype(jnp.float32).reshape(1, N))
        in_specs.append(pl.BlockSpec((1, tn), lambda i, j, k: (0, j)))

    out_spec = pl.BlockSpec((tm, tn), lambda i, j, k: (i, j))
    if fuse_ln:
        out_shape = (jax.ShapeDtypeStruct((Mp, Np), out_dtype),
                     jax.ShapeDtypeStruct((Mp, Np), ln_dtype))
        out_specs = (out_spec, out_spec)
    else:
        out_shape = jax.ShapeDtypeStruct((Mp, Np), out_dtype)
        out_specs = out_spec

    scratch = [] if single_k else [pltpu.VMEM((tm, tn), jnp.float32)]

    out_bytes = Mp * Np * jnp.dtype(out_dtype).itemsize
    if fuse_ln:
        out_bytes += Mp * Np * jnp.dtype(ln_dtype).itemsize
    cost = pl.CostEstimate(
        flops=2 * Mp * Np * Kp,
        transcendentals=(Mp * Np if act == "quick_gelu" else 0),
        bytes_accessed=(Mp * Kp * 2 + Kp * Np * 2 + out_bytes
                        + (Np * 4 if has_bias else 0)
                        + (Mp * Np * 2 if has_res else 0)
                        + (2 * Np * 4 if fuse_ln else 0)),
    )

    outs = pl.pallas_call(
        functools.partial(_mm_kernel, act=act, has_bias=has_bias, has_res=has_res,
                          fuse_ln=fuse_ln, eps=eps, single_k=single_k),
        out_shape=out_shape,
        grid=(nm, nj, nk),
        in_specs=in_specs,
        out_specs=out_specs,
        scratch_shapes=scratch,
        compiler_params=pltpu.CompilerParams(
            dimension_semantics=("parallel", "parallel", "arbitrary"),
            vmem_limit_bytes=_VMEM_LIMIT),
        cost_estimate=cost,
    )(*inputs)

    if fuse_ln:
        o, lno = outs
        if (Mp, Np) != (M, N):
            o, lno = o[:M, :N], lno[:M, :N]
        return o, lno
    o = outs
    if (Mp, Np) != (M, N):
        o = o[:M, :N]
    return o


# ----------------------------- double LayerNorm ------------------------------

def _layernorm2_kernel(x_ref, g1_ref, b1_ref, g2_ref, b2_ref, o1_ref, o2_ref, *, eps):
    x = x_ref[...].astype(jnp.float32)
    mean = jnp.mean(x, axis=-1, keepdims=True)
    var = jnp.mean(jnp.square(x - mean), axis=-1, keepdims=True)
    y1 = (x - mean) * jax.lax.rsqrt(var + eps)
    y1 = y1 * g1_ref[...].astype(jnp.float32) + b1_ref[...].astype(jnp.float32)
    o1_ref[...] = y1.astype(o1_ref.dtype)
    mean2 = jnp.mean(y1, axis=-1, keepdims=True)
    var2 = jnp.mean(jnp.square(y1 - mean2), axis=-1, keepdims=True)
    y2 = (y1 - mean2) * jax.lax.rsqrt(var2 + eps)
    y2 = y2 * g2_ref[...].astype(jnp.float32) + b2_ref[...].astype(jnp.float32)
    o2_ref[...] = y2.astype(o2_ref.dtype)


def layernorm2(x, g1, b1, g2, b2, *, eps=1e-5,
               out1_dtype=jnp.bfloat16, out2_dtype=jnp.bfloat16):
    """Row-tiled y1 = LN(x; g1, b1) and y2 = LN(y1; g2, b2) in one activation pass."""
    M, D = x.shape
    tm, Mp = _pick_tile(M, _TM_CAP, 8)
    x_p = x if Mp == M else _pad2(x, Mp, D)
    vec = pl.BlockSpec((1, D), lambda i: (0, 0))
    row = pl.BlockSpec((tm, D), lambda i: (i, 0))
    y1, y2 = pl.pallas_call(
        functools.partial(_layernorm2_kernel, eps=eps),
        out_shape=(jax.ShapeDtypeStruct((Mp, D), out1_dtype),
                   jax.ShapeDtypeStruct((Mp, D), out2_dtype)),
        grid=(Mp // tm,),
        in_specs=[row, vec, vec, vec, vec],
        out_specs=(row, row),
        compiler_params=pltpu.CompilerParams(
            dimension_semantics=("parallel",),
            vmem_limit_bytes=_VMEM_LIMIT),
    )(x_p, g1.reshape(1, D), b1.reshape(1, D), g2.reshape(1, D), b2.reshape(1, D))
    if Mp != M:
        y1, y2 = y1[:M], y2[:M]
    return y1, y2


# --------------------------------- attention ----------------------------------

def _attention_kernel(q_ref, k_ref, v_ref, o_ref, *, g, dh, s_valid):
    """g heads of one batch element; scale is pre-folded into the q projection."""
    Sp = k_ref.shape[1]
    q = q_ref[0]
    k = k_ref[0]
    v = v_ref[0]
    if s_valid < Sp:
        kidx = jax.lax.broadcasted_iota(jnp.int32, (1, Sp), 1)
        kmask = jnp.where(kidx >= s_valid, -1e30, 0.0).astype(jnp.float32)
    else:
        kmask = None
    # TODO(synk): pack 2 heads per MXU pass (block-diagonal 128-deep contraction) and/or
    # switch to flash-style KV tiling for very long sequences; ViT-scale S fits in VMEM.
    for i in range(g):                      # static unroll; g is small
        lo = i * dh
        qh = q[:, lo:lo + dh]
        kh = k[:, lo:lo + dh]
        vh = v[:, lo:lo + dh]
        s = jax.lax.dot_general(qh, kh, (((1,), (1,)), ((), ())),
                                preferred_element_type=jnp.float32)
        if kmask is not None:
            s = s + kmask                   # mask padded key positions
        s = s - jnp.max(s, axis=-1, keepdims=True)
        p = jnp.exp(s)
        p = p * pl.reciprocal(jnp.sum(p, axis=-1, keepdims=True), approx=True)
        o = jnp.dot(p.astype(vh.dtype), vh, preferred_element_type=jnp.float32)
        o_ref[0, :, lo:lo + dh] = o.astype(o_ref.dtype)   # direct per-head store


def attention(qkv, *, heads, s_valid):
    """qkv: (B, Sp, 3*W) = [q | k | v] along the feature axis.  Returns (B, Sp, W)."""
    B, Sp, W3 = qkv.shape
    W = W3 // 3
    assert W % heads == 0
    dh = W // heads
    if W % 128 == 0:
        # Slice q/k/v (and head groups) straight out of the fused QKV activation via the
        # BlockSpec index_map -- no HBM split copies.  Head groups are sized so blocks are
        # lane-dense (multiple of 128) and give the grid a second parallel axis (v7x).
        g = 1
        while g <= heads and not ((dh * g) % 128 == 0 and heads % g == 0):
            g += 1
        if g > heads:
            g = heads
        n_hg = heads // g
        bs = dh * g
        q_in = k_in = v_in = qkv
        in_specs = [
            pl.BlockSpec((1, Sp, bs), lambda b, j: (b, 0, j)),
            pl.BlockSpec((1, Sp, bs), lambda b, j: (b, 0, n_hg + j)),
            pl.BlockSpec((1, Sp, bs), lambda b, j: (b, 0, 2 * n_hg + j)),
        ]
    else:
        # Tiny-width fallback (lane alignment forbids feature-axis BlockSpec slicing):
        # materialize the split; only hit at demo scale.
        g, n_hg, bs = heads, 1, W
        q_in, k_in, v_in = jnp.split(qkv, 3, axis=-1)
        in_specs = [pl.BlockSpec((1, Sp, W), lambda b, j: (b, 0, 0))] * 3

    cost = pl.CostEstimate(
        flops=4 * B * heads * Sp * Sp * dh,
        transcendentals=B * heads * Sp * Sp,
        bytes_accessed=2 * B * Sp * W3 * qkv.dtype.itemsize,
    )
    return pl.pallas_call(
        functools.partial(_attention_kernel, g=g, dh=dh, s_valid=s_valid),
        out_shape=jax.ShapeDtypeStruct((B, Sp, W), qkv.dtype),
        grid=(B, n_hg),
        in_specs=in_specs,
        out_specs=pl.BlockSpec((1, Sp, bs), lambda b, j: (b, 0, j)),
        compiler_params=pltpu.CompilerParams(
            dimension_semantics=("parallel", "parallel"),
            vmem_limit_bytes=_VMEM_LIMIT),
        cost_estimate=cost,
    )(q_in, k_in, v_in)


# ------------------------- parameter initialization -------------------------

def init_params(key, *, input_resolution, patch_size, width, layers, heads,
                output_dim, in_channels):
    scale = width ** -0.5
    attn_scale = (width // heads) ** -0.5
    grid = input_resolution // patch_size
    positions = grid * grid + 1
    keys = jax.random.split(key, 4 + layers)
    conv_w = 0.02 * jax.random.normal(
        keys[0], (width, in_channels, patch_size, patch_size), jnp.float32)
    params = {
        "conv1_w": conv_w,                                           # fallback path
        "conv1_wmat": conv_w.reshape(width, -1).T.astype(jnp.bfloat16),
        "class_embedding": scale * jax.random.normal(keys[1], (width,), jnp.float32),
        "positional_embedding": scale * jax.random.normal(
            keys[2], (positions, width), jnp.float32),
        "ln_pre_g": jnp.ones((width,), jnp.float32),
        "ln_pre_b": jnp.zeros((width,), jnp.float32),
        "ln_post_g": jnp.ones((width,), jnp.float32),
        "ln_post_b": jnp.zeros((width,), jnp.float32),
        "proj": scale * jax.random.normal(keys[3], (width, output_dim), jnp.float32),
    }
    blocks = []
    for l in range(layers):
        bkeys = jax.random.split(keys[4 + l], 4)
        in_proj_w = 0.02 * jax.random.normal(bkeys[0], (3 * width, width), jnp.float32)
        wq, wk, wv = jnp.split(in_proj_w, 3, axis=0)                 # each (width, width)
        bq = bk = bv = jnp.zeros((width,), jnp.float32)
        # fused QKV weight, pre-transposed to (K, N); softmax scale folded into q
        w_qkv = jnp.concatenate([wq.T * attn_scale, wk.T, wv.T], axis=1)
        b_qkv = jnp.concatenate([bq * attn_scale, bk, bv])
        out_w = 0.02 * jax.random.normal(bkeys[1], (width, width), jnp.float32)
        fc_w = 0.02 * jax.random.normal(bkeys[2], (4 * width, width), jnp.float32)
        cproj_w = 0.02 * jax.random.normal(bkeys[3], (width, 4 * width), jnp.float32)
        blocks.append({
            "ln1_g": jnp.ones((width,), jnp.float32),
            "ln1_b": jnp.zeros((width,), jnp.float32),
            "ln2_g": jnp.ones((width,), jnp.float32),
            "ln2_b": jnp.zeros((width,), jnp.float32),
            "w_qkv": w_qkv.astype(jnp.bfloat16),                     # (width, 3*width)
            "b_qkv": b_qkv,
            "out_w": out_w.T.astype(jnp.bfloat16),                   # (width, width)
            "out_b": jnp.zeros((width,), jnp.float32),
            "fc_w": fc_w.T.astype(jnp.bfloat16),                     # (width, 4*width)
            "fc_b": jnp.zeros((4 * width,), jnp.float32),
            "cproj_w": cproj_w.T.astype(jnp.bfloat16),               # (4*width, width)
            "cproj_b": jnp.zeros((width,), jnp.float32),
        })
    params["blocks"] = blocks
    return params


# ------------------------------ forward pass ---------------------------------

def visual_transformer_forward(params, x, *, patch_size, heads, require_feature=False):
    """x: NCHW image (B, C, H, W). Returns (B, output_dim) (and (B, S-1, width))."""
    B, C, H, Wimg = x.shape
    width = params["conv1_w"].shape[0]
    ph = pw = patch_size
    nrow, ncol = H // ph, Wimg // pw
    n_patch = nrow * ncol

    if C == params["conv1_w"].shape[1]:
        wmat = params["conv1_wmat"]                                   # (C*ph*pw, width)
    else:
        # PyTorch fallback: average the weight's input-channel axis (1-channel input).
        wmat = (params["conv1_w"].mean(axis=1, keepdims=True)
                .reshape(width, -1).T.astype(jnp.bfloat16))

    # im2col in bf16 (stride == patch_size); the contraction runs on the MXU.
    # TODO(synk): fold the patch extraction into the patch-embed matmul via a BlockSpec
    # index_map over (B, nrow, ncol) to remove this strided transpose entirely.
    xb = x.astype(jnp.bfloat16)
    patches = xb.reshape(B, -1, nrow, ph, ncol, pw)
    patches = patches.transpose(0, 2, 4, 1, 3, 5).reshape(B * n_patch, -1)
    tokens = matmul_fused(patches, wmat, out_dtype=jnp.float32)       # no bias
    tokens = tokens.reshape(B, n_patch, width)

    cls = jnp.broadcast_to(params["class_embedding"][None, None, :], (B, 1, width))
    xtok = jnp.concatenate([cls, tokens], axis=1) + params["positional_embedding"][None]
    S = n_patch + 1
    # Pad the sequence once to a sublane multiple and carry the padded length through all
    # layers (padded keys are masked inside attention; padded rows are dropped at the end).
    Sp = _round_up(S, 8)
    if Sp != S:
        xtok = jnp.pad(xtok, ((0, 0), (0, Sp - S), (0, 0)))
    M = B * Sp
    x2 = xtok.reshape(M, width)

    blocks = params["blocks"]
    if blocks:
        # ln_pre and the first block's ln_1 in one pass; h is the bf16 residual stream.
        h, hn = layernorm2(x2, params["ln_pre_g"], params["ln_pre_b"],
                           blocks[0]["ln1_g"], blocks[0]["ln1_b"])
        for l, blk in enumerate(blocks):
            last = l == len(blocks) - 1
            # --- multi-head self-attention sublayer (fused QKV projection) ---
            qkv = matmul_fused(hn, blk["w_qkv"], blk["b_qkv"])        # (M, 3*width) bf16
            a = attention(qkv.reshape(B, Sp, 3 * width), heads=heads, s_valid=S)
            # out_proj + residual, with ln_2 fused into the epilogue
            h, hn = matmul_fused(a.reshape(M, width), blk["out_w"], blk["out_b"],
                                 res=h, ln=(blk["ln2_g"], blk["ln2_b"]))
            # --- MLP sublayer (c_fc -> QuickGELU -> c_proj) ---
            ff = matmul_fused(hn, blk["fc_w"], blk["fc_b"], act="quick_gelu")
            # c_proj + residual, with the NEXT LayerNorm (next ln_1 or ln_post) fused
            if last:
                ng, nb = params["ln_post_g"], params["ln_post_b"]
            else:
                ng, nb = blocks[l + 1]["ln1_g"], blocks[l + 1]["ln1_b"]
            h, hn = matmul_fused(ff, blk["cproj_w"], blk["cproj_b"], res=h,
                                 ln=(ng, nb),
                                 ln_dtype=jnp.float32 if last else jnp.bfloat16)
        feat = hn                                                    # == ln_post(h)
    else:
        _, feat = layernorm2(x2, params["ln_pre_g"], params["ln_pre_b"],
                             params["ln_post_g"], params["ln_post_b"],
                             out2_dtype=jnp.float32)

    feat = feat.astype(jnp.float32).reshape(B, Sp, width)
    # Tiny (B, width) @ (width, output_dim) projection: plain XLA dot (not worth a launch).
    pooled = jnp.dot(feat[:, 0, :], params["proj"], preferred_element_type=jnp.float32)
    if require_feature:
        return pooled, feat[:, 1:S]
    return pooled


# ---------------------------------- demo -------------------------------------

if __name__ == "__main__":
    key = jax.random.PRNGKey(0)
    kp, kx = jax.random.split(key)

    # small ViT: 16x16 image, 8x8 patches -> 2x2 grid -> seq = 5 tokens (padded to 8)
    B, C, H = 2, 3, 16
    patch_size, width, layers, heads, output_dim = 8, 32, 2, 4, 16

    params = init_params(kp, input_resolution=H, patch_size=patch_size, width=width,
                         layers=layers, heads=heads, output_dim=output_dim,
                         in_channels=C)
    x = jax.random.normal(kx, (B, C, H, H), jnp.float32)

    fwd = jax.jit(functools.partial(visual_transformer_forward,
                                    patch_size=patch_size, heads=heads,
                                    require_feature=True))
    out, feat = fwd(params, x)
    jax.block_until_ready(out)
    jax.block_until_ready(feat)
    assert out.shape == (B, output_dim)
    assert feat.shape == (B, (H // patch_size) ** 2, width)
    print("KERNEL_OK")
</pallas_src>

<mosaic_0001>
module attributes {stable_mosaic.version = 11 : i64} {
  func.func @_mm_kernel(%arg0: i32, %arg1: i32, %arg2: i32, %arg3: memref<16x32xbf16, #tpu.memory_space<vmem>>, %arg4: memref<32x96xbf16, #tpu.memory_space<vmem>>, %arg5: memref<1x96xf32, #tpu.memory_space<vmem>>, %arg6: memref<16x96xbf16, #tpu.memory_space<vmem>>) attributes {dimension_semantics = [#tpu.dimension_semantics<parallel>, #tpu.dimension_semantics<parallel>, #tpu.dimension_semantics<arbitrary>], iteration_bounds = array<i64: 1, 1, 1>, scalar_prefetch = 0 : i64, scratch_operands = 0 : i64, tpu.core_type = #tpu.core_type<tc>, window_params = [{transform_indices = @transform_0, window_bounds = array<i64: 16, 32>}, {transform_indices = @transform_1, window_bounds = array<i64: 32, 96>}, {transform_indices = @transform_2, window_bounds = array<i64: 1, 96>}, {transform_indices = @transform_3, window_bounds = array<i64: 16, 96>}]} {
    %c0 = arith.constant 0 : index
    %c0_0 = arith.constant 0 : index
    %0 = vector.load %arg3[%c0, %c0_0] : memref<16x32xbf16, #tpu.memory_space<vmem>>, vector<16x32xbf16>
    %c0_1 = arith.constant 0 : index
    %c0_2 = arith.constant 0 : index
    %1 = vector.load %arg4[%c0_1, %c0_2] : memref<32x96xbf16, #tpu.memory_space<vmem>>, vector<32x96xbf16>
    %cst = arith.constant dense<0.000000e+00> : vector<16x96xf32>
    %2 = tpu.matmul %0, %1, %cst {dimension_numbers = #tpu.dot_dimension_numbers<[1], [0], [0], [1], [0, 0, 1, 1], [], []>} : vector<16x32xbf16>, vector<32x96xbf16>, vector<16x96xf32> -> vector<16x96xf32>
    %c0_3 = arith.constant 0 : index
    %c0_4 = arith.constant 0 : index
    %3 = vector.load %arg5[%c0_3, %c0_4] : memref<1x96xf32, #tpu.memory_space<vmem>>, vector<1x96xf32>
    %4 = vector.broadcast %3 : vector<1x96xf32> to vector<16x96xf32>
    %5 = arith.addf %2, %4 : vector<16x96xf32>
    %6 = arith.truncf %5 : vector<16x96xf32> to vector<16x96xbf16>
    %c0_5 = arith.constant 0 : index
    %c0_6 = arith.constant 0 : index
    %7 = vector.load %arg6[%c0_5, %c0_6] : memref<16x96xbf16, #tpu.memory_space<vmem>>, vector<16x96xbf16>
    tpu.vector_store %arg6[%c0_5, %c0_6], %6 {strides = array<i32>} : memref<16x96xbf16, #tpu.memory_space<vmem>>, vector<16x96xbf16>,
    return
  }
  func.func @transform_0(%arg0: i32, %arg1: i32, %arg2: i32) -> (i32, i32) {
    %c0_i32 = arith.constant 0 : i32
    return %arg0, %arg2 : i32, i32
  }
  func.func @transform_1(%arg0: i32, %arg1: i32, %arg2: i32) -> (i32, i32) {
    %c0_i32 = arith.constant 0 : i32
    return %arg2, %arg1 : i32, i32
  }
  func.func @transform_2(%arg0: i32, %arg1: i32, %arg2: i32) -> (i32, i32) {
    %c0_i32 = arith.constant 0 : i32
    %c0_i32_0 = arith.constant 0 : i32
    return %c0_i32, %arg1 : i32, i32
  }
  func.func @transform_3(%arg0: i32, %arg1: i32, %arg2: i32) -> (i32, i32) {
    %c0_i32 = arith.constant 0 : i32
    return %arg0, %arg1 : i32, i32
  }
}

module attributes {stable_mosaic.version = 11 : i64} {
  func.func @_mm_kernel(%arg0: i32, %arg1: i32, %arg2: i32, %arg3: memref<8x192xbf16, #tpu.memory_space<vmem>>, %arg4: memref<192x32xbf16, #tpu.memory_space<vmem>>, %arg5: memref<8x32xf32, #tpu.memory_space<vmem>>) attributes {dimension_semantics = [#tpu.dimension_semantics<parallel>, #tpu.dimension_semantics<parallel>, #tpu.dimension_semantics<arbitrary>], iteration_bounds = array<i64: 1, 1, 1>, scalar_prefetch = 0 : i64, scratch_operands = 0 : i64, tpu.core_type = #tpu.core_type<tc>, window_params = [{transform_indices = @transform_0, window_bounds = array<i64: 8, 192>}, {transform_indices = @transform_1, window_bounds = array<i64: 192, 32>}, {transform_indices = @transform_2, window_bounds = array<i64: 8, 32>}]} {
    %c0 = arith.constant 0 : index
    %c0_0 = arith.constant 0 : index
    %0 = vector.load %arg3[%c0, %c0_0] : memref<8x192xbf16, #tpu.memory_space<vmem>>, vector<8x192xbf16>
    %c0_1 = arith.constant 0 : index
    %c0_2 = arith.constant 0 : index
    %1 = vector.load %arg4[%c0_1, %c0_2] : memref<192x32xbf16, #tpu.memory_space<vmem>>, vector<192x32xbf16>
    %cst = arith.constant dense<0.000000e+00> : vector<8x32xf32>
    %2 = tpu.matmul %0, %1, %cst {dimension_numbers = #tpu.dot_dimension_numbers<[1], [0], [0], [1], [0, 0, 1, 1], [], []>} : vector<8x192xbf16>, vector<192x32xbf16>, vector<8x32xf32> -> vector<8x32xf32>
    %c0_3 = arith.constant 0 : index
    %c0_4 = arith.constant 0 : index
    %3 = vector.load %arg5[%c0_3, %c0_4] : memref<8x32xf32, #tpu.memory_space<vmem>>, vector<8x32xf32>
    tpu.vector_store %arg5[%c0_3, %c0_4], %2 {strides = array<i32>} : memref<8x32xf32, #tpu.memory_space<vmem>>, vector<8x32xf32>,
    return
  }
  func.func @transform_0(%arg0: i32, %arg1: i32, %arg2: i32) -> (i32, i32) {
    %c0_i32 = arith.constant 0 : i32
    return %arg0, %arg2 : i32, i32
  }
  func.func @transform_1(%arg0: i32, %arg1: i32, %arg2: i32) -> (i32, i32) {
    %c0_i32 = arith.constant 0 : i32
    return %arg2, %arg1 : i32, i32
  }
  func.func @transform_2(%arg0: i32, %arg1: i32, %arg2: i32) -> (i32, i32) {
    %c0_i32 = arith.constant 0 : i32
    return %arg0, %arg1 : i32, i32
  }
}

module attributes {stable_mosaic.version = 11 : i64} {
  func.func @_layernorm2_kernel(%arg0: i32, %arg1: memref<16x32xf32, #tpu.memory_space<vmem>>, %arg2: memref<1x32xf32, #tpu.memory_space<vmem>>, %arg3: memref<1x32xf32, #tpu.memory_space<vmem>>, %arg4: memref<1x32xf32, #tpu.memory_space<vmem>>, %arg5: memref<1x32xf32, #tpu.memory_space<vmem>>, %arg6: memref<16x32xbf16, #tpu.memory_space<vmem>>, %arg7: memref<16x32xbf16, #tpu.memory_space<vmem>>) attributes {dimension_semantics = [#tpu.dimension_semantics<parallel>], iteration_bounds = array<i64: 1>, scalar_prefetch = 0 : i64, scratch_operands = 0 : i64, tpu.core_type = #tpu.core_type<tc>, window_params = [{transform_indices = @transform_0, window_bounds = array<i64: 16, 32>}, {pipeline_mode = #tpu.pipeline_mode<synchronous>, transform_indices = @transform_1, window_bounds = array<i64: 1, 32>}, {pipeline_mode = #tpu.pipeline_mode<synchronous>, transform_indices = @transform_2, window_bounds = array<i64: 1, 32>}, {pipeline_mode = #tpu.pipeline_mode<synchronous>, transform_indices = @transform_3, window_bounds = array<i64: 1, 32>}, {pipeline_mode = #tpu.pipeline_mode<synchronous>, transform_indices = @transform_4, window_bounds = array<i64: 1, 32>}, {transform_indices = @transform_5, window_bounds = array<i64: 16, 32>}, {transform_indices = @transform_6, window_bounds = array<i64: 16, 32>}]} {
    %c0 = arith.constant 0 : index
    %c0_0 = arith.constant 0 : index
    %0 = vector.load %arg1[%c0, %c0_0] : memref<16x32xf32, #tpu.memory_space<vmem>>, vector<16x32xf32>
    %cst = arith.constant dense<0.000000e+00> : vector<16xf32>
    %1 = vector.multi_reduction <add>, %0, %cst [1] : vector<16x32xf32> to vector<16xf32>
    %2 = vector.shape_cast %1 : vector<16xf32> to vector<16x1xf32>
    %cst_1 = arith.constant 3.200000e+01 : f32
    %3 = vector.broadcast %cst_1 : f32 to vector<16x1xf32>
    %4 = arith.divf %2, %3 : vector<16x1xf32>
    %5 = vector.broadcast %4 : vector<16x1xf32> to vector<16x32xf32>
    %6 = arith.subf %0, %5 : vector<16x32xf32>
    %7 = arith.mulf %6, %6 : vector<16x32xf32>
    %cst_2 = arith.constant dense<0.000000e+00> : vector<16xf32>
    %8 = vector.multi_reduction <add>, %7, %cst_2 [1] : vector<16x32xf32> to vector<16xf32>
    %9 = vector.shape_cast %8 : vector<16xf32> to vector<16x1xf32>
    %cst_3 = arith.constant 3.200000e+01 : f32
    %10 = vector.broadcast %cst_3 : f32 to vector<16x1xf32>
    %11 = arith.divf %9, %10 : vector<16x1xf32>
    %12 = vector.broadcast %4 : vector<16x1xf32> to vector<16x32xf32>
    %13 = arith.subf %0, %12 : vector<16x32xf32>
    %cst_4 = arith.constant 9.99999974E-6 : f32
    %14 = vector.broadcast %cst_4 : f32 to vector<16x1xf32>
    %15 = arith.addf %11, %14 : vector<16x1xf32>
    %16 = math.rsqrt %15 : vector<16x1xf32>
    %17 = vector.broadcast %16 : vector<16x1xf32> to vector<16x32xf32>
    %18 = arith.mulf %13, %17 : vector<16x32xf32>
    %c0_5 = arith.constant 0 : index
    %c0_6 = arith.constant 0 : index
    %19 = vector.load %arg2[%c0_5, %c0_6] : memref<1x32xf32, #tpu.memory_space<vmem>>, vector<1x32xf32>
    %20 = vector.broadcast %19 : vector<1x32xf32> to vector<16x32xf32>
    %21 = arith.mulf %18, %20 : vector<16x32xf32>
    %c0_7 = arith.constant 0 : index
    %c0_8 = arith.constant 0 : index
    %22 = vector.load %arg3[%c0_7, %c0_8] : memref<1x32xf32, #tpu.memory_space<vmem>>, vector<1x32xf32>
    %23 = vector.broadcast %22 : vector<1x32xf32> to vector<16x32xf32>
    %24 = arith.addf %21, %23 : vector<16x32xf32>
    %25 = arith.truncf %24 : vector<16x32xf32> to vector<16x32xbf16>
    %c0_9 = arith.constant 0 : index
    %c0_10 = arith.constant 0 : index
    %26 = vector.load %arg6[%c0_9, %c0_10] : memref<16x32xbf16, #tpu.memory_space<vmem>>, vector<16x32xbf16>
    tpu.vector_store %arg6[%c0_9, %c0_10], %25 {strides = array<i32>} : memref<16x32xbf16, #tpu.memory_space<vmem>>, vector<16x32xbf16>,
    %cst_11 = arith.constant dense<0.000000e+00> : vector<16xf32>
    %27 = vector.multi_reduction <add>, %24, %cst_11 [1] : vector<16x32xf32> to vector<16xf32>
    %28 = vector.shape_cast %27 : vector<16xf32> to vector<16x1xf32>
    %cst_12 = arith.constant 3.200000e+01 : f32
    %29 = vector.broadcast %cst_12 : f32 to vector<16x1xf32>
    %30 = arith.divf %28, %29 : vector<16x1xf32>
    %31 = vector.broadcast %30 : vector<16x1xf32> to vector<16x32xf32>
    %32 = arith.subf %24, %31 : vector<16x32xf32>
    %33 = arith.mulf %32, %32 : vector<16x32xf32>
    %cst_13 = arith.constant dense<0.000000e+00> : vector<16xf32>
    %34 = vector.multi_reduction <add>, %33, %cst_13 [1] : vector<16x32xf32> to vector<16xf32>
    %35 = vector.shape_cast %34 : vector<16xf32> to vector<16x1xf32>
    %cst_14 = arith.constant 3.200000e+01 : f32
    %36 = vector.broadcast %cst_14 : f32 to vector<16x1xf32>
    %37 = arith.divf %35, %36 : vector<16x1xf32>
    %38 = vector.broadcast %30 : vector<16x1xf32> to vector<16x32xf32>
    %39 = arith.subf %24, %38 : vector<16x32xf32>
    %cst_15 = arith.constant 9.99999974E-6 : f32
    %40 = vector.broadcast %cst_15 : f32 to vector<16x1xf32>
    %41 = arith.addf %37, %40 : vector<16x1xf32>
    %42 = math.rsqrt %41 : vector<16x1xf32>
    %43 = vector.broadcast %42 : vector<16x1xf32> to vector<16x32xf32>
    %44 = arith.mulf %39, %43 : vector<16x32xf32>
    %c0_16 = arith.constant 0 : index
    %c0_17 = arith.constant 0 : index
    %45 = vector.load %arg4[%c0_16, %c0_17] : memref<1x32xf32, #tpu.memory_space<vmem>>, vector<1x32xf32>
    %46 = vector.broadcast %45 : vector<1x32xf32> to vector<16x32xf32>
    %47 = arith.mulf %44, %46 : vector<16x32xf32>
    %c0_18 = arith.constant 0 : index
    %c0_19 = arith.constant 0 : index
    %48 = vector.load %arg5[%c0_18, %c0_19] : memref<1x32xf32, #tpu.memory_space<vmem>>, vector<1x32xf32>
    %49 = vector.broadcast %48 : vector<1x32xf32> to vector<16x32xf32>
    %50 = arith.addf %47, %49 : vector<16x32xf32>
    %51 = arith.truncf %50 : vector<16x32xf32> to vector<16x32xbf16>
    %c0_20 = arith.constant 0 : index
    %c0_21 = arith.constant 0 : index
    %52 = vector.load %arg7[%c0_20, %c0_21] : memref<16x32xbf16, #tpu.memory_space<vmem>>, vector<16x32xbf16>
    tpu.vector_store %arg7[%c0_20, %c0_21], %51 {strides = array<i32>} : memref<16x32xbf16, #tpu.memory_space<vmem>>, vector<16x32xbf16>,
    return
  }
  func.func @transform_0(%arg0: i32) -> (i32, i32) {
    %c0_i32 = arith.constant 0 : i32
    %c0_i32_0 = arith.constant 0 : i32
    return %arg0, %c0_i32 : i32, i32
  }
  func.func @transform_1(%arg0: i32) -> (i32, i32) {
    %c0_i32 = arith.constant 0 : i32
    %c0_i32_0 = arith.constant 0 : i32
    %c0_i32_1 = arith.constant 0 : i32
    return %c0_i32, %c0_i32_0 : i32, i32
  }
  func.func @transform_2(%arg0: i32) -> (i32, i32) {
    %c0_i32 = arith.constant 0 : i32
    %c0_i32_0 = arith.constant 0 : i32
    %c0_i32_1 = arith.constant 0 : i32
    return %c0_i32, %c0_i32_0 : i32, i32
  }
  func.func @transform_3(%arg0: i32) -> (i32, i32) {
    %c0_i32 = arith.constant 0 : i32
    %c0_i32_0 = arith.constant 0 : i32
    %c0_i32_1 = arith.constant 0 : i32
    return %c0_i32, %c0_i32_0 : i32, i32
  }
  func.func @transform_4(%arg0: i32) -> (i32, i32) {
    %c0_i32 = arith.constant 0 : i32
    %c0_i32_0 = arith.constant 0 : i32
    %c0_i32_1 = arith.constant 0 : i32
    return %c0_i32, %c0_i32_0 : i32, i32
  }
  func.func @transform_5(%arg0: i32) -> (i32, i32) {
    %c0_i32 = arith.constant 0 : i32
    %c0_i32_0 = arith.constant 0 : i32
    return %arg0, %c0_i32 : i32, i32
  }
  func.func @transform_6(%arg0: i32) -> (i32, i32) {
    %c0_i32 = arith.constant 0 : i32
    %c0_i32_0 = arith.constant 0 : i32
    return %arg0, %c0_i32 : i32, i32
  }
}

module attributes {stable_mosaic.version = 11 : i64} {
  func.func @_attention_kernel(%arg0: i32, %arg1: i32, %arg2: memref<1x8x32xbf16, #tpu.memory_space<vmem>>, %arg3: memref<1x8x32xbf16, #tpu.memory_space<vmem>>, %arg4: memref<1x8x32xbf16, #tpu.memory_space<vmem>>, %arg5: memref<1x8x32xbf16, #tpu.memory_space<vmem>>) attributes {dimension_semantics = [#tpu.dimension_semantics<parallel>, #tpu.dimension_semantics<parallel>], iteration_bounds = array<i64: 2, 1>, scalar_prefetch = 0 : i64, scratch_operands = 0 : i64, tpu.core_type = #tpu.core_type<tc>, window_params = [{transform_indices = @transform_0, window_bounds = array<i64: 1, 8, 32>}, {transform_indices = @transform_1, window_bounds = array<i64: 1, 8, 32>}, {transform_indices = @transform_2, window_bounds = array<i64: 1, 8, 32>}, {transform_indices = @transform_3, window_bounds = array<i64: 1, 8, 32>}]} {
    %c0 = arith.constant 0 : index
    %c0_0 = arith.constant 0 : index
    %c0_1 = arith.constant 0 : index
    %0 = vector.load %arg2[%c0, %c0_0, %c0_1] : memref<1x8x32xbf16, #tpu.memory_space<vmem>>, vector<1x8x32xbf16>
    %1 = vector.shape_cast %0 : vector<1x8x32xbf16> to vector<8x32xbf16>
    %c0_2 = arith.constant 0 : index
    %c0_3 = arith.constant 0 : index
    %c0_4 = arith.constant 0 : index
    %2 = vector.load %arg3[%c0_2, %c0_3, %c0_4] : memref<1x8x32xbf16, #tpu.memory_space<vmem>>, vector<1x8x32xbf16>
    %3 = vector.shape_cast %2 : vector<1x8x32xbf16> to vector<8x32xbf16>
    %c0_5 = arith.constant 0 : index
    %c0_6 = arith.constant 0 : index
    %c0_7 = arith.constant 0 : index
    %4 = vector.load %arg4[%c0_5, %c0_6, %c0_7] : memref<1x8x32xbf16, #tpu.memory_space<vmem>>, vector<1x8x32xbf16>
    %5 = vector.shape_cast %4 : vector<1x8x32xbf16> to vector<8x32xbf16>
    %6 = tpu.iota {dimensions = array<i32: 1>} : vector<1x8xi32>
    %c5_i32 = arith.constant 5 : i32
    %7 = vector.broadcast %c5_i32 : i32 to vector<1x8xi32>
    %8 = arith.cmpi sge, %6, %7 : vector<1x8xi32>
    %cst = arith.constant -1.000000e+30 : f32
    %cst_8 = arith.constant 0.000000e+00 : f32
    %9 = vector.broadcast %cst : f32 to vector<1x8xf32>
    %10 = vector.broadcast %cst_8 : f32 to vector<1x8xf32>
    %11 = arith.select %8, %9, %10 : vector<1x8xi1>, vector<1x8xf32>
    %12 = vector.extract_strided_slice %1 {offsets = [0, 0], sizes = [8, 8], strides = [1, 1]} : vector<8x32xbf16> to vector<8x8xbf16>
    %13 = vector.extract_strided_slice %3 {offsets = [0, 0], sizes = [8, 8], strides = [1, 1]} : vector<8x32xbf16> to vector<8x8xbf16>
    %14 = vector.extract_strided_slice %5 {offsets = [0, 0], sizes = [8, 8], strides = [1, 1]} : vector<8x32xbf16> to vector<8x8xbf16>
    %cst_9 = arith.constant dense<0.000000e+00> : vector<8x8xf32>
    %15 = tpu.matmul %12, %13, %cst_9 {dimension_numbers = #tpu.dot_dimension_numbers<[1], [1], [0], [0], [0, 0, 1, 0], [], []>} : vector<8x8xbf16>, vector<8x8xbf16>, vector<8x8xf32> -> vector<8x8xf32>
    %16 = vector.broadcast %11 : vector<1x8xf32> to vector<8x8xf32>
    %17 = arith.addf %15, %16 : vector<8x8xf32>
    %cst_10 = arith.constant dense<0xFF800000> : vector<8xf32>
    %18 = vector.multi_reduction <maximumf>, %17, %cst_10 [1] : vector<8x8xf32> to vector<8xf32>
    %19 = vector.shape_cast %18 : vector<8xf32> to vector<8x1xf32>
    %20 = vector.broadcast %19 : vector<8x1xf32> to vector<8x8xf32>
    %21 = arith.subf %17, %20 : vector<8x8xf32>
    %22 = math.exp %21 : vector<8x8xf32>
    %cst_11 = arith.constant dense<0.000000e+00> : vector<8xf32>
    %23 = vector.multi_reduction <add>, %22, %cst_11 [1] : vector<8x8xf32> to vector<8xf32>
    %24 = vector.shape_cast %23 : vector<8xf32> to vector<8x1xf32>
    %25 = tpu.reciprocal %24 {approx = true} : vector<8x1xf32> -> vector<8x1xf32>
    %26 = vector.broadcast %25 : vector<8x1xf32> to vector<8x8xf32>
    %27 = arith.mulf %22, %26 : vector<8x8xf32>
    %28 = arith.truncf %27 : vector<8x8xf32> to vector<8x8xbf16>
    %cst_12 = arith.constant dense<0.000000e+00> : vector<8x8xf32>
    %29 = tpu.matmul %28, %14, %cst_12 {dimension_numbers = #tpu.dot_dimension_numbers<[1], [0], [0], [1], [0, 0, 1, 1], [], []>} : vector<8x8xbf16>, vector<8x8xbf16>, vector<8x8xf32> -> vector<8x8xf32>
    %30 = arith.truncf %29 : vector<8x8xf32> to vector<8x8xbf16>
    %c0_13 = arith.constant 0 : index
    %c0_14 = arith.constant 0 : index
    %c0_15 = arith.constant 0 : index
    %31 = vector.load %arg5[%c0_13, %c0_14, %c0_15] : memref<1x8x32xbf16, #tpu.memory_space<vmem>>, vector<1x8x8xbf16>
    %32 = vector.shape_cast %31 : vector<1x8x8xbf16> to vector<8x8xbf16>
    %33 = vector.shape_cast %30 : vector<8x8xbf16> to vector<1x8x8xbf16>
    tpu.vector_store %arg5[%c0_13, %c0_14, %c0_15], %33 {strides = array<i32>} : memref<1x8x32xbf16, #tpu.memory_space<vmem>>, vector<1x8x8xbf16>,
    %34 = vector.extract_strided_slice %1 {offsets = [0, 8], sizes = [8, 8], strides = [1, 1]} : vector<8x32xbf16> to vector<8x8xbf16>
    %35 = vector.extract_strided_slice %3 {offsets = [0, 8], sizes = [8, 8], strides = [1, 1]} : vector<8x32xbf16> to vector<8x8xbf16>
    %36 = vector.extract_strided_slice %5 {offsets = [0, 8], sizes = [8, 8], strides = [1, 1]} : vector<8x32xbf16> to vector<8x8xbf16>
    %cst_16 = arith.constant dense<0.000000e+00> : vector<8x8xf32>
    %37 = tpu.matmul %34, %35, %cst_16 {dimension_numbers = #tpu.dot_dimension_numbers<[1], [1], [0], [0], [0, 0, 1, 0], [], []>} : vector<8x8xbf16>, vector<8x8xbf16>, vector<8x8xf32> -> vector<8x8xf32>
    %38 = vector.broadcast %11 : vector<1x8xf32> to vector<8x8xf32>
    %39 = arith.addf %37, %38 : vector<8x8xf32>
    %cst_17 = arith.constant dense<0xFF800000> : vector<8xf32>
    %40 = vector.multi_reduction <maximumf>, %39, %cst_17 [1] : vector<8x8xf32> to vector<8xf32>
    %41 = vector.shape_cast %40 : vector<8xf32> to vector<8x1xf32>
    %42 = vector.broadcast %41 : vector<8x1xf32> to vector<8x8xf32>
    %43 = arith.subf %39, %42 : vector<8x8xf32>
    %44 = math.exp %43 : vector<8x8xf32>
    %cst_18 = arith.constant dense<0.000000e+00> : vector<8xf32>
    %45 = vector.multi_reduction <add>, %44, %cst_18 [1] : vector<8x8xf32> to vector<8xf32>
    %46 = vector.shape_cast %45 : vector<8xf32> to vector<8x1xf32>
    %47 = tpu.reciprocal %46 {approx = true} : vector<8x1xf32> -> vector<8x1xf32>
    %48 = vector.broadcast %47 : vector<8x1xf32> to vector<8x8xf32>
    %49 = arith.mulf %44, %48 : vector<8x8xf32>
    %50 = arith.truncf %49 : vector<8x8xf32> to vector<8x8xbf16>
    %cst_19 = arith.constant dense<0.000000e+00> : vector<8x8xf32>
    %51 = tpu.matmul %50, %36, %cst_19 {dimension_numbers = #tpu.dot_dimension_numbers<[1], [0], [0], [1], [0, 0, 1, 1], [], []>} : vector<8x8xbf16>, vector<8x8xbf16>, vector<8x8xf32> -> vector<8x8xf32>
    %52 = arith.truncf %51 : vector<8x8xf32> to vector<8x8xbf16>
    %c0_20 = arith.constant 0 : index
    %c0_21 = arith.constant 0 : index
    %c8 = arith.constant 8 : index
    %53 = vector.load %arg5[%c0_20, %c0_21, %c8] : memref<1x8x32xbf16, #tpu.memory_space<vmem>>, vector<1x8x8xbf16>
    %54 = vector.shape_cast %53 : vector<1x8x8xbf16> to vector<8x8xbf16>
    %55 = vector.shape_cast %52 : vector<8x8xbf16> to vector<1x8x8xbf16>
    tpu.vector_store %arg5[%c0_20, %c0_21, %c8], %55 {strides = array<i32>} : memref<1x8x32xbf16, #tpu.memory_space<vmem>>, vector<1x8x8xbf16>,
    %56 = vector.extract_strided_slice %1 {offsets = [0, 16], sizes = [8, 8], strides = [1, 1]} : vector<8x32xbf16> to vector<8x8xbf16>
    %57 = vector.extract_strided_slice %3 {offsets = [0, 16], sizes = [8, 8], strides = [1, 1]} : vector<8x32xbf16> to vector<8x8xbf16>
    %58 = vector.extract_strided_slice %5 {offsets = [0, 16], sizes = [8, 8], strides = [1, 1]} : vector<8x32xbf16> to vector<8x8xbf16>
    %cst_22 = arith.constant dense<0.000000e+00> : vector<8x8xf32>
    %59 = tpu.matmul %56, %57, %cst_22 {dimension_numbers = #tpu.dot_dimension_numbers<[1], [1], [0], [0], [0, 0, 1, 0], [], []>} : vector<8x8xbf16>, vector<8x8xbf16>, vector<8x8xf32> -> vector<8x8xf32>
    %60 = vector.broadcast %11 : vector<1x8xf32> to vector<8x8xf32>
    %61 = arith.addf %59, %60 : vector<8x8xf32>
    %cst_23 = arith.constant dense<0xFF800000> : vector<8xf32>
    %62 = vector.multi_reduction <maximumf>, %61, %cst_23 [1] : vector<8x8xf32> to vector<8xf32>
    %63 = vector.shape_cast %62 : vector<8xf32> to vector<8x1xf32>
    %64 = vector.broadcast %63 : vector<8x1xf32> to vector<8x8xf32>
    %65 = arith.subf %61, %64 : vector<8x8xf32>
    %66 = math.exp %65 : vector<8x8xf32>
    %cst_24 = arith.constant dense<0.000000e+00> : vector<8xf32>
    %67 = vector.multi_reduction <add>, %66, %cst_24 [1] : vector<8x8xf32> to vector<8xf32>
    %68 = vector.shape_cast %67 : vector<8xf32> to vector<8x1xf32>
    %69 = tpu.reciprocal %68 {approx = true} : vector<8x1xf32> -> vector<8x1xf32>
    %70 = vector.broadcast %69 : vector<8x1xf32> to vector<8x8xf32>
    %71 = arith.mulf %66, %70 : vector<8x8xf32>
    %72 = arith.truncf %71 : vector<8x8xf32> to vector<8x8xbf16>
    %cst_25 = arith.constant dense<0.000000e+00> : vector<8x8xf32>
    %73 = tpu.matmul %72, %58, %cst_25 {dimension_numbers = #tpu.dot_dimension_numbers<[1], [0], [0], [1], [0, 0, 1, 1], [], []>} : vector<8x8xbf16>, vector<8x8xbf16>, vector<8x8xf32> -> vector<8x8xf32>
    %74 = arith.truncf %73 : vector<8x8xf32> to vector<8x8xbf16>
    %c0_26 = arith.constant 0 : index
    %c0_27 = arith.constant 0 : index
    %c16 = arith.constant 16 : index
    %75 = vector.load %arg5[%c0_26, %c0_27, %c16] : memref<1x8x32xbf16, #tpu.memory_space<vmem>>, vector<1x8x8xbf16>
    %76 = vector.shape_cast %75 : vector<1x8x8xbf16> to vector<8x8xbf16>
    %77 = vector.shape_cast %74 : vector<8x8xbf16> to vector<1x8x8xbf16>
    tpu.vector_store %arg5[%c0_26, %c0_27, %c16], %77 {strides = array<i32>} : memref<1x8x32xbf16, #tpu.memory_space<vmem>>, vector<1x8x8xbf16>,
    %78 = vector.extract_strided_slice %1 {offsets = [0, 24], sizes = [8, 8], strides = [1, 1]} : vector<8x32xbf16> to vector<8x8xbf16>
    %79 = vector.extract_strided_slice %3 {offsets = [0, 24], sizes = [8, 8], strides = [1, 1]} : vector<8x32xbf16> to vector<8x8xbf16>
    %80 = vector.extract_strided_slice %5 {offsets = [0, 24], sizes = [8, 8], strides = [1, 1]} : vector<8x32xbf16> to vector<8x8xbf16>
    %cst_28 = arith.constant dense<0.000000e+00> : vector<8x8xf32>
    %81 = tpu.matmul %78, %79, %cst_28 {dimension_numbers = #tpu.dot_dimension_numbers<[1], [1], [0], [0], [0, 0, 1, 0], [], []>} : vector<8x8xbf16>, vector<8x8xbf16>, vector<8x8xf32> -> vector<8x8xf32>
    %82 = vector.broadcast %11 : vector<1x8xf32> to vector<8x8xf32>
    %83 = arith.addf %81, %82 : vector<8x8xf32>
    %cst_29 = arith.constant dense<0xFF800000> : vector<8xf32>
    %84 = vector.multi_reduction <maximumf>, %83, %cst_29 [1] : vector<8x8xf32> to vector<8xf32>
    %85 = vector.shape_cast %84 : vector<8xf32> to vector<8x1xf32>
    %86 = vector.broadcast %85 : vector<8x1xf32> to vector<8x8xf32>
    %87 = arith.subf %83, %86 : vector<8x8xf32>
    %88 = math.exp %87 : vector<8x8xf32>
    %cst_30 = arith.constant dense<0.000000e+00> : vector<8xf32>
    %89 = vector.multi_reduction <add>, %88, %cst_30 [1] : vector<8x8xf32> to vector<8xf32>
    %90 = vector.shape_cast %89 : vector<8xf32> to vector<8x1xf32>
    %91 = tpu.reciprocal %90 {approx = true} : vector<8x1xf32> -> vector<8x1xf32>
    %92 = vector.broadcast %91 : vector<8x1xf32> to vector<8x8xf32>
    %93 = arith.mulf %88, %92 : vector<8x8xf32>
    %94 = arith.truncf %93 : vector<8x8xf32> to vector<8x8xbf16>
    %cst_31 = arith.constant dense<0.000000e+00> : vector<8x8xf32>
    %95 = tpu.matmul %94, %80, %cst_31 {dimension_numbers = #tpu.dot_dimension_numbers<[1], [0], [0], [1], [0, 0, 1, 1], [], []>} : vector<8x8xbf16>, vector<8x8xbf16>, vector<8x8xf32> -> vector<8x8xf32>
    %96 = arith.truncf %95 : vector<8x8xf32> to vector<8x8xbf16>
    %c0_32 = arith.constant 0 : index
    %c0_33 = arith.constant 0 : index
    %c24 = arith.constant 24 : index
    %97 = vector.load %arg5[%c0_32, %c0_33, %c24] : memref<1x8x32xbf16, #tpu.memory_space<vmem>>, vector<1x8x8xbf16>
    %98 = vector.shape_cast %97 : vector<1x8x8xbf16> to vector<8x8xbf16>
    %99 = vector.shape_cast %96 : vector<8x8xbf16> to vector<1x8x8xbf16>
    tpu.vector_store %arg5[%c0_32, %c0_33, %c24], %99 {strides = array<i32>} : memref<1x8x32xbf16, #tpu.memory_space<vmem>>, vector<1x8x8xbf16>,
    return
  }
  func.func @transform_0(%arg0: i32, %arg1: i32) -> (i32, i32, i32) {
    %c0_i32 = arith.constant 0 : i32
    %c0_i32_0 = arith.constant 0 : i32
    %c0_i32_1 = arith.constant 0 : i32
    return %arg0, %c0_i32, %c0_i32_0 : i32, i32, i32
  }
  func.func @transform_1(%arg0: i32, %arg1: i32) -> (i32, i32, i32) {
    %c0_i32 = arith.constant 0 : i32
    %c0_i32_0 = arith.constant 0 : i32
    %c0_i32_1 = arith.constant 0 : i32
    return %arg0, %c0_i32, %c0_i32_0 : i32, i32, i32
  }
  func.func @transform_2(%arg0: i32, %arg1: i32) -> (i32, i32, i32) {
    %c0_i32 = arith.constant 0 : i32
    %c0_i32_0 = arith.constant 0 : i32
    %c0_i32_1 = arith.constant 0 : i32
    return %arg0, %c0_i32, %c0_i32_0 : i32, i32, i32
  }
  func.func @transform_3(%arg0: i32, %arg1: i32) -> (i32, i32, i32) {
    %c0_i32 = arith.constant 0 : i32
    %c0_i32_0 = arith.constant 0 : i32
    return %arg0, %c0_i32, %arg1 : i32, i32, i32
  }
}

module attributes {stable_mosaic.version = 11 : i64} {
  func.func @_mm_kernel(%arg0: i32, %arg1: i32, %arg2: i32, %arg3: memref<16x32xbf16, #tpu.memory_space<vmem>>, %arg4: memref<32x32xbf16, #tpu.memory_space<vmem>>, %arg5: memref<1x32xf32, #tpu.memory_space<vmem>>, %arg6: memref<16x32xbf16, #tpu.memory_space<vmem>>, %arg7: memref<1x32xf32, #tpu.memory_space<vmem>>, %arg8: memref<1x32xf32, #tpu.memory_space<vmem>>, %arg9: memref<16x32xbf16, #tpu.memory_space<vmem>>, %arg10: memref<16x32xbf16, #tpu.memory_space<vmem>>) attributes {dimension_semantics = [#tpu.dimension_semantics<parallel>, #tpu.dimension_semantics<parallel>, #tpu.dimension_semantics<arbitrary>], iteration_bounds = array<i64: 1, 1, 1>, scalar_prefetch = 0 : i64, scratch_operands = 0 : i64, tpu.core_type = #tpu.core_type<tc>, window_params = [{transform_indices = @transform_0, window_bounds = array<i64: 16, 32>}, {transform_indices = @transform_1, window_bounds = array<i64: 32, 32>}, {transform_indices = @transform_2, window_bounds = array<i64: 1, 32>}, {transform_indices = @transform_3, window_bounds = array<i64: 16, 32>}, {transform_indices = @transform_4, window_bounds = array<i64: 1, 32>}, {transform_indices = @transform_5, window_bounds = array<i64: 1, 32>}, {transform_indices = @transform_6, window_bounds = array<i64: 16, 32>}, {transform_indices = @transform_7, window_bounds = array<i64: 16, 32>}]} {
    %c0 = arith.constant 0 : index
    %c0_0 = arith.constant 0 : index
    %0 = vector.load %arg3[%c0, %c0_0] : memref<16x32xbf16, #tpu.memory_space<vmem>>, vector<16x32xbf16>
    %c0_1 = arith.constant 0 : index
    %c0_2 = arith.constant 0 : index
    %1 = vector.load %arg4[%c0_1, %c0_2] : memref<32x32xbf16, #tpu.memory_space<vmem>>, vector<32x32xbf16>
    %cst = arith.constant dense<0.000000e+00> : vector<16x32xf32>
    %2 = tpu.matmul %0, %1, %cst {dimension_numbers = #tpu.dot_dimension_numbers<[1], [0], [0], [1], [0, 0, 1, 1], [], []>} : vector<16x32xbf16>, vector<32x32xbf16>, vector<16x32xf32> -> vector<16x32xf32>
    %c0_3 = arith.constant 0 : index
    %c0_4 = arith.constant 0 : index
    %3 = vector.load %arg5[%c0_3, %c0_4] : memref<1x32xf32, #tpu.memory_space<vmem>>, vector<1x32xf32>
    %4 = vector.broadcast %3 : vector<1x32xf32> to vector<16x32xf32>
    %5 = arith.addf %2, %4 : vector<16x32xf32>
    %c0_5 = arith.constant 0 : index
    %c0_6 = arith.constant 0 : index
    %6 = vector.load %arg6[%c0_5, %c0_6] : memref<16x32xbf16, #tpu.memory_space<vmem>>, vector<16x32xbf16>
    %7 = arith.extf %6 : vector<16x32xbf16> to vector<16x32xf32>
    %8 = arith.addf %5, %7 : vector<16x32xf32>
    %9 = arith.truncf %8 : vector<16x32xf32> to vector<16x32xbf16>
    %c0_7 = arith.constant 0 : index
    %c0_8 = arith.constant 0 : index
    %10 = vector.load %arg9[%c0_7, %c0_8] : memref<16x32xbf16, #tpu.memory_space<vmem>>, vector<16x32xbf16>
    tpu.vector_store %arg9[%c0_7, %c0_8], %9 {strides = array<i32>} : memref<16x32xbf16, #tpu.memory_space<vmem>>, vector<16x32xbf16>,
    %cst_9 = arith.constant dense<0.000000e+00> : vector<16xf32>
    %11 = vector.multi_reduction <add>, %8, %cst_9 [1] : vector<16x32xf32> to vector<16xf32>
    %12 = vector.shape_cast %11 : vector<16xf32> to vector<16x1xf32>
    %cst_10 = arith.constant 3.200000e+01 : f32
    %13 = vector.broadcast %cst_10 : f32 to vector<16x1xf32>
    %14 = arith.divf %12, %13 : vector<16x1xf32>
    %15 = vector.broadcast %14 : vector<16x1xf32> to vector<16x32xf32>
    %16 = arith.subf %8, %15 : vector<16x32xf32>
    %17 = arith.mulf %16, %16 : vector<16x32xf32>
    %cst_11 = arith.constant dense<0.000000e+00> : vector<16xf32>
    %18 = vector.multi_reduction <add>, %17, %cst_11 [1] : vector<16x32xf32> to vector<16xf32>
    %19 = vector.shape_cast %18 : vector<16xf32> to vector<16x1xf32>
    %cst_12 = arith.constant 3.200000e+01 : f32
    %20 = vector.broadcast %cst_12 : f32 to vector<16x1xf32>
    %21 = arith.divf %19, %20 : vector<16x1xf32>
    %22 = vector.broadcast %14 : vector<16x1xf32> to vector<16x32xf32>
    %23 = arith.subf %8, %22 : vector<16x32xf32>
    %cst_13 = arith.constant 9.99999974E-6 : f32
    %24 = vector.broadcast %cst_13 : f32 to vector<16x1xf32>
    %25 = arith.addf %21, %24 : vector<16x1xf32>
    %26 = math.rsqrt %25 : vector<16x1xf32>
    %27 = vector.broadcast %26 : vector<16x1xf32> to vector<16x32xf32>
    %28 = arith.mulf %23, %27 : vector<16x32xf32>
    %c0_14 = arith.constant 0 : index
    %c0_15 = arith.constant 0 : index
    %29 = vector.load %arg7[%c0_14, %c0_15] : memref<1x32xf32, #tpu.memory_space<vmem>>, vector<1x32xf32>
    %30 = vector.broadcast %29 : vector<1x32xf32> to vector<16x32xf32>
    %31 = arith.mulf %28, %30 : vector<16x32xf32>
    %c0_16 = arith.constant 0 : index
    %c0_17 = arith.constant 0 : index
    %32 = vector.load %arg8[%c0_16, %c0_17] : memref<1x32xf32, #tpu.memory_space<vmem>>, vector<1x32xf32>
    %33 = vector.broadcast %32 : vector<1x32xf32> to vector<16x32xf32>
    %34 = arith.addf %31, %33 : vector<16x32xf32>
    %35 = arith.truncf %34 : vector<16x32xf32> to vector<16x32xbf16>
    %c0_18 = arith.constant 0 : index
    %c0_19 = arith.constant 0 : index
    %36 = vector.load %arg10[%c0_18, %c0_19] : memref<16x32xbf16, #tpu.memory_space<vmem>>, vector<16x32xbf16>
    tpu.vector_store %arg10[%c0_18, %c0_19], %35 {strides = array<i32>} : memref<16x32xbf16, #tpu.memory_space<vmem>>, vector<16x32xbf16>,
    return
  }
  func.func @transform_0(%arg0: i32, %arg1: i32, %arg2: i32) -> (i32, i32) {
    %c0_i32 = arith.constant 0 : i32
    return %arg0, %arg2 : i32, i32
  }
  func.func @transform_1(%arg0: i32, %arg1: i32, %arg2: i32) -> (i32, i32) {
    %c0_i32 = arith.constant 0 : i32
    return %arg2, %arg1 : i32, i32
  }
  func.func @transform_2(%arg0: i32, %arg1: i32, %arg2: i32) -> (i32, i32) {
    %c0_i32 = arith.constant 0 : i32
    %c0_i32_0 = arith.constant 0 : i32
    return %c0_i32, %arg1 : i32, i32
  }
  func.func @transform_3(%arg0: i32, %arg1: i32, %arg2: i32) -> (i32, i32) {
    %c0_i32 = arith.constant 0 : i32
    return %arg0, %arg1 : i32, i32
  }
  func.func @transform_4(%arg0: i32, %arg1: i32, %arg2: i32) -> (i32, i32) {
    %c0_i32 = arith.constant 0 : i32
    %c0_i32_0 = arith.constant 0 : i32
    return %c0_i32, %arg1 : i32, i32
  }
  func.func @transform_5(%arg0: i32, %arg1: i32, %arg2: i32) -> (i32, i32) {
    %c0_i32 = arith.constant 0 : i32
    %c0_i32_0 = arith.constant 0 : i32
    return %c0_i32, %arg1 : i32, i32
  }
  func.func @transform_6(%arg0: i32, %arg1: i32, %arg2: i32) -> (i32, i32) {
    %c0_i32 = arith.constant 0 : i32
    return %arg0, %arg1 : i32, i32
  }
  func.func @transform_7(%arg0: i32, %arg1: i32, %arg2: i32) -> (i32, i32) {
    %c0_i32 = arith.constant 0 : i32
    return %arg0, %arg1 : i32, i32
  }
}

module attributes {stable_mosaic.version = 11 : i64} {
  func.func @_mm_kernel(%arg0: i32, %arg1: i32, %arg2: i32, %arg3: memref<16x32xbf16, #tpu.memory_space<vmem>>, %arg4: memref<32x128xbf16, #tpu.memory_space<vmem>>, %arg5: memref<1x128xf32, #tpu.memory_space<vmem>>, %arg6: memref<16x128xbf16, #tpu.memory_space<vmem>>) attributes {dimension_semantics = [#tpu.dimension_semantics<parallel>, #tpu.dimension_semantics<parallel>, #tpu.dimension_semantics<arbitrary>], iteration_bounds = array<i64: 1, 1, 1>, scalar_prefetch = 0 : i64, scratch_operands = 0 : i64, tpu.core_type = #tpu.core_type<tc>, window_params = [{transform_indices = @transform_0, window_bounds = array<i64: 16, 32>}, {transform_indices = @transform_1, window_bounds = array<i64: 32, 128>}, {transform_indices = @transform_2, window_bounds = array<i64: 1, 128>}, {transform_indices = @transform_3, window_bounds = array<i64: 16, 128>}]} {
    %c0 = arith.constant 0 : index
    %c0_0 = arith.constant 0 : index
    %0 = vector.load %arg3[%c0, %c0_0] : memref<16x32xbf16, #tpu.memory_space<vmem>>, vector<16x32xbf16>
    %c0_1 = arith.constant 0 : index
    %c0_2 = arith.constant 0 : index
    %1 = vector.load %arg4[%c0_1, %c0_2] : memref<32x128xbf16, #tpu.memory_space<vmem>>, vector<32x128xbf16>
    %cst = arith.constant dense<0.000000e+00> : vector<16x128xf32>
    %2 = tpu.matmul %0, %1, %cst {dimension_numbers = #tpu.dot_dimension_numbers<[1], [0], [0], [1], [0, 0, 1, 1], [], []>} : vector<16x32xbf16>, vector<32x128xbf16>, vector<16x128xf32> -> vector<16x128xf32>
    %c0_3 = arith.constant 0 : index
    %c0_4 = arith.constant 0 : index
    %3 = vector.load %arg5[%c0_3, %c0_4] : memref<1x128xf32, #tpu.memory_space<vmem>>, vector<1x128xf32>
    %4 = vector.broadcast %3 : vector<1x128xf32> to vector<16x128xf32>
    %5 = arith.addf %2, %4 : vector<16x128xf32>
    %cst_5 = arith.constant 1.702000e+00 : f32
    %6 = vector.broadcast %cst_5 : f32 to vector<16x128xf32>
    %7 = arith.mulf %6, %5 : vector<16x128xf32>
    %8 = arith.negf %7 : vector<16x128xf32>
    %9 = math.exp %8 : vector<16x128xf32>
    %cst_6 = arith.constant 1.000000e+00 : f32
    %10 = vector.broadcast %cst_6 : f32 to vector<16x128xf32>
    %11 = arith.addf %10, %9 : vector<16x128xf32>
    %12 = arith.divf %10, %11 : vector<16x128xf32>
    %13 = arith.mulf %5, %12 : vector<16x128xf32>
    %14 = arith.truncf %13 : vector<16x128xf32> to vector<16x128xbf16>
    %c0_7 = arith.constant 0 : index
    %c0_8 = arith.constant 0 : index
    %15 = vector.load %arg6[%c0_7, %c0_8] : memref<16x128xbf16, #tpu.memory_space<vmem>>, vector<16x128xbf16>
    tpu.vector_store %arg6[%c0_7, %c0_8], %14 {strides = array<i32>} : memref<16x128xbf16, #tpu.memory_space<vmem>>, vector<16x128xbf16>,
    return
  }
  func.func @transform_0(%arg0: i32, %arg1: i32, %arg2: i32) -> (i32, i32) {
    %c0_i32 = arith.constant 0 : i32
    return %arg0, %arg2 : i32, i32
  }
  func.func @transform_1(%arg0: i32, %arg1: i32, %arg2: i32) -> (i32, i32) {
    %c0_i32 = arith.constant 0 : i32
    return %arg2, %arg1 : i32, i32
  }
  func.func @transform_2(%arg0: i32, %arg1: i32, %arg2: i32) -> (i32, i32) {
    %c0_i32 = arith.constant 0 : i32
    %c0_i32_0 = arith.constant 0 : i32
    return %c0_i32, %arg1 : i32, i32
  }
  func.func @transform_3(%arg0: i32, %arg1: i32, %arg2: i32) -> (i32, i32) {
    %c0_i32 = arith.constant 0 : i32
    return %arg0, %arg1 : i32, i32
  }
}

module attributes {stable_mosaic.version = 11 : i64} {
  func.func @_mm_kernel(%arg0: i32, %arg1: i32, %arg2: i32, %arg3: memref<16x128xbf16, #tpu.memory_space<vmem>>, %arg4: memref<128x32xbf16, #tpu.memory_space<vmem>>, %arg5: memref<1x32xf32, #tpu.memory_space<vmem>>, %arg6: memref<16x32xbf16, #tpu.memory_space<vmem>>, %arg7: memref<1x32xf32, #tpu.memory_space<vmem>>, %arg8: memref<1x32xf32, #tpu.memory_space<vmem>>, %arg9: memref<16x32xbf16, #tpu.memory_space<vmem>>, %arg10: memref<16x32xbf16, #tpu.memory_space<vmem>>) attributes {dimension_semantics = [#tpu.dimension_semantics<parallel>, #tpu.dimension_semantics<parallel>, #tpu.dimension_semantics<arbitrary>], iteration_bounds = array<i64: 1, 1, 1>, scalar_prefetch = 0 : i64, scratch_operands = 0 : i64, tpu.core_type = #tpu.core_type<tc>, window_params = [{transform_indices = @transform_0, window_bounds = array<i64: 16, 128>}, {transform_indices = @transform_1, window_bounds = array<i64: 128, 32>}, {transform_indices = @transform_2, window_bounds = array<i64: 1, 32>}, {transform_indices = @transform_3, window_bounds = array<i64: 16, 32>}, {transform_indices = @transform_4, window_bounds = array<i64: 1, 32>}, {transform_indices = @transform_5, window_bounds = array<i64: 1, 32>}, {transform_indices = @transform_6, window_bounds = array<i64: 16, 32>}, {transform_indices = @transform_7, window_bounds = array<i64: 16, 32>}]} {
    %c0 = arith.constant 0 : index
    %c0_0 = arith.constant 0 : index
    %0 = vector.load %arg3[%c0, %c0_0] : memref<16x128xbf16, #tpu.memory_space<vmem>>, vector<16x128xbf16>
    %c0_1 = arith.constant 0 : index
    %c0_2 = arith.constant 0 : index
    %1 = vector.load %arg4[%c0_1, %c0_2] : memref<128x32xbf16, #tpu.memory_space<vmem>>, vector<128x32xbf16>
    %cst = arith.constant dense<0.000000e+00> : vector<16x32xf32>
    %2 = tpu.matmul %0, %1, %cst {dimension_numbers = #tpu.dot_dimension_numbers<[1], [0], [0], [1], [0, 0, 1, 1], [], []>} : vector<16x128xbf16>, vector<128x32xbf16>, vector<16x32xf32> -> vector<16x32xf32>
    %c0_3 = arith.constant 0 : index
    %c0_4 = arith.constant 0 : index
    %3 = vector.load %arg5[%c0_3, %c0_4] : memref<1x32xf32, #tpu.memory_space<vmem>>, vector<1x32xf32>
    %4 = vector.broadcast %3 : vector<1x32xf32> to vector<16x32xf32>
    %5 = arith.addf %2, %4 : vector<16x32xf32>
    %c0_5 = arith.constant 0 : index
    %c0_6 = arith.constant 0 : index
    %6 = vector.load %arg6[%c0_5, %c0_6] : memref<16x32xbf16, #tpu.memory_space<vmem>>, vector<16x32xbf16>
    %7 = arith.extf %6 : vector<16x32xbf16> to vector<16x32xf32>
    %8 = arith.addf %5, %7 : vector<16x32xf32>
    %9 = arith.truncf %8 : vector<16x32xf32> to vector<16x32xbf16>
    %c0_7 = arith.constant 0 : index
    %c0_8 = arith.constant 0 : index
    %10 = vector.load %arg9[%c0_7, %c0_8] : memref<16x32xbf16, #tpu.memory_space<vmem>>, vector<16x32xbf16>
    tpu.vector_store %arg9[%c0_7, %c0_8], %9 {strides = array<i32>} : memref<16x32xbf16, #tpu.memory_space<vmem>>, vector<16x32xbf16>,
    %cst_9 = arith.constant dense<0.000000e+00> : vector<16xf32>
    %11 = vector.multi_reduction <add>, %8, %cst_9 [1] : vector<16x32xf32> to vector<16xf32>
    %12 = vector.shape_cast %11 : vector<16xf32> to vector<16x1xf32>
    %cst_10 = arith.constant 3.200000e+01 : f32
    %13 = vector.broadcast %cst_10 : f32 to vector<16x1xf32>
    %14 = arith.divf %12, %13 : vector<16x1xf32>
    %15 = vector.broadcast %14 : vector<16x1xf32> to vector<16x32xf32>
    %16 = arith.subf %8, %15 : vector<16x32xf32>
    %17 = arith.mulf %16, %16 : vector<16x32xf32>
    %cst_11 = arith.constant dense<0.000000e+00> : vector<16xf32>
    %18 = vector.multi_reduction <add>, %17, %cst_11 [1] : vector<16x32xf32> to vector<16xf32>
    %19 = vector.shape_cast %18 : vector<16xf32> to vector<16x1xf32>
    %cst_12 = arith.constant 3.200000e+01 : f32
    %20 = vector.broadcast %cst_12 : f32 to vector<16x1xf32>
    %21 = arith.divf %19, %20 : vector<16x1xf32>
    %22 = vector.broadcast %14 : vector<16x1xf32> to vector<16x32xf32>
    %23 = arith.subf %8, %22 : vector<16x32xf32>
    %cst_13 = arith.constant 9.99999974E-6 : f32
    %24 = vector.broadcast %cst_13 : f32 to vector<16x1xf32>
    %25 = arith.addf %21, %24 : vector<16x1xf32>
    %26 = math.rsqrt %25 : vector<16x1xf32>
    %27 = vector.broadcast %26 : vector<16x1xf32> to vector<16x32xf32>
    %28 = arith.mulf %23, %27 : vector<16x32xf32>
    %c0_14 = arith.constant 0 : index
    %c0_15 = arith.constant 0 : index
    %29 = vector.load %arg7[%c0_14, %c0_15] : memref<1x32xf32, #tpu.memory_space<vmem>>, vector<1x32xf32>
    %30 = vector.broadcast %29 : vector<1x32xf32> to vector<16x32xf32>
    %31 = arith.mulf %28, %30 : vector<16x32xf32>
    %c0_16 = arith.constant 0 : index
    %c0_17 = arith.constant 0 : index
    %32 = vector.load %arg8[%c0_16, %c0_17] : memref<1x32xf32, #tpu.memory_space<vmem>>, vector<1x32xf32>
    %33 = vector.broadcast %32 : vector<1x32xf32> to vector<16x32xf32>
    %34 = arith.addf %31, %33 : vector<16x32xf32>
    %35 = arith.truncf %34 : vector<16x32xf32> to vector<16x32xbf16>
    %c0_18 = arith.constant 0 : index
    %c0_19 = arith.constant 0 : index
    %36 = vector.load %arg10[%c0_18, %c0_19] : memref<16x32xbf16, #tpu.memory_space<vmem>>, vector<16x32xbf16>
    tpu.vector_store %arg10[%c0_18, %c0_19], %35 {strides = array<i32>} : memref<16x32xbf16, #tpu.memory_space<vmem>>, vector<16x32xbf16>,
    return
  }
  func.func @transform_0(%arg0: i32, %arg1: i32, %arg2: i32) -> (i32, i32) {
    %c0_i32 = arith.constant 0 : i32
    return %arg0, %arg2 : i32, i32
  }
  func.func @transform_1(%arg0: i32, %arg1: i32, %arg2: i32) -> (i32, i32) {
    %c0_i32 = arith.constant 0 : i32
    return %arg2, %arg1 : i32, i32
  }
  func.func @transform_2(%arg0: i32, %arg1: i32, %arg2: i32) -> (i32, i32) {
    %c0_i32 = arith.constant 0 : i32
    %c0_i32_0 = arith.constant 0 : i32
    return %c0_i32, %arg1 : i32, i32
  }
  func.func @transform_3(%arg0: i32, %arg1: i32, %arg2: i32) -> (i32, i32) {
    %c0_i32 = arith.constant 0 : i32
    return %arg0, %arg1 : i32, i32
  }
  func.func @transform_4(%arg0: i32, %arg1: i32, %arg2: i32) -> (i32, i32) {
    %c0_i32 = arith.constant 0 : i32
    %c0_i32_0 = arith.constant 0 : i32
    return %c0_i32, %arg1 : i32, i32
  }
  func.func @transform_5(%arg0: i32, %arg1: i32, %arg2: i32) -> (i32, i32) {
    %c0_i32 = arith.constant 0 : i32
    %c0_i32_0 = arith.constant 0 : i32
    return %c0_i32, %arg1 : i32, i32
  }
  func.func @transform_6(%arg0: i32, %arg1: i32, %arg2: i32) -> (i32, i32) {
    %c0_i32 = arith.constant 0 : i32
    return %arg0, %arg1 : i32, i32
  }
  func.func @transform_7(%arg0: i32, %arg1: i32, %arg2: i32) -> (i32, i32) {
    %c0_i32 = arith.constant 0 : i32
    return %arg0, %arg1 : i32, i32
  }
}

module attributes {stable_mosaic.version = 11 : i64} {
  func.func @_mm_kernel(%arg0: i32, %arg1: i32, %arg2: i32, %arg3: memref<16x128xbf16, #tpu.memory_space<vmem>>, %arg4: memref<128x32xbf16, #tpu.memory_space<vmem>>, %arg5: memref<1x32xf32, #tpu.memory_space<vmem>>, %arg6: memref<16x32xbf16, #tpu.memory_space<vmem>>, %arg7: memref<1x32xf32, #tpu.memory_space<vmem>>, %arg8: memref<1x32xf32, #tpu.memory_space<vmem>>, %arg9: memref<16x32xbf16, #tpu.memory_space<vmem>>, %arg10: memref<16x32xf32, #tpu.memory_space<vmem>>) attributes {dimension_semantics = [#tpu.dimension_semantics<parallel>, #tpu.dimension_semantics<parallel>, #tpu.dimension_semantics<arbitrary>], iteration_bounds = array<i64: 1, 1, 1>, scalar_prefetch = 0 : i64, scratch_operands = 0 : i64, tpu.core_type = #tpu.core_type<tc>, window_params = [{transform_indices = @transform_0, window_bounds = array<i64: 16, 128>}, {transform_indices = @transform_1, window_bounds = array<i64: 128, 32>}, {transform_indices = @transform_2, window_bounds = array<i64: 1, 32>}, {transform_indices = @transform_3, window_bounds = array<i64: 16, 32>}, {transform_indices = @transform_4, window_bounds = array<i64: 1, 32>}, {transform_indices = @transform_5, window_bounds = array<i64: 1, 32>}, {transform_indices = @transform_6, window_bounds = array<i64: 16, 32>}, {transform_indices = @transform_7, window_bounds = array<i64: 16, 32>}]} {
    %c0 = arith.constant 0 : index
    %c0_0 = arith.constant 0 : index
    %0 = vector.load %arg3[%c0, %c0_0] : memref<16x128xbf16, #tpu.memory_space<vmem>>, vector<16x128xbf16>
    %c0_1 = arith.constant 0 : index
    %c0_2 = arith.constant 0 : index
    %1 = vector.load %arg4[%c0_1, %c0_2] : memref<128x32xbf16, #tpu.memory_space<vmem>>, vector<128x32xbf16>
    %cst = arith.constant dense<0.000000e+00> : vector<16x32xf32>
    %2 = tpu.matmul %0, %1, %cst {dimension_numbers = #tpu.dot_dimension_numbers<[1], [0], [0], [1], [0, 0, 1, 1], [], []>} : vector<16x128xbf16>, vector<128x32xbf16>, vector<16x32xf32> -> vector<16x32xf32>
    %c0_3 = arith.constant 0 : index
    %c0_4 = arith.constant 0 : index
    %3 = vector.load %arg5[%c0_3, %c0_4] : memref<1x32xf32, #tpu.memory_space<vmem>>, vector<1x32xf32>
    %4 = vector.broadcast %3 : vector<1x32xf32> to vector<16x32xf32>
    %5 = arith.addf %2, %4 : vector<16x32xf32>
    %c0_5 = arith.constant 0 : index
    %c0_6 = arith.constant 0 : index
    %6 = vector.load %arg6[%c0_5, %c0_6] : memref<16x32xbf16, #tpu.memory_space<vmem>>, vector<16x32xbf16>
    %7 = arith.extf %6 : vector<16x32xbf16> to vector<16x32xf32>
    %8 = arith.addf %5, %7 : vector<16x32xf32>
    %9 = arith.truncf %8 : vector<16x32xf32> to vector<16x32xbf16>
    %c0_7 = arith.constant 0 : index
    %c0_8 = arith.constant 0 : index
    %10 = vector.load %arg9[%c0_7, %c0_8] : memref<16x32xbf16, #tpu.memory_space<vmem>>, vector<16x32xbf16>
    tpu.vector_store %arg9[%c0_7, %c0_8], %9 {strides = array<i32>} : memref<16x32xbf16, #tpu.memory_space<vmem>>, vector<16x32xbf16>,
    %cst_9 = arith.constant dense<0.000000e+00> : vector<16xf32>
    %11 = vector.multi_reduction <add>, %8, %cst_9 [1] : vector<16x32xf32> to vector<16xf32>
    %12 = vector.shape_cast %11 : vector<16xf32> to vector<16x1xf32>
    %cst_10 = arith.constant 3.200000e+01 : f32
    %13 = vector.broadcast %cst_10 : f32 to vector<16x1xf32>
    %14 = arith.divf %12, %13 : vector<16x1xf32>
    %15 = vector.broadcast %14 : vector<16x1xf32> to vector<16x32xf32>
    %16 = arith.subf %8, %15 : vector<16x32xf32>
    %17 = arith.mulf %16, %16 : vector<16x32xf32>
    %cst_11 = arith.constant dense<0.000000e+00> : vector<16xf32>
    %18 = vector.multi_reduction <add>, %17, %cst_11 [1] : vector<16x32xf32> to vector<16xf32>
    %19 = vector.shape_cast %18 : vector<16xf32> to vector<16x1xf32>
    %cst_12 = arith.constant 3.200000e+01 : f32
    %20 = vector.broadcast %cst_12 : f32 to vector<16x1xf32>
    %21 = arith.divf %19, %20 : vector<16x1xf32>
    %22 = vector.broadcast %14 : vector<16x1xf32> to vector<16x32xf32>
    %23 = arith.subf %8, %22 : vector<16x32xf32>
    %cst_13 = arith.constant 9.99999974E-6 : f32
    %24 = vector.broadcast %cst_13 : f32 to vector<16x1xf32>
    %25 = arith.addf %21, %24 : vector<16x1xf32>
    %26 = math.rsqrt %25 : vector<16x1xf32>
    %27 = vector.broadcast %26 : vector<16x1xf32> to vector<16x32xf32>
    %28 = arith.mulf %23, %27 : vector<16x32xf32>
    %c0_14 = arith.constant 0 : index
    %c0_15 = arith.constant 0 : index
    %29 = vector.load %arg7[%c0_14, %c0_15] : memref<1x32xf32, #tpu.memory_space<vmem>>, vector<1x32xf32>
    %30 = vector.broadcast %29 : vector<1x32xf32> to vector<16x32xf32>
    %31 = arith.mulf %28, %30 : vector<16x32xf32>
    %c0_16 = arith.constant 0 : index
    %c0_17 = arith.constant 0 : index
    %32 = vector.load %arg8[%c0_16, %c0_17] : memref<1x32xf32, #tpu.memory_space<vmem>>, vector<1x32xf32>
    %33 = vector.broadcast %32 : vector<1x32xf32> to vector<16x32xf32>
    %34 = arith.addf %31, %33 : vector<16x32xf32>
    %c0_18 = arith.constant 0 : index
    %c0_19 = arith.constant 0 : index
    %35 = vector.load %arg10[%c0_18, %c0_19] : memref<16x32xf32, #tpu.memory_space<vmem>>, vector<16x32xf32>
    tpu.vector_store %arg10[%c0_18, %c0_19], %34 {strides = array<i32>} : memref<16x32xf32, #tpu.memory_space<vmem>>, vector<16x32xf32>,
    return
  }
  func.func @transform_0(%arg0: i32, %arg1: i32, %arg2: i32) -> (i32, i32) {
    %c0_i32 = arith.constant 0 : i32
    return %arg0, %arg2 : i32, i32
  }
  func.func @transform_1(%arg0: i32, %arg1: i32, %arg2: i32) -> (i32, i32) {
    %c0_i32 = arith.constant 0 : i32
    return %arg2, %arg1 : i32, i32
  }
  func.func @transform_2(%arg0: i32, %arg1: i32, %arg2: i32) -> (i32, i32) {
    %c0_i32 = arith.constant 0 : i32
    %c0_i32_0 = arith.constant 0 : i32
    return %c0_i32, %arg1 : i32, i32
  }
  func.func @transform_3(%arg0: i32, %arg1: i32, %arg2: i32) -> (i32, i32) {
    %c0_i32 = arith.constant 0 : i32
    return %arg0, %arg1 : i32, i32
  }
  func.func @transform_4(%arg0: i32, %arg1: i32, %arg2: i32) -> (i32, i32) {
    %c0_i32 = arith.constant 0 : i32
    %c0_i32_0 = arith.constant 0 : i32
    return %c0_i32, %arg1 : i32, i32
  }
  func.func @transform_5(%arg0: i32, %arg1: i32, %arg2: i32) -> (i32, i32) {
    %c0_i32 = arith.constant 0 : i32
    %c0_i32_0 = arith.constant 0 : i32
    return %c0_i32, %arg1 : i32, i32
  }
  func.func @transform_6(%arg0: i32, %arg1: i32, %arg2: i32) -> (i32, i32) {
    %c0_i32 = arith.constant 0 : i32
    return %arg0, %arg1 : i32, i32
  }
  func.func @transform_7(%arg0: i32, %arg1: i32, %arg2: i32) -> (i32, i32) {
    %c0_i32 = arith.constant 0 : i32
    return %arg0, %arg1 : i32, i32
  }
}

</mosaic_0001>

<llo_original>
// kernel: visual_transformer_forward.13
$region0: #{visual_transformer_forward.13}
  #allocation0 [shape = 'u32[]', space=smem, size = 0x4, offset = 0x4, fixed_abs, tag = 'smem constant byte address 0x4 - core index']
  #allocation1 [shape = 'u32[144,128]{1,0:T(1,128)}', space=vmem, size = 0x12000, scoped, tag = 'internal scratch']
  %s0 = inlined_call_operand.vmem [shape: f32[16,32], index: 0, kind: input, shape index: {}]
  %s1 = inlined_call_operand.vmem [shape: f32[1,32], index: 1, kind: input, shape index: {}]
  %s2 = inlined_call_operand.vmem [shape: f32[1,32], index: 2, kind: input, shape index: {}]
  %s3 = inlined_call_operand.vmem [shape: f32[1,32], index: 3, kind: input, shape index: {}]
  %s4 = inlined_call_operand.vmem [shape: f32[1,32], index: 4, kind: input, shape index: {}]
  %s5 = inlined_call_operand.vmem [shape: bf16[16,32], index: 5, kind: output, shape index: {0}]
  %s6 = inlined_call_operand.vmem [shape: bf16[16,32], index: 6, kind: output, shape index: {1}]
  %7 = xla_tuple %s5, %s6
  %s8 = sld [smem:[#allocation0]]
  $region38: #{visual_transformer_forward.13} parent=0
    _
  %s10 = ssub.s32 1, %s8
  %s11 = scalar_select 0, %s10, %s8
  // Predicated region
  $region2: #{visual_transformer_forward.13} parent=0 // pred_check
    _
  $region3: #{visual_transformer_forward.13} parent=0 // pred_check_branch
    %13 = sbr.rel (0) target = $region5
  $region4: #{visual_transformer_forward.13} parent=0 // pred_region
    _
  $region5: #{visual_transformer_forward.13} parent=0 // pred_fallthru
    _
  // Predicated region
  $region6: #{visual_transformer_forward.13} parent=0 // pred_check
    _
  $region7: #{visual_transformer_forward.13} parent=0 // pred_check_branch
    %15 = sbr.rel (0) target = $region9
  $region8: #{visual_transformer_forward.13} parent=0 // pred_region
    _
  $region9: #{visual_transformer_forward.13} parent=0 // pred_fallthru
    _
  // Predicated region
  $region10: #{visual_transformer_forward.13} parent=0 // pred_check
    _
  $region11: #{visual_transformer_forward.13} parent=0 // pred_check_branch
    %17 = sbr.rel (0) target = $region13
  $region12: #{visual_transformer_forward.13} parent=0 // pred_region
    _
  $region13: #{visual_transformer_forward.13} parent=0 // pred_fallthru
    _
  // Predicated region
  $region14: #{visual_transformer_forward.13} parent=0 // pred_check
    _
  $region15: #{visual_transformer_forward.13} parent=0 // pred_check_branch
    %19 = sbr.rel (0) target = $region17
  $region16: #{visual_transformer_forward.13} parent=0 // pred_region
    _
  $region17: #{visual_transformer_forward.13} parent=0 // pred_fallthru
    _
  // Predicated region
  $region18: #{visual_transformer_forward.13} parent=0 // pred_check
    _
  $region19: #{visual_transformer_forward.13} parent=0 // pred_check_branch
    %21 = sbr.rel (0) target = $region21
  $region20: #{visual_transformer_forward.13} parent=0 // pred_region
    _
  $region21: #{visual_transformer_forward.13} parent=0 // pred_fallthru
    _
  %v22 = vld [vmem:[%s0] sm:$0xff]
  %v23 = vld [vmem:[%s0 + $0x8] sm:$0xff]
  %vm24 = vcmask 261120
  %v25 = vsel %vm24, %v22, 0.0
  %26 = vadd.xlane.f32.xlu0 %v25
  %v27 = vpop.xlane.xlu0 %26
  %v28 = vsel %vm24, %v23, 0.0
  %29 = vadd.xlane.f32.xlu0 %v28
  %v30 = vpop.xlane.xlu0 %29
  %v31 = vrcp.pop 32.0
  %v32 = vmul.f32 %v27, %v31
  %v33 = vmul.f32 %v30, %v31
  %v34 = vsub.f32 %v22, %v32
  %v35 = vsub.f32 %v23, %v33
  %v36 = vmul.f32 %v34, %v34
  %v37 = vmul.f32 %v35, %v35
  %v38 = vsel %vm24, %v36, 0.0
  %39 = vadd.xlane.f32.xlu0 %v38
  %v40 = vpop.xlane.xlu0 %39
  %v41 = vsel %vm24, %v37, 0.0
  %42 = vadd.xlane.f32.xlu0 %v41
  %v43 = vpop.xlane.xlu0 %42
  %v44 = vmul.f32 %v40, %v31
  %v45 = vmul.f32 %v43, %v31
  %v46 = vadd.f32 %v44, 1e-05
  %v47 = vadd.f32 %v45, 1e-05
  %v48 = vrsqrt.pop %v46
  %v49 = vrsqrt.pop %v47
  %v50 = vmul.f32 %v34, %v48
  %v51 = vmul.f32 %v35, %v49
  %v52 = vld [vmem:[%s1] sm:$0x1]
  %v54 = vlaneseq
  %v55 = vshrl.u32 %v54, 7
  %v56 = vsub.s32 0, %v55
  %v57 = vrot.slane %v52, %v56
  %v59 = vmul.f32 %v50, %v57
  %v60 = vmul.f32 %v51, %v57
  %v61 = vld [vmem:[%s2] sm:$0x1]
  %v63 = vlaneseq
  %v64 = vshrl.u32 %v63, 7
  %v65 = vsub.s32 0, %v64
  %v66 = vrot.slane %v61, %v65
  %v68 = vadd.f32 %v59, %v66
  %v69 = vadd.f32 %v60, %v66
  %v70 = vpack.c.bf16 %v69, %v68
  %v72 = vunpack.c.l.b16 %v70
  %v73 = vunpack.c.h.b16 %v70
  %v74 = vpack.c.b16 %v72, %v72
  %v75 = vpack.c.b16 %v73, %v73
  %vm78 = vcmask 257024
  %79 = vst.msk [vmem:[%s5] sm:$0xf] %vm78, %v74
  %80 = vst.msk [vmem:[%s5 + $0x4] sm:$0xf] %vm78, %v75
  %v81 = vsel %vm24, %v68, 0.0
  %82 = vadd.xlane.f32.xlu0 %v81
  %v83 = vpop.xlane.xlu0 %82
  %v84 = vsel %vm24, %v69, 0.0
  %85 = vadd.xlane.f32.xlu0 %v84
  %v86 = vpop.xlane.xlu0 %85
  %v87 = vmul.f32 %v83, %v31
  %v88 = vmul.f32 %v86, %v31
  %v89 = vsub.f32 %v68, %v87
  %v90 = vsub.f32 %v69, %v88
  %v91 = vmul.f32 %v89, %v89
  %v92 = vmul.f32 %v90, %v90
  %v93 = vsel %vm24, %v91, 0.0
  %94 = vadd.xlane.f32.xlu0 %v93
  %v95 = vpop.xlane.xlu0 %94
  %v96 = vsel %vm24, %v92, 0.0
  %97 = vadd.xlane.f32.xlu0 %v96
  %v98 = vpop.xlane.xlu0 %97
  %v99 = vmul.f32 %v95, %v31
  %v100 = vmul.f32 %v98, %v31
  %v101 = vadd.f32 %v99, 1e-05
  %v102 = vadd.f32 %v100, 1e-05
  %v103 = vrsqrt.pop %v101
  %v104 = vrsqrt.pop %v102
  %v105 = vmul.f32 %v89, %v103
  %v106 = vmul.f32 %v90, %v104
  %v107 = vld [vmem:[%s3] sm:$0x1]
  %v109 = vlaneseq
  %v110 = vshrl.u32 %v109, 7
  %v111 = vsub.s32 0, %v110
  %v112 = vrot.slane %v107, %v111
  %v114 = vmul.f32 %v105, %v112
  %v115 = vmul.f32 %v106, %v112
  %v116 = vld [vmem:[%s4] sm:$0x1]
  %v118 = vlaneseq
  %v119 = vshrl.u32 %v118, 7
  %v120 = vsub.s32 0, %v119
  %v121 = vrot.slane %v116, %v120
  %v123 = vadd.f32 %v114, %v121
  %v124 = vadd.f32 %v115, %v121
  %v125 = vpack.c.bf16 %v124, %v123
  %v127 = vunpack.c.l.b16 %v125
  %v128 = vunpack.c.h.b16 %v125
  %v129 = vpack.c.b16 %v127, %v127
  %v130 = vpack.c.b16 %v128, %v128
  %133 = vst.msk [vmem:[%s6] sm:$0xf] %vm78, %v129
  %134 = vst.msk [vmem:[%s6 + $0x4] sm:$0xf] %vm78, %v130
  // Predicated region
  $region22: #{visual_transformer_forward.13} parent=0 // pred_check
    _
  $region23: #{visual_transformer_forward.13} parent=0 // pred_check_branch
    %136 = sbr.rel (0) target = $region25
  $region24: #{visual_transformer_forward.13} parent=0 // pred_region
    _
  $region25: #{visual_transformer_forward.13} parent=0 // pred_fallthru
    _
  // Predicated region
  $region26: #{visual_transformer_forward.13} parent=0 // pred_check
    _
  $region27: #{visual_transformer_forward.13} parent=0 // pred_check_branch
    %138 = sbr.rel (0) target = $region29
  $region28: #{visual_transformer_forward.13} parent=0 // pred_region
    _
  $region29: #{visual_transformer_forward.13} parent=0 // pred_fallthru
    _
  // Predicated region
  $region30: #{visual_transformer_forward.13} parent=0 // pred_check
    _
  $region31: #{visual_transformer_forward.13} parent=0 // pred_check_branch
    %140 = sbr.rel (0) target = $region33
  $region32: #{visual_transformer_forward.13} parent=0 // pred_region
    _
  $region33: #{visual_transformer_forward.13} parent=0 // pred_fallthru
    _
  // Predicated region
  $region34: #{visual_transformer_forward.13} parent=0 // pred_check
    _
  $region35: #{visual_transformer_forward.13} parent=0 // pred_check_branch
    %142 = sbr.rel (0) target = $region37
  $region36: #{visual_transformer_forward.13} parent=0 // pred_region
    _
  $region37: #{visual_transformer_forward.13} parent=0 // pred_fallthru
    _

// kernel: visual_transformer_forward.12
$region0: #{visual_transformer_forward.12}
  #allocation0 [shape = 'u32[]', space=smem, size = 0x4, offset = 0x4, fixed_abs, tag = 'smem constant byte address 0x4 - core index']
  #allocation1 [shape = 'u32[144,128]{1,0:T(1,128)}', space=vmem, size = 0x12000, scoped, tag = 'internal scratch']
  %s0 = inlined_call_operand.vmem [shape: bf16[8,192], index: 0, kind: input, shape index: {}]
  %s1 = inlined_call_operand.vmem [shape: bf16[192,32], index: 1, kind: input, shape index: {}]
  %s2 = inlined_call_operand.vmem [shape: f32[8,32], index: 2, kind: output, shape index: {}]
  %s3 = sld [smem:[#allocation0]]
  $region18: #{visual_transformer_forward.12} parent=0
    _
  %s5 = ssub.s32 1, %s3
  %s6 = scalar_select 0, %s5, %s3
  // Predicated region
  $region2: #{visual_transformer_forward.12} parent=0 // pred_check
    _
  $region3: #{visual_transformer_forward.12} parent=0 // pred_check_branch
    %8 = sbr.rel (0) target = $region5
  $region4: #{visual_transformer_forward.12} parent=0 // pred_region
    _
  $region5: #{visual_transformer_forward.12} parent=0 // pred_fallthru
    _
  // Predicated region
  $region6: #{visual_transformer_forward.12} parent=0 // pred_check
    _
  $region7: #{visual_transformer_forward.12} parent=0 // pred_check_branch
    %10 = sbr.rel (0) target = $region9
  $region8: #{visual_transformer_forward.12} parent=0 // pred_region
    _
  $region9: #{visual_transformer_forward.12} parent=0 // pred_fallthru
    _
  %v12 = vld [vmem:[%s0] sm:$0xff]
  %v13 = vld [vmem:[%s1] sm:$0xf]
  %v14 = vld [vmem:[%s1 + $0x4] sm:$0xf]
  %v15 = vld [vmem:[%s1 + $0x8] sm:$0xf]
  %v16 = vld [vmem:[%s1 + $0xc] sm:$0xf]
  %v17 = vld [vmem:[%s1 + $0x10] sm:$0xf]
  %v18 = vld [vmem:[%s1 + $0x14] sm:$0xf]
  %v19 = vld [vmem:[%s1 + $0x18] sm:$0xf]
  %v20 = vld [vmem:[%s1 + $0x1c] sm:$0xf]
  %v21 = vld [vmem:[%s1 + $0x20] sm:$0xf]
  %v22 = vld [vmem:[%s1 + $0x24] sm:$0xf]
  %v23 = vld [vmem:[%s1 + $0x28] sm:$0xf]
  %v24 = vld [vmem:[%s1 + $0x2c] sm:$0xf]
  %v25 = vld [vmem:[%s1 + $0x30] sm:$0xf]
  %v26 = vld [vmem:[%s1 + $0x34] sm:$0xf]
  %v27 = vld [vmem:[%s1 + $0x38] sm:$0xf]
  %v28 = vld [vmem:[%s1 + $0x3c] sm:$0xf]
  %v29 = vld [vmem:[%s1 + $0x40] sm:$0xf]
  %v30 = vld [vmem:[%s1 + $0x44] sm:$0xf]
  %v31 = vld [vmem:[%s1 + $0x48] sm:$0xf]
  %v32 = vld [vmem:[%s1 + $0x4c] sm:$0xf]
  %v33 = vld [vmem:[%s1 + $0x50] sm:$0xf]
  %v34 = vld [vmem:[%s1 + $0x54] sm:$0xf]
  %v35 = vld [vmem:[%s1 + $0x58] sm:$0xf]
  %v36 = vld [vmem:[%s1 + $0x5c] sm:$0xf]
  %v38 = vunpack.c.l.b16 %v12
  %v39 = vunpack.c.h.b16 %v12
  %v40 = vpack.c.b16 %v38, %v38
  %v41 = vpack.c.b16 %v39, %v39
  %v67 = vunpack.c.l.b16 %v13
  %v68 = vunpack.c.l.b16 %v14
  %v69 = vunpack.c.l.b16 %v15
  %v70 = vunpack.c.l.b16 %v16
  %v71 = vunpack.c.l.b16 %v17
  %v72 = vunpack.c.l.b16 %v18
  %v73 = vunpack.c.l.b16 %v19
  %v74 = vunpack.c.l.b16 %v20
  %v75 = vunpack.c.l.b16 %v21
  %v76 = vunpack.c.l.b16 %v22
  %v77 = vunpack.c.l.b16 %v23
  %v78 = vunpack.c.l.b16 %v24
  %v79 = vunpack.c.l.b16 %v25
  %v80 = vunpack.c.l.b16 %v26
  %v81 = vunpack.c.l.b16 %v27
  %v82 = vunpack.c.l.b16 %v28
  %v83 = vunpack.c.l.b16 %v29
  %v84 = vunpack.c.l.b16 %v30
  %v85 = vunpack.c.l.b16 %v31
  %v86 = vunpack.c.l.b16 %v32
  %v87 = vunpack.c.l.b16 %v33
  %v88 = vunpack.c.l.b16 %v34
  %v89 = vunpack.c.l.b16 %v35
  %v90 = vunpack.c.l.b16 %v36
  %v91 = vpack.c.b16 %v68, %v67
  %v92 = vpack.c.b16 %v70, %v69
  %v93 = vpack.c.b16 %v72, %v71
  %v94 = vpack.c.b16 %v74, %v73
  %v95 = vpack.c.b16 %v76, %v75
  %v96 = vpack.c.b16 %v78, %v77
  %v97 = vpack.c.b16 %v80, %v79
  %v98 = vpack.c.b16 %v82, %v81
  %v99 = vpack.c.b16 %v84, %v83
  %v100 = vpack.c.b16 %v86, %v85
  %v101 = vpack.c.b16 %v88, %v87
  %v102 = vpack.c.b16 %v90, %v89
  %vm115 = vcmask 523264
  %v117 = vsel %vm115, %v41, 0
  %119 = vmatprep.subr.bf16.mxu0 0
  %120 = vmatpush1.bf16.msra.mxu0 %v98
  %121 = vmatprep.subr.bf16.mxu0 0
  %122 = vmatpush1.bf16.msra.mxu0 %v97
  %123 = vmatprep.subr.bf16.mxu0 0
  %124 = vmatpush1.bf16.msra.mxu0 %v96
  %125 = vmatprep.subr.bf16.mxu0 0
  %126 = vmatpush1.bf16.msra.mxu0 %v95
  %127 = vmatprep.subr.bf16.mxu0 0
  %128 = vmatpush1.bf16.msra.mxu0 %v94
  %129 = vmatprep.subr.bf16.mxu0 0
  %130 = vmatpush1.bf16.msra.mxu0 %v93
  %131 = vmatprep.subr.bf16.mxu0 0
  %132 = vmatpush1.bf16.msra.mxu0 %v92
  %133 = vmatprep.subr.bf16.mxu0 0
  %134 = vmatpush1.bf16.msra.mxu0 %v91
  %135 = vmatprep.subr.bf16.mxu0 0
  %136 = vmatpush2.bf16.msra.mxu0 0
  %137 = vmatprep.subr.bf16.mxu0 0
  %138 = vmatpush2.bf16.msra.mxu0 0
  %139 = vmatprep.subr.bf16.mxu0 0
  %140 = vmatpush2.bf16.msra.mxu0 0
  %141 = vmatprep.subr.bf16.mxu0 0
  %142 = vmatpush2.bf16.msra.mxu0 0
  %143 = vmatprep.subr.bf16.mxu0 0
  %144 = vmatpush2.bf16.msra.mxu0 %v102
  %145 = vmatprep.subr.bf16.mxu0 0
  %146 = vmatpush2.bf16.msra.mxu0 %v101
  %147 = vmatprep.subr.bf16.mxu0 0
  %148 = vmatpush2.bf16.msra.mxu0 %v100
  %149 = vmatprep.subr.bf16.mxu0 0
  %150 = vmatpush2.bf16.msra.mxu0 %v99
  %151 = vmatprep.mubr.bf16.mxu0 %v117
  %152 = vmatmul.mubr.bf16.gmra.mxu0 %v40
  %v153 = vpop.f32.mrf.mxu0
  %v154 = vadd.f32 0.0, %v153
  %v155 = vpop.f32.mrf.mxu0
  %v156 = vpop.f32.mrf.mxu0
  %v157 = vpop.f32.mrf.mxu0
  %158 = vdwg.mxu0
  %vm159 = vcmask 261120
  %160 = vst.msk [vmem:[%s2] sm:$0xff] %vm159, %v154
  // Predicated region
  $region10: #{visual_transformer_forward.12} parent=0 // pred_check
    _
  $region11: #{visual_transformer_forward.12} parent=0 // pred_check_branch
    %162 = sbr.rel (0) target = $region13
  $region12: #{visual_transformer_forward.12} parent=0 // pred_region
    _
  $region13: #{visual_transformer_forward.12} parent=0 // pred_fallthru
    _
  // Predicated region
  $region14: #{visual_transformer_forward.12} parent=0 // pred_check
    _
  $region15: #{visual_transformer_forward.12} parent=0 // pred_check_branch
    %164 = sbr.rel (0) target = $region17
  $region16: #{visual_transformer_forward.12} parent=0 // pred_region
    _
  $region17: #{visual_transformer_forward.12} parent=0 // pred_fallthru
    _

// kernel: visual_transformer_forward.14
$region0: #{visual_transformer_forward.14}
  #allocation0 [shape = 'u32[]', space=smem, size = 0x4, offset = 0x4, fixed_abs, tag = 'smem constant byte address 0x4 - core index']
  #allocation1 [shape = 'u32[144,128]{1,0:T(1,128)}', space=vmem, size = 0x12000, scoped, tag = 'internal scratch']
  %s0 = inlined_call_operand.vmem [shape: bf16[16,32], index: 0, kind: input, shape index: {}]
  %s1 = inlined_call_operand.vmem [shape: bf16[32,96], index: 1, kind: input, shape index: {}]
  %s2 = inlined_call_operand.vmem [shape: f32[1,96], index: 2, kind: input, shape index: {}]
  %s3 = inlined_call_operand.vmem [shape: bf16[16,96], index: 3, kind: output, shape index: {}]
  %s4 = sld [smem:[#allocation0]]
  $region22: #{visual_transformer_forward.14} parent=0
    _
  %s6 = ssub.s32 1, %s4
  %s7 = scalar_select 0, %s6, %s4
  // Predicated region
  $region2: #{visual_transformer_forward.14} parent=0 // pred_check
    _
  $region3: #{visual_transformer_forward.14} parent=0 // pred_check_branch
    %9 = sbr.rel (0) target = $region5
  $region4: #{visual_transformer_forward.14} parent=0 // pred_region
    _
  $region5: #{visual_transformer_forward.14} parent=0 // pred_fallthru
    _
  // Predicated region
  $region6: #{visual_transformer_forward.14} parent=0 // pred_check
    _
  $region7: #{visual_transformer_forward.14} parent=0 // pred_check_branch
    %11 = sbr.rel (0) target = $region9
  $region8: #{visual_transformer_forward.14} parent=0 // pred_region
    _
  $region9: #{visual_transformer_forward.14} parent=0 // pred_fallthru
    _
  // Predicated region
  $region10: #{visual_transformer_forward.14} parent=0 // pred_check
    _
  $region11: #{visual_transformer_forward.14} parent=0 // pred_check_branch
    %13 = sbr.rel (0) target = $region13
  $region12: #{visual_transformer_forward.14} parent=0 // pred_region
    _
  $region13: #{visual_transformer_forward.14} parent=0 // pred_fallthru
    _
  %v15 = vld [vmem:[%s0] sm:$0xf]
  %v16 = vld [vmem:[%s0 + $0x4] sm:$0xf]
  %v17 = vld [vmem:[%s1] sm:$0xf]
  %v18 = vld [vmem:[%s1 + $0x4] sm:$0xf]
  %v19 = vld [vmem:[%s1 + $0x8] sm:$0xf]
  %v20 = vld [vmem:[%s1 + $0xc] sm:$0xf]
  %v21 = vld [vmem:[%s2] sm:$0x1]
  %v23 = vlaneseq
  %v24 = vshrl.u32 %v23, 7
  %v25 = vsub.s32 0, %v24
  %v26 = vrot.slane %v21, %v25
  %v30 = vunpack.c.l.b16 %v15
  %v31 = vunpack.c.l.b16 %v16
  %v32 = vpack.c.b16 %v31, %v30
  %v37 = vunpack.c.l.b16 %v17
  %v38 = vunpack.c.l.b16 %v18
  %v39 = vunpack.c.l.b16 %v19
  %v40 = vunpack.c.l.b16 %v20
  %v41 = vpack.c.b16 %v38, %v37
  %v42 = vpack.c.b16 %v40, %v39
  %vm45 = vcmask 261120
  %v47 = vsel %vm45, %v32, 0
  %49 = vmatprep.subr.bf16.mxu0 0
  %50 = vmatpush1.bf16.msra.mxu0 0
  %51 = vmatprep.subr.bf16.mxu0 0
  %52 = vmatpush1.bf16.msra.mxu0 0
  %53 = vmatprep.subr.bf16.mxu0 0
  %54 = vmatpush1.bf16.msra.mxu0 0
  %55 = vmatprep.subr.bf16.mxu0 0
  %56 = vmatpush1.bf16.msra.mxu0 0
  %57 = vmatprep.subr.bf16.mxu0 0
  %58 = vmatpush1.bf16.msra.mxu0 0
  %59 = vmatprep.subr.bf16.mxu0 0
  %60 = vmatpush1.bf16.msra.mxu0 0
  %61 = vmatprep.subr.bf16.mxu0 0
  %62 = vmatpush1.bf16.msra.mxu0 %v42
  %63 = vmatprep.subr.bf16.mxu0 0
  %64 = vmatpush1.bf16.msra.mxu0 %v41
  %65 = vmatprep.subr.bf16.mxu0 0
  %66 = vmatpush2.bf16.msra.mxu0 0
  %67 = vmatprep.subr.bf16.mxu0 0
  %68 = vmatpush2.bf16.msra.mxu0 0
  %69 = vmatprep.subr.bf16.mxu0 0
  %70 = vmatpush2.bf16.msra.mxu0 0
  %71 = vmatprep.subr.bf16.mxu0 0
  %72 = vmatpush2.bf16.msra.mxu0 0
  %73 = vmatprep.subr.bf16.mxu0 0
  %74 = vmatpush2.bf16.msra.mxu0 0
  %75 = vmatprep.subr.bf16.mxu0 0
  %76 = vmatpush2.bf16.msra.mxu0 0
  %77 = vmatprep.subr.bf16.mxu0 0
  %78 = vmatpush2.bf16.msra.mxu0 0
  %79 = vmatprep.subr.bf16.mxu0 0
  %80 = vmatpush2.bf16.msra.mxu0 0
  %81 = vmatprep.mubr.bf16.mxu0 0
  %82 = vmatmul.mubr.bf16.gmra.mxu0 %v47
  %v83 = vpop.f32.mrf.mxu0
  %v84 = vadd.f32 %v26, %v83
  %v85 = vpop.f32.mrf.mxu0
  %v86 = vpop.f32.mrf.mxu0
  %v87 = vadd.f32 %v26, %v86
  %v88 = vpop.f32.mrf.mxu0
  %89 = vdwg.mxu0
  %v90 = vpack.c.bf16 %v87, %v84
  %v92 = vunpack.c.l.b16 %v90
  %v93 = vunpack.c.h.b16 %v90
  %v94 = vpack.c.b16 %v92, %v92
  %v95 = vpack.c.b16 %v93, %v93
  %vm98 = vcmask 781312
  %99 = vst.msk [vmem:[%s3] sm:$0xf] %vm98, %v94
  %100 = vst.msk [vmem:[%s3 + $0x4] sm:$0xf] %vm98, %v95
  // Predicated region
  $region14: #{visual_transformer_forward.14} parent=0 // pred_check
    _
  $region15: #{visual_transformer_forward.14} parent=0 // pred_check_branch
    %102 = sbr.rel (0) target = $region17
  $region16: #{visual_transformer_forward.14} parent=0 // pred_region
    _
  $region17: #{visual_transformer_forward.14} parent=0 // pred_fallthru
    _
  // Predicated region
  $region18: #{visual_transformer_forward.14} parent=0 // pred_check
    _
  $region19: #{visual_transformer_forward.14} parent=0 // pred_check_branch
    %104 = sbr.rel (0) target = $region21
  $region20: #{visual_transformer_forward.14} parent=0 // pred_region
    _
  $region21: #{visual_transformer_forward.14} parent=0 // pred_fallthru
    _

// kernel: visual_transformer_forward.16
$region0: #{visual_transformer_forward.16}
  #allocation0 [shape = 'u32[]', space=smem, size = 0x4, offset = 0x4, fixed_abs, tag = 'smem constant byte address 0x4 - core index']
  #allocation1 [shape = 'u32[144,128]{1,0:T(1,128)}', space=vmem, size = 0x12000, scoped, tag = 'internal scratch']
  %s0 = inlined_call_operand.vmem [shape: bf16[16,32], index: 0, kind: input, shape index: {}]
  %s1 = inlined_call_operand.vmem [shape: bf16[32,32], index: 1, kind: input, shape index: {}]
  %s2 = inlined_call_operand.vmem [shape: f32[1,32], index: 2, kind: input, shape index: {}]
  %s3 = inlined_call_operand.vmem [shape: bf16[16,32], index: 3, kind: input, shape index: {}]
  %s4 = inlined_call_operand.vmem [shape: f32[1,32], index: 4, kind: input, shape index: {}]
  %s5 = inlined_call_operand.vmem [shape: f32[1,32], index: 5, kind: input, shape index: {}]
  %s6 = inlined_call_operand.vmem [shape: bf16[16,32], index: 6, kind: output, shape index: {0}]
  %s7 = inlined_call_operand.vmem [shape: bf16[16,32], index: 7, kind: output, shape index: {1}]
  %8 = xla_tuple %s6, %s7
  %s9 = sld [smem:[#allocation0]]
  $region42: #{visual_transformer_forward.16} parent=0
    _
  %s11 = ssub.s32 1, %s9
  %s12 = scalar_select 0, %s11, %s9
  // Predicated region
  $region2: #{visual_transformer_forward.16} parent=0 // pred_check
    _
  $region3: #{visual_transformer_forward.16} parent=0 // pred_check_branch
    %14 = sbr.rel (0) target = $region5
  $region4: #{visual_transformer_forward.16} parent=0 // pred_region
    _
  $region5: #{visual_transformer_forward.16} parent=0 // pred_fallthru
    _
  // Predicated region
  $region6: #{visual_transformer_forward.16} parent=0 // pred_check
    _
  $region7: #{visual_transformer_forward.16} parent=0 // pred_check_branch
    %16 = sbr.rel (0) target = $region9
  $region8: #{visual_transformer_forward.16} parent=0 // pred_region
    _
  $region9: #{visual_transformer_forward.16} parent=0 // pred_fallthru
    _
  // Predicated region
  $region10: #{visual_transformer_forward.16} parent=0 // pred_check
    _
  $region11: #{visual_transformer_forward.16} parent=0 // pred_check_branch
    %18 = sbr.rel (0) target = $region13
  $region12: #{visual_transformer_forward.16} parent=0 // pred_region
    _
  $region13: #{visual_transformer_forward.16} parent=0 // pred_fallthru
    _
  // Predicated region
  $region14: #{visual_transformer_forward.16} parent=0 // pred_check
    _
  $region15: #{visual_transformer_forward.16} parent=0 // pred_check_branch
    %20 = sbr.rel (0) target = $region17
  $region16: #{visual_transformer_forward.16} parent=0 // pred_region
    _
  $region17: #{visual_transformer_forward.16} parent=0 // pred_fallthru
    _
  // Predicated region
  $region18: #{visual_transformer_forward.16} parent=0 // pred_check
    _
  $region19: #{visual_transformer_forward.16} parent=0 // pred_check_branch
    %22 = sbr.rel (0) target = $region21
  $region20: #{visual_transformer_forward.16} parent=0 // pred_region
    _
  $region21: #{visual_transformer_forward.16} parent=0 // pred_fallthru
    _
  // Predicated region
  $region22: #{visual_transformer_forward.16} parent=0 // pred_check
    _
  $region23: #{visual_transformer_forward.16} parent=0 // pred_check_branch
    %24 = sbr.rel (0) target = $region25
  $region24: #{visual_transformer_forward.16} parent=0 // pred_region
    _
  $region25: #{visual_transformer_forward.16} parent=0 // pred_fallthru
    _
  %v26 = vld [vmem:[%s0] sm:$0xf]
  %v27 = vld [vmem:[%s0 + $0x4] sm:$0xf]
  %v28 = vld [vmem:[%s1] sm:$0xf]
  %v29 = vld [vmem:[%s1 + $0x4] sm:$0xf]
  %v30 = vld [vmem:[%s1 + $0x8] sm:$0xf]
  %v31 = vld [vmem:[%s1 + $0xc] sm:$0xf]
  %v32 = vld [vmem:[%s2] sm:$0x1]
  %v34 = vlaneseq
  %v35 = vshrl.u32 %v34, 7
  %v36 = vsub.s32 0, %v35
  %v37 = vrot.slane %v32, %v36
  %v41 = vunpack.c.l.b16 %v26
  %v42 = vunpack.c.l.b16 %v27
  %v43 = vpack.c.b16 %v42, %v41
  %v48 = vunpack.c.l.b16 %v28
  %v49 = vunpack.c.l.b16 %v29
  %v50 = vunpack.c.l.b16 %v30
  %v51 = vunpack.c.l.b16 %v31
  %v52 = vpack.c.b16 %v49, %v48
  %v53 = vpack.c.b16 %v51, %v50
  %vm56 = vcmask 261120
  %v58 = vsel %vm56, %v43, 0
  %60 = vmatprep.subr.bf16.mxu0 0
  %61 = vmatpush1.bf16.msra.mxu0 0
  %62 = vmatprep.subr.bf16.mxu0 0
  %63 = vmatpush1.bf16.msra.mxu0 0
  %64 = vmatprep.subr.bf16.mxu0 0
  %65 = vmatpush1.bf16.msra.mxu0 0
  %66 = vmatprep.subr.bf16.mxu0 0
  %67 = vmatpush1.bf16.msra.mxu0 0
  %68 = vmatprep.subr.bf16.mxu0 0
  %69 = vmatpush1.bf16.msra.mxu0 0
  %70 = vmatprep.subr.bf16.mxu0 0
  %71 = vmatpush1.bf16.msra.mxu0 0
  %72 = vmatprep.subr.bf16.mxu0 0
  %73 = vmatpush1.bf16.msra.mxu0 %v53
  %74 = vmatprep.subr.bf16.mxu0 0
  %75 = vmatpush1.bf16.msra.mxu0 %v52
  %76 = vmatprep.subr.bf16.mxu0 0
  %77 = vmatpush2.bf16.msra.mxu0 0
  %78 = vmatprep.subr.bf16.mxu0 0
  %79 = vmatpush2.bf16.msra.mxu0 0
  %80 = vmatprep.subr.bf16.mxu0 0
  %81 = vmatpush2.bf16.msra.mxu0 0
  %82 = vmatprep.subr.bf16.mxu0 0
  %83 = vmatpush2.bf16.msra.mxu0 0
  %84 = vmatprep.subr.bf16.mxu0 0
  %85 = vmatpush2.bf16.msra.mxu0 0
  %86 = vmatprep.subr.bf16.mxu0 0
  %87 = vmatpush2.bf16.msra.mxu0 0
  %88 = vmatprep.subr.bf16.mxu0 0
  %89 = vmatpush2.bf16.msra.mxu0 0
  %90 = vmatprep.subr.bf16.mxu0 0
  %91 = vmatpush2.bf16.msra.mxu0 0
  %92 = vmatprep.mubr.bf16.mxu0 0
  %93 = vmatmul.mubr.bf16.gmra.mxu0 %v58
  %v94 = vpop.f32.mrf.mxu0
  %v95 = vadd.f32 %v37, %v94
  %v96 = vpop.f32.mrf.mxu0
  %v97 = vpop.f32.mrf.mxu0
  %v98 = vadd.f32 %v37, %v97
  %v99 = vpop.f32.mrf.mxu0
  %100 = vdwg.mxu0
  %v101 = vld [vmem:[%s3] sm:$0xf]
  %v102 = vld [vmem:[%s3 + $0x4] sm:$0xf]
  %v103 = vunpack.c.l.bf16 %v101
  %v104 = vunpack.c.l.bf16 %v102
  %v105 = vadd.f32 %v95, %v103
  %v106 = vadd.f32 %v98, %v104
  %v107 = vpack.c.bf16 %v106, %v105
  %v109 = vunpack.c.l.b16 %v107
  %v110 = vunpack.c.h.b16 %v107
  %v111 = vpack.c.b16 %v109, %v109
  %v112 = vpack.c.b16 %v110, %v110
  %vm115 = vcmask 257024
  %116 = vst.msk [vmem:[%s6] sm:$0xf] %vm115, %v111
  %117 = vst.msk [vmem:[%s6 + $0x4] sm:$0xf] %vm115, %v112
  %v118 = vsel %vm56, %v105, 0.0
  %119 = vadd.xlane.f32.xlu0 %v118
  %v120 = vpop.xlane.xlu0 %119
  %v121 = vsel %vm56, %v106, 0.0
  %122 = vadd.xlane.f32.xlu0 %v121
  %v123 = vpop.xlane.xlu0 %122
  %v124 = vrcp.pop 32.0
  %v125 = vmul.f32 %v120, %v124
  %v126 = vmul.f32 %v123, %v124
  %v127 = vsub.f32 %v105, %v125
  %v128 = vsub.f32 %v106, %v126
  %v129 = vmul.f32 %v127, %v127
  %v130 = vmul.f32 %v128, %v128
  %v131 = vsel %vm56, %v129, 0.0
  %132 = vadd.xlane.f32.xlu0 %v131
  %v133 = vpop.xlane.xlu0 %132
  %v134 = vsel %vm56, %v130, 0.0
  %135 = vadd.xlane.f32.xlu0 %v134
  %v136 = vpop.xlane.xlu0 %135
  %v137 = vmul.f32 %v133, %v124
  %v138 = vmul.f32 %v136, %v124
  %v139 = vadd.f32 %v137, 1e-05
  %v140 = vadd.f32 %v138, 1e-05
  %v141 = vrsqrt.pop %v139
  %v142 = vrsqrt.pop %v140
  %v143 = vmul.f32 %v127, %v141
  %v144 = vmul.f32 %v128, %v142
  %v145 = vld [vmem:[%s4] sm:$0x1]
  %v147 = vlaneseq
  %v148 = vshrl.u32 %v147, 7
  %v149 = vsub.s32 0, %v148
  %v150 = vrot.slane %v145, %v149
  %v152 = vmul.f32 %v143, %v150
  %v153 = vmul.f32 %v144, %v150
  %v154 = vld [vmem:[%s5] sm:$0x1]
  %v156 = vlaneseq
  %v157 = vshrl.u32 %v156, 7
  %v158 = vsub.s32 0, %v157
  %v159 = vrot.slane %v154, %v158
  %v161 = vadd.f32 %v152, %v159
  %v162 = vadd.f32 %v153, %v159
  %v163 = vpack.c.bf16 %v162, %v161
  %v165 = vunpack.c.l.b16 %v163
  %v166 = vunpack.c.h.b16 %v163
  %v167 = vpack.c.b16 %v165, %v165
  %v168 = vpack.c.b16 %v166, %v166
  %171 = vst.msk [vmem:[%s7] sm:$0xf] %vm115, %v167
  %172 = vst.msk [vmem:[%s7 + $0x4] sm:$0xf] %vm115, %v168
  // Predicated region
  $region26: #{visual_transformer_forward.16} parent=0 // pred_check
    _
  $region27: #{visual_transformer_forward.16} parent=0 // pred_check_branch
    %174 = sbr.rel (0) target = $region29
  $region28: #{visual_transformer_forward.16} parent=0 // pred_region
    _
  $region29: #{visual_transformer_forward.16} parent=0 // pred_fallthru
    _
  // Predicated region
  $region30: #{visual_transformer_forward.16} parent=0 // pred_check
    _
  $region31: #{visual_transformer_forward.16} parent=0 // pred_check_branch
    %176 = sbr.rel (0) target = $region33
  $region32: #{visual_transformer_forward.16} parent=0 // pred_region
    _
  $region33: #{visual_transformer_forward.16} parent=0 // pred_fallthru
    _
  // Predicated region
  $region34: #{visual_transformer_forward.16} parent=0 // pred_check
    _
  $region35: #{visual_transformer_forward.16} parent=0 // pred_check_branch
    %178 = sbr.rel (0) target = $region37
  $region36: #{visual_transformer_forward.16} parent=0 // pred_region
    _
  $region37: #{visual_transformer_forward.16} parent=0 // pred_fallthru
    _
  // Predicated region
  $region38: #{visual_transformer_forward.16} parent=0 // pred_check
    _
  $region39: #{visual_transformer_forward.16} parent=0 // pred_check_branch
    %180 = sbr.rel (0) target = $region41
  $region40: #{visual_transformer_forward.16} parent=0 // pred_region
    _
  $region41: #{visual_transformer_forward.16} parent=0 // pred_fallthru
    _

// kernel: visual_transformer_forward.15
$region0: #{visual_transformer_forward.15}
  #allocation0 [shape = 'u32[]', space=smem, size = 0x4, offset = 0x4, fixed_abs, tag = 'smem constant byte address 0x4 - core index']
  #allocation1 [shape = 'u32[144,128]{1,0:T(1,128)}', space=vmem, size = 0x12000, scoped, tag = 'internal scratch']
  %s0 = inlined_call_operand.vmem [shape: bf16[2,8,32], index: 0, kind: input, shape index: {}]
  %s1 = inlined_call_operand.vmem [shape: bf16[2,8,32], index: 1, kind: input, shape index: {}]
  %s2 = inlined_call_operand.vmem [shape: bf16[2,8,32], index: 2, kind: input, shape index: {}]
  %s3 = inlined_call_operand.vmem [shape: bf16[2,8,32], index: 3, kind: output, shape index: {}]
  %s4 = sld [smem:[#allocation0]]
  $region45: #{visual_transformer_forward.15} parent=0
    _
  %s6 = ssub.s32 1, %s4
  %s7 = scalar_select 0, %s6, %s4
  loop: start=0, step=1, limit=4
  $region2: #{visual_transformer_forward.15} parent=0 // loop_pre_header
    _
  $region3: #{visual_transformer_forward.15} parent=0 // loop_header
    %s9 = sphi 0, %s13
    %p10 = scmp.ge.s32.totalorder %s9, 4
    %s16 = sphi 0, %s28
    %s17 = sphi 0, %s24
    %s18 = sphi 0, %s16
    %s19 = sphi 0, %s17
    %s20 = sphi 0, %s18
    %s21 = sphi 0, %s19
    %s31 = sphi 0, %s33
    %s34 = sphi 0, %s31
    %s35 = sphi 0, %s34
    %s51 = sphi 0, %s35
    %s57 = sphi 0, %s59
    %s60 = sphi 0, %s57
    %s61 = sphi 0, %s60
    %s77 = sphi 0, %s61
    %s83 = sphi 0, %s85
    %s86 = sphi 0, %s83
    %s87 = sphi 0, %s86
    %s103 = sphi 0, %s87
    %s111 = sphi 0, %s113
    %s114 = sphi 0, %s111
    %s115 = sphi 0, %s114
    %s131 = sphi 0, %s115
  $region4: #{visual_transformer_forward.15} parent=0 // loop_header_branch
    %12 = sbr.rel (%p10) target = $region8
  $region5: #{visual_transformer_forward.15} parent=0 // loop_body
    %s14 = ssub.s32 %s9, 1
    %s15 = ssub.s32 %s9, 2
    %s22 = sadd.s32 1, %s17
    %p23 = scmp.ge.s32.totalorder %s22, 1
    %s24 = scalar_select %p23, 0, %s22
    %s25 = sadd.s32 1, %s16
    %s26 = scalar_select %p23, %s25, %s16
    %p27 = scmp.ge.s32.totalorder %s26, 2
    %s28 = scalar_select %p27, 0, %s26
    %s29 = ssub.s32 %s16, %s28
    %p30 = scmp.eq.s32.totalorder %s29, 0
    %s32 = sadd.s32 %s31, 1
    %s33 = scalar_select %p30, %s31, %s32
    %p36 = pneg %p30
    %p37 = scmp.eq.s32.totalorder %s9, 1
    %p38 = por %p36, %p37
    %p39 = scmp.ne.s32.totalorder %s31, %s34
    %p40 = scmp.eq.s32.totalorder %s9, 0
    %p41 = por %p39, %p40
    %p42 = scmp.ne.s32.totalorder %s31, %s34
    %p43 = scmp.eq.s32.totalorder %s14, 1
    %p44 = por %p42, %p43
    %p45 = scmp.ne.s32.totalorder %s34, %s35
    %p46 = scmp.eq.s32.totalorder %s14, 0
    %p47 = por %p45, %p46
    %p48 = scmp.ne.s32.totalorder %s34, %s35
    %p49 = scmp.eq.s32.totalorder %s15, 1
    %p50 = por %p48, %p49
    %p52 = scmp.ne.s32.totalorder %s35, %s51
    %p53 = scmp.eq.s32.totalorder %s15, 0
    %p54 = por %p52, %p53
    %s55 = ssub.s32 %s16, %s28
    %p56 = scmp.eq.s32.totalorder %s55, 0
    %s58 = sadd.s32 %s57, 1
    %s59 = scalar_select %p56, %s57, %s58
    %p62 = pneg %p56
    %p63 = scmp.eq.s32.totalorder %s9, 1
    %p64 = por %p62, %p63
    %p65 = scmp.ne.s32.totalorder %s57, %s60
    %p66 = scmp.eq.s32.totalorder %s9, 0
    %p67 = por %p65, %p66
    %p68 = scmp.ne.s32.totalorder %s57, %s60
    %p69 = scmp.eq.s32.totalorder %s14, 1
    %p70 = por %p68, %p69
    %p71 = scmp.ne.s32.totalorder %s60, %s61
    %p72 = scmp.eq.s32.totalorder %s14, 0
    %p73 = por %p71, %p72
    %p74 = scmp.ne.s32.totalorder %s60, %s61
    %p75 = scmp.eq.s32.totalorder %s15, 1
    %p76 = por %p74, %p75
    %p78 = scmp.ne.s32.totalorder %s61, %s77
    %p79 = scmp.eq.s32.totalorder %s15, 0
    %p80 = por %p78, %p79
    %s81 = ssub.s32 %s16, %s28
    %p82 = scmp.eq.s32.totalorder %s81, 0
    %s84 = sadd.s32 %s83, 1
    %s85 = scalar_select %p82, %s83, %s84
    %p88 = pneg %p82
    %p89 = scmp.eq.s32.totalorder %s9, 1
    %p90 = por %p88, %p89
    %p91 = scmp.ne.s32.totalorder %s83, %s86
    %p92 = scmp.eq.s32.totalorder %s9, 0
    %p93 = por %p91, %p92
    %p94 = scmp.ne.s32.totalorder %s83, %s86
    %p95 = scmp.eq.s32.totalorder %s14, 1
    %p96 = por %p94, %p95
    %p97 = scmp.ne.s32.totalorder %s86, %s87
    %p98 = scmp.eq.s32.totalorder %s14, 0
    %p99 = por %p97, %p98
    %p100 = scmp.ne.s32.totalorder %s86, %s87
    %p101 = scmp.eq.s32.totalorder %s15, 1
    %p102 = por %p100, %p101
    %p104 = scmp.ne.s32.totalorder %s87, %s103
    %p105 = scmp.eq.s32.totalorder %s15, 0
    %p106 = por %p104, %p105
    %s107 = ssub.s32 %s16, %s28
    %s108 = ssub.s32 %s17, %s24
    %s109 = sor.u32 %s107, %s108
    %p110 = scmp.eq.s32.totalorder %s109, 0
    %s112 = sadd.s32 %s111, 1
    %s113 = scalar_select %p110, %s111, %s112
    %p116 = pneg %p110
    %p117 = scmp.eq.s32.totalorder %s9, 1
    %p118 = por %p116, %p117
    %p119 = scmp.ne.s32.totalorder %s111, %s114
    %p120 = scmp.eq.s32.totalorder %s9, 0
    %p121 = por %p119, %p120
    %p122 = scmp.ne.s32.totalorder %s111, %s114
    %p123 = scmp.eq.s32.totalorder %s14, 1
    %p124 = por %p122, %p123
    %p125 = scmp.ne.s32.totalorder %s114, %s115
    %p126 = scmp.eq.s32.totalorder %s14, 0
    %p127 = por %p125, %p126
    %p128 = scmp.ne.s32.totalorder %s114, %s115
    %p129 = scmp.eq.s32.totalorder %s15, 1
    %p130 = por %p128, %p129
    %p132 = scmp.ne.s32.totalorder %s115, %s131
    %p133 = scmp.eq.s32.totalorder %s15, 0
    %p134 = por %p132, %p133
    %p135 = scmp.le.s32.totalorder 1, %s9
    %p136 = scmp.lt.s32.totalorder %s9, 3
    %p137 = pnand %p135, %p136
    %p138 = pneg %p137
    // Predicated region
    $region9: #{visual_transformer_forward.15} parent=5 // pred_check
      _
    $region10: #{visual_transformer_forward.15} parent=5 // pred_check_branch
      %140 = sbr.rel (%p137) target = $region12
    $region11: #{visual_transformer_forward.15} parent=5 // pred_region
      %s141 = ssub.s32 %s9, 1
    $region12: #{visual_transformer_forward.15} parent=5 // pred_fallthru
      _
    %p142 = scmp.lt.s32.totalorder %s9, 2
    // Predicated region
    $region13: #{visual_transformer_forward.15} parent=5 // pred_check
      %p143 = pneg %p142
    $region14: #{visual_transformer_forward.15} parent=5 // pred_check_branch
      %145 = sbr.rel (%p143) target = $region16
    $region15: #{visual_transformer_forward.15} parent=5 // pred_region
      // Predicated region
      $region17: #{visual_transformer_forward.15} parent=15 // pred_check
        %p146 = pneg %p41
      $region18: #{visual_transformer_forward.15} parent=15 // pred_check_branch
        %148 = sbr.rel (%p146) target = $region20
      $region19: #{visual_transformer_forward.15} parent=15 // pred_region
        %p149 = scmp.lt.s32.totalorder %s16, 1
        %s150 = scalar_select %p149, %s16, 1
        %s151 = smul.addr %s150, 4
        %s152 = scalar_lea.vmem %s0, %s151
      $region20: #{visual_transformer_forward.15} parent=15 // pred_fallthru
        _
      // Predicated region
      $region21: #{visual_transformer_forward.15} parent=15 // pred_check
        %p153 = pneg %p67
      $region22: #{visual_transformer_forward.15} parent=15 // pred_check_branch
        %155 = sbr.rel (%p153) target = $region24
      $region23: #{visual_transformer_forward.15} parent=15 // pred_region
        %p156 = scmp.lt.s32.totalorder %s16, 1
        %s157 = scalar_select %p156, %s16, 1
        %s158 = smul.addr %s157, 4
        %s159 = scalar_lea.vmem %s1, %s158
      $region24: #{visual_transformer_forward.15} parent=15 // pred_fallthru
        _
      // Predicated region
      $region25: #{visual_transformer_forward.15} parent=15 // pred_check
        %p160 = pneg %p93
      $region26: #{visual_transformer_forward.15} parent=15 // pred_check_branch
        %162 = sbr.rel (%p160) target = $region28
      $region27: #{visual_transformer_forward.15} parent=15 // pred_region
        %p163 = scmp.lt.s32.totalorder %s16, 1
        %s164 = scalar_select %p163, %s16, 1
        %s165 = smul.addr %s164, 4
        %s166 = scalar_lea.vmem %s2, %s165
      $region28: #{visual_transformer_forward.15} parent=15 // pred_fallthru
        _
    $region16: #{visual_transformer_forward.15} parent=5 // pred_fallthru
      _
    %p167 = scmp.le.s32.totalorder 1, %s9
    %p168 = scmp.lt.s32.totalorder %s9, 3
    %p169 = pnand %p167, %p168
    %p170 = pneg %p169
    // Predicated region
    $region29: #{visual_transformer_forward.15} parent=5 // pred_check
      _
    $region30: #{visual_transformer_forward.15} parent=5 // pred_check_branch
      %172 = sbr.rel (%p169) target = $region32
    $region31: #{visual_transformer_forward.15} parent=5 // pred_region
      %s173 = ssub.s32 %s9, 1
      %p174 = scmp.lt.s32.totalorder %s18, 1
      %s175 = scalar_select %p174, %s18, 1
      %s176 = smul.addr %s175, 4
      %s177 = scalar_lea.vmem %s0, %s176
      %p178 = pneg %p47
      %p179 = pneg %p44
      %p180 = scmp.lt.s32.totalorder %s18, 1
      %s181 = scalar_select %p180, %s18, 1
      %s182 = smul.addr %s181, 4
      %s183 = scalar_lea.vmem %s1, %s182
      %p184 = pneg %p73
      %p185 = pneg %p70
      %p186 = scmp.lt.s32.totalorder %s18, 1
      %s187 = scalar_select %p186, %s18, 1
      %s188 = smul.addr %s187, 4
      %s189 = scalar_lea.vmem %s2, %s188
      %p190 = pneg %p99
      %p191 = pneg %p96
      %p192 = pneg %p127
      %p193 = pneg %p124
      %p194 = scmp.lt.s32.totalorder %s18, 1
      %s195 = scalar_select %p194, %s18, 1
      %p196 = scmp.lt.s32.totalorder %s19, 0
      %s197 = scalar_select %p196, %s19, 0
      %s198 = sadd.s32 %s197, %s195
      %s199 = smul.addr %s198, 4
      %s200 = scalar_lea.vmem %s3, %s199
      %p201 = scmp.lt.s32.totalorder %s18, 1
      %s202 = scalar_select %p201, %s18, 1
      %s203 = smul.addr %s202, 4
      %s204 = scalar_lea.vmem %s0, %s203
      %p205 = scmp.lt.s32.totalorder %s18, 1
      %s206 = scalar_select %p205, %s18, 1
      %s207 = smul.addr %s206, 4
      %s208 = scalar_lea.vmem %s1, %s207
      %p209 = scmp.lt.s32.totalorder %s18, 1
      %s210 = scalar_select %p209, %s18, 1
      %s211 = smul.addr %s210, 4
      %s212 = scalar_lea.vmem %s2, %s211
      %p213 = scmp.lt.s32.totalorder %s18, 1
      %s214 = scalar_select %p213, %s18, 1
      %p215 = scmp.lt.s32.totalorder %s19, 0
      %s216 = scalar_select %p215, %s19, 0
      %s217 = sadd.s32 %s216, %s214
      %s218 = smul.addr %s217, 4
      %s219 = scalar_lea.vmem %s3, %s218
      %v221 = vld [vmem:[%s204] sm:$0xf]
      %v222 = vld [vmem:[%s208] sm:$0xf]
      %v223 = vld [vmem:[%s212] sm:$0xf]
      %v224 = vlaneseq
      %v225 = vand.u32 %v224, 127
      %vm226 = vcmp.ge.s32.totalorder %v225, 5
      %v227 = vsel %vm226, -1e+30, 0.0
      %vm228 = vcmask 64512
      %v230 = vsel %vm228, %v221, 0
      %v233 = vsel %vm228, %v222, 0
      %235 = vmatprep.subr.bf16.mxu0 0
      %236 = vmatpush1.bf16.xpose.msra.mxu0 0
      %237 = vmatprep.subr.bf16.mxu0 0
      %238 = vmatpush1.bf16.xpose.msra.mxu0 0
      %239 = vmatprep.subr.bf16.mxu0 0
      %240 = vmatpush1.bf16.xpose.msra.mxu0 0
      %241 = vmatprep.subr.bf16.mxu0 0
      %242 = vmatpush1.bf16.xpose.msra.mxu0 0
      %243 = vmatprep.subr.bf16.mxu0 0
      %244 = vmatpush1.bf16.xpose.msra.mxu0 0
      %245 = vmatprep.subr.bf16.mxu0 0
      %246 = vmatpush1.bf16.xpose.msra.mxu0 0
      %247 = vmatprep.subr.bf16.mxu0 0
      %248 = vmatpush1.bf16.xpose.msra.mxu0 0
      %249 = vmatprep.subr.bf16.mxu0 0
      %250 = vmatpush1.bf16.xpose.msra.mxu0 %v233
      %251 = vmatprep.subr.bf16.mxu0 0
      %252 = vmatpush2.bf16.xpose.msra.mxu0 0
      %253 = vmatprep.subr.bf16.mxu0 0
      %254 = vmatpush2.bf16.xpose.msra.mxu0 0
      %255 = vmatprep.subr.bf16.mxu0 0
      %256 = vmatpush2.bf16.xpose.msra.mxu0 0
      %257 = vmatprep.subr.bf16.mxu0 0
      %258 = vmatpush2.bf16.xpose.msra.mxu0 0
      %259 = vmatprep.subr.bf16.mxu0 0
      %260 = vmatpush2.bf16.xpose.msra.mxu0 0
      %261 = vmatprep.subr.bf16.mxu0 0
      %262 = vmatpush2.bf16.xpose.msra.mxu0 0
      %263 = vmatprep.subr.bf16.mxu0 0
      %264 = vmatpush2.bf16.xpose.msra.mxu0 0
      %265 = vmatprep.subr.bf16.mxu0 0
      %266 = vmatpush2.bf16.xpose.msra.mxu0 0
      %267 = vmatprep.mubr.bf16.mxu0 0
      %268 = vmatmul.mubr.bf16.gmra.mxu0 %v230
      %v269 = vpop.f32.mrf.mxu0
      %v270 = vadd.f32 %v227, %v269
      %v271 = vpop.f32.mrf.mxu0
      %v272 = vpop.f32.mrf.mxu0
      %v273 = vpop.f32.mrf.mxu0
      %274 = vdwg.mxu0
      %v275 = vsel %vm228, %v270, -inf
      %276 = vmax.xlane.f32.xlu0 %v275
      %v277 = vpop.xlane.xlu0 %276
      %v278 = vsub.f32 %v270, %v277
      %v279 = vmul.f32 %v278, 1.442695
      %v280 = vpow.pop %v279
      %v281 = vsel %vm228, %v280, 0.0
      %282 = vadd.xlane.f32.xlu0 %v281
      %v283 = vpop.xlane.xlu0 %282
      %v284 = vrcp.pop %v283
      %v285 = vmul.f32 %v280, %v284
      %v286 = vpack.c.bf16 %v285, %v285
      %v288 = vsel %vm228, %v286, 0
      %vm290 = vcmask 1043456
      %v292 = vsel %vm290, %v223, 0
      %294 = vmatprep.subr.bf16.mxu0 0
      %295 = vmatpush1.bf16.msra.mxu0 0
      %296 = vmatprep.subr.bf16.mxu0 0
      %297 = vmatpush1.bf16.msra.mxu0 0
      %298 = vmatprep.subr.bf16.mxu0 0
      %299 = vmatpush1.bf16.msra.mxu0 0
      %300 = vmatprep.subr.bf16.mxu0 0
      %301 = vmatpush1.bf16.msra.mxu0 0
      %302 = vmatprep.subr.bf16.mxu0 0
      %303 = vmatpush1.bf16.msra.mxu0 0
      %304 = vmatprep.subr.bf16.mxu0 0
      %305 = vmatpush1.bf16.msra.mxu0 0
      %306 = vmatprep.subr.bf16.mxu0 0
      %307 = vmatpush1.bf16.msra.mxu0 0
      %308 = vmatprep.subr.bf16.mxu0 0
      %309 = vmatpush1.bf16.msra.mxu0 %v292
      %310 = vmatprep.subr.bf16.mxu0 0
      %311 = vmatpush2.bf16.msra.mxu0 0
      %312 = vmatprep.subr.bf16.mxu0 0
      %313 = vmatpush2.bf16.msra.mxu0 0
      %314 = vmatprep.subr.bf16.mxu0 0
      %315 = vmatpush2.bf16.msra.mxu0 0
      %316 = vmatprep.subr.bf16.mxu0 0
      %317 = vmatpush2.bf16.msra.mxu0 0
      %318 = vmatprep.subr.bf16.mxu0 0
      %319 = vmatpush2.bf16.msra.mxu0 0
      %320 = vmatprep.subr.bf16.mxu0 0
      %321 = vmatpush2.bf16.msra.mxu0 0
      %322 = vmatprep.subr.bf16.mxu0 0
      %323 = vmatpush2.bf16.msra.mxu0 0
      %324 = vmatprep.subr.bf16.mxu0 0
      %325 = vmatpush2.bf16.msra.mxu0 0
      %326 = vmatprep.mubr.bf16.mxu0 0
      %327 = vmatmul.mubr.bf16.gmra.mxu0 %v288
      %v328 = vpop.f32.mrf.mxu0
      %v329 = vadd.f32 0.0, %v328
      %v330 = vpop.f32.mrf.mxu0
      %v331 = vpop.f32.mrf.mxu0
      %v332 = vpop.f32.mrf.mxu0
      %333 = vdwg.mxu0
      %v334 = vpack.c.bf16 %v329, %v329
      %vm335 = vcmask 60416
      %336 = vst.msk [vmem:[%s219] sm:$0xf] %vm335, %v334
      %v338 = vunpack.c.l.b16 %v221
      %v339 = vpack.c.b16 %v338, %v338
      %340 = vrot.lane.b32.xlu0 %v339, 120
      %v341 = vpop.permute.xlu0 %340
      %v343 = vunpack.c.l.b16 %v222
      %v344 = vpack.c.b16 %v343, %v343
      %345 = vrot.lane.b32.xlu0 %v344, 120
      %v346 = vpop.permute.xlu0 %345
      %v348 = vsel %vm228, %v341, 0
      %v351 = vsel %vm228, %v346, 0
      %353 = vmatprep.subr.bf16.mxu0 0
      %354 = vmatpush1.bf16.xpose.msra.mxu0 0
      %355 = vmatprep.subr.bf16.mxu0 0
      %356 = vmatpush1.bf16.xpose.msra.mxu0 0
      %357 = vmatprep.subr.bf16.mxu0 0
      %358 = vmatpush1.bf16.xpose.msra.mxu0 0
      %359 = vmatprep.subr.bf16.mxu0 0
      %360 = vmatpush1.bf16.xpose.msra.mxu0 0
      %361 = vmatprep.subr.bf16.mxu0 0
      %362 = vmatpush1.bf16.xpose.msra.mxu0 0
      %363 = vmatprep.subr.bf16.mxu0 0
      %364 = vmatpush1.bf16.xpose.msra.mxu0 0
      %365 = vmatprep.subr.bf16.mxu0 0
      %366 = vmatpush1.bf16.xpose.msra.mxu0 0
      %367 = vmatprep.subr.bf16.mxu0 0
      %368 = vmatpush1.bf16.xpose.msra.mxu0 %v351
      %369 = vmatprep.subr.bf16.mxu0 0
      %370 = vmatpush2.bf16.xpose.msra.mxu0 0
      %371 = vmatprep.subr.bf16.mxu0 0
      %372 = vmatpush2.bf16.xpose.msra.mxu0 0
      %373 = vmatprep.subr.bf16.mxu0 0
      %374 = vmatpush2.bf16.xpose.msra.mxu0 0
      %375 = vmatprep.subr.bf16.mxu0 0
      %376 = vmatpush2.bf16.xpose.msra.mxu0 0
      %377 = vmatprep.subr.bf16.mxu0 0
      %378 = vmatpush2.bf16.xpose.msra.mxu0 0
      %379 = vmatprep.subr.bf16.mxu0 0
      %380 = vmatpush2.bf16.xpose.msra.mxu0 0
      %381 = vmatprep.subr.bf16.mxu0 0
      %382 = vmatpush2.bf16.xpose.msra.mxu0 0
      %383 = vmatprep.subr.bf16.mxu0 0
      %384 = vmatpush2.bf16.xpose.msra.mxu0 0
      %385 = vmatprep.mubr.bf16.mxu0 0
      %386 = vmatmul.mubr.bf16.gmra.mxu0 %v348
      %v387 = vpop.f32.mrf.mxu0
      %v388 = vadd.f32 %v227, %v387
      %v389 = vpop.f32.mrf.mxu0
      %v390 = vpop.f32.mrf.mxu0
      %v391 = vpop.f32.mrf.mxu0
      %392 = vdwg.mxu0
      %v393 = vsel %vm228, %v388, -inf
      %394 = vmax.xlane.f32.xlu0 %v393
      %v395 = vpop.xlane.xlu0 %394
      %v396 = vsub.f32 %v388, %v395
      %v397 = vmul.f32 %v396, 1.442695
      %v398 = vpow.pop %v397
      %v399 = vsel %vm228, %v398, 0.0
      %400 = vadd.xlane.f32.xlu0 %v399
      %v401 = vpop.xlane.xlu0 %400
      %v402 = vrcp.pop %v401
      %v403 = vmul.f32 %v398, %v402
      %v404 = vpack.c.bf16 %v403, %v403
      %v406 = vunpack.c.l.b16 %v223
      %v407 = vpack.c.b16 %v406, %v406
      %408 = vrot.lane.b32.xlu0 %v407, 120
      %v409 = vpop.permute.xlu0 %408
      %v411 = vsel %vm228, %v404, 0
      %v414 = vsel %vm290, %v409, 0
      %416 = vmatprep.subr.bf16.mxu0 0
      %417 = vmatpush1.bf16.msra.mxu0 0
      %418 = vmatprep.subr.bf16.mxu0 0
      %419 = vmatpush1.bf16.msra.mxu0 0
      %420 = vmatprep.subr.bf16.mxu0 0
      %421 = vmatpush1.bf16.msra.mxu0 0
      %422 = vmatprep.subr.bf16.mxu0 0
      %423 = vmatpush1.bf16.msra.mxu0 0
      %424 = vmatprep.subr.bf16.mxu0 0
      %425 = vmatpush1.bf16.msra.mxu0 0
      %426 = vmatprep.subr.bf16.mxu0 0
      %427 = vmatpush1.bf16.msra.mxu0 0
      %428 = vmatprep.subr.bf16.mxu0 0
      %429 = vmatpush1.bf16.msra.mxu0 0
      %430 = vmatprep.subr.bf16.mxu0 0
      %431 = vmatpush1.bf16.msra.mxu0 %v414
      %432 = vmatprep.subr.bf16.mxu0 0
      %433 = vmatpush2.bf16.msra.mxu0 0
      %434 = vmatprep.subr.bf16.mxu0 0
      %435 = vmatpush2.bf16.msra.mxu0 0
      %436 = vmatprep.subr.bf16.mxu0 0
      %437 = vmatpush2.bf16.msra.mxu0 0
      %438 = vmatprep.subr.bf16.mxu0 0
      %439 = vmatpush2.bf16.msra.mxu0 0
      %440 = vmatprep.subr.bf16.mxu0 0
      %441 = vmatpush2.bf16.msra.mxu0 0
      %442 = vmatprep.subr.bf16.mxu0 0
      %443 = vmatpush2.bf16.msra.mxu0 0
      %444 = vmatprep.subr.bf16.mxu0 0
      %445 = vmatpush2.bf16.msra.mxu0 0
      %446 = vmatprep.subr.bf16.mxu0 0
      %447 = vmatpush2.bf16.msra.mxu0 0
      %448 = vmatprep.mubr.bf16.mxu0 0
      %449 = vmatmul.mubr.bf16.gmra.mxu0 %v411
      %v450 = vpop.f32.mrf.mxu0
      %v451 = vadd.f32 0.0, %v450
      %v452 = vpop.f32.mrf.mxu0
      %v453 = vpop.f32.mrf.mxu0
      %v454 = vpop.f32.mrf.mxu0
      %455 = vdwg.mxu0
      %v456 = vpack.c.bf16 %v451, %v451
      %v458 = vunpack.c.l.b16 %v456
      %v459 = vpack.c.b16 %v458, %v458
      %460 = vrot.lane.b32.xlu0 %v459, 8
      %v461 = vpop.permute.xlu0 %460
      %vm463 = vcmask 126016
      %464 = vst.msk [vmem:[%s219] sm:$0xf] %vm463, %v461
      %465 = vrot.lane.b32.xlu0 %v339, 112
      %v466 = vpop.permute.xlu0 %465
      %467 = vrot.lane.b32.xlu0 %v344, 112
      %v468 = vpop.permute.xlu0 %467
      %v470 = vsel %vm228, %v466, 0
      %v473 = vsel %vm228, %v468, 0
      %475 = vmatprep.subr.bf16.mxu0 0
      %476 = vmatpush1.bf16.xpose.msra.mxu0 0
      %477 = vmatprep.subr.bf16.mxu0 0
      %478 = vmatpush1.bf16.xpose.msra.mxu0 0
      %479 = vmatprep.subr.bf16.mxu0 0
      %480 = vmatpush1.bf16.xpose.msra.mxu0 0
      %481 = vmatprep.subr.bf16.mxu0 0
      %482 = vmatpush1.bf16.xpose.msra.mxu0 0
      %483 = vmatprep.subr.bf16.mxu0 0
      %484 = vmatpush1.bf16.xpose.msra.mxu0 0
      %485 = vmatprep.subr.bf16.mxu0 0
      %486 = vmatpush1.bf16.xpose.msra.mxu0 0
      %487 = vmatprep.subr.bf16.mxu0 0
      %488 = vmatpush1.bf16.xpose.msra.mxu0 0
      %489 = vmatprep.subr.bf16.mxu0 0
      %490 = vmatpush1.bf16.xpose.msra.mxu0 %v473
      %491 = vmatprep.subr.bf16.mxu0 0
      %492 = vmatpush2.bf16.xpose.msra.mxu0 0
      %493 = vmatprep.subr.bf16.mxu0 0
      %494 = vmatpush2.bf16.xpose.msra.mxu0 0
      %495 = vmatprep.subr.bf16.mxu0 0
      %496 = vmatpush2.bf16.xpose.msra.mxu0 0
      %497 = vmatprep.subr.bf16.mxu0 0
      %498 = vmatpush2.bf16.xpose.msra.mxu0 0
      %499 = vmatprep.subr.bf16.mxu0 0
      %500 = vmatpush2.bf16.xpose.msra.mxu0 0
      %501 = vmatprep.subr.bf16.mxu0 0
      %502 = vmatpush2.bf16.xpose.msra.mxu0 0
      %503 = vmatprep.subr.bf16.mxu0 0
      %504 = vmatpush2.bf16.xpose.msra.mxu0 0
      %505 = vmatprep.subr.bf16.mxu0 0
      %506 = vmatpush2.bf16.xpose.msra.mxu0 0
      %507 = vmatprep.mubr.bf16.mxu0 0
      %508 = vmatmul.mubr.bf16.gmra.mxu0 %v470
      %v509 = vpop.f32.mrf.mxu0
      %v510 = vadd.f32 %v227, %v509
      %v511 = vpop.f32.mrf.mxu0
      %v512 = vpop.f32.mrf.mxu0
      %v513 = vpop.f32.mrf.mxu0
      %514 = vdwg.mxu0
      %v515 = vsel %vm228, %v510, -inf
      %516 = vmax.xlane.f32.xlu0 %v515
      %v517 = vpop.xlane.xlu0 %516
      %v518 = vsub.f32 %v510, %v517
      %v519 = vmul.f32 %v518, 1.442695
      %v520 = vpow.pop %v519
      %v521 = vsel %vm228, %v520, 0.0
      %522 = vadd.xlane.f32.xlu0 %v521
      %v523 = vpop.xlane.xlu0 %522
      %v524 = vrcp.pop %v523
      %v525 = vmul.f32 %v520, %v524
      %v526 = vpack.c.bf16 %v525, %v525
      %527 = vrot.lane.b32.xlu0 %v407, 112
      %v528 = vpop.permute.xlu0 %527
      %v530 = vsel %vm228, %v526, 0
      %v533 = vsel %vm290, %v528, 0
      %535 = vmatprep.subr.bf16.mxu0 0
      %536 = vmatpush1.bf16.msra.mxu0 0
      %537 = vmatprep.subr.bf16.mxu0 0
      %538 = vmatpush1.bf16.msra.mxu0 0
      %539 = vmatprep.subr.bf16.mxu0 0
      %540 = vmatpush1.bf16.msra.mxu0 0
      %541 = vmatprep.subr.bf16.mxu0 0
      %542 = vmatpush1.bf16.msra.mxu0 0
      %543 = vmatprep.subr.bf16.mxu0 0
      %544 = vmatpush1.bf16.msra.mxu0 0
      %545 = vmatprep.subr.bf16.mxu0 0
      %546 = vmatpush1.bf16.msra.mxu0 0
      %547 = vmatprep.subr.bf16.mxu0 0
      %548 = vmatpush1.bf16.msra.mxu0 0
      %549 = vmatprep.subr.bf16.mxu0 0
      %550 = vmatpush1.bf16.msra.mxu0 %v533
      %551 = vmatprep.subr.bf16.mxu0 0
      %552 = vmatpush2.bf16.msra.mxu0 0
      %553 = vmatprep.subr.bf16.mxu0 0
      %554 = vmatpush2.bf16.msra.mxu0 0
      %555 = vmatprep.subr.bf16.mxu0 0
      %556 = vmatpush2.bf16.msra.mxu0 0
      %557 = vmatprep.subr.bf16.mxu0 0
      %558 = vmatpush2.bf16.msra.mxu0 0
      %559 = vmatprep.subr.bf16.mxu0 0
      %560 = vmatpush2.bf16.msra.mxu0 0
      %561 = vmatprep.subr.bf16.mxu0 0
      %562 = vmatpush2.bf16.msra.mxu0 0
      %563 = vmatprep.subr.bf16.mxu0 0
      %564 = vmatpush2.bf16.msra.mxu0 0
      %565 = vmatprep.subr.bf16.mxu0 0
      %566 = vmatpush2.bf16.msra.mxu0 0
      %567 = vmatprep.mubr.bf16.mxu0 0
      %568 = vmatmul.mubr.bf16.gmra.mxu0 %v530
      %v569 = vpop.f32.mrf.mxu0
      %v570 = vadd.f32 0.0, %v569
      %v571 = vpop.f32.mrf.mxu0
      %v572 = vpop.f32.mrf.mxu0
      %v573 = vpop.f32.mrf.mxu0
      %574 = vdwg.mxu0
      %v575 = vpack.c.bf16 %v570, %v570
      %v577 = vunpack.c.l.b16 %v575
      %v578 = vpack.c.b16 %v577, %v577
      %579 = vrot.lane.b32.xlu0 %v578, 16
      %v580 = vpop.permute.xlu0 %579
      %vm582 = vcmask 191616
      %583 = vst.msk [vmem:[%s219] sm:$0xf] %vm582, %v580
      %584 = vrot.lane.b32.xlu0 %v339, 104
      %v585 = vpop.permute.xlu0 %584
      %586 = vrot.lane.b32.xlu0 %v344, 104
      %v587 = vpop.permute.xlu0 %586
      %v589 = vsel %vm228, %v585, 0
      %v592 = vsel %vm228, %v587, 0
      %594 = vmatprep.subr.bf16.mxu0 0
      %595 = vmatpush1.bf16.xpose.msra.mxu0 0
      %596 = vmatprep.subr.bf16.mxu0 0
      %597 = vmatpush1.bf16.xpose.msra.mxu0 0
      %598 = vmatprep.subr.bf16.mxu0 0
      %599 = vmatpush1.bf16.xpose.msra.mxu0 0
      %600 = vmatprep.subr.bf16.mxu0 0
      %601 = vmatpush1.bf16.xpose.msra.mxu0 0
      %602 = vmatprep.subr.bf16.mxu0 0
      %603 = vmatpush1.bf16.xpose.msra.mxu0 0
      %604 = vmatprep.subr.bf16.mxu0 0
      %605 = vmatpush1.bf16.xpose.msra.mxu0 0
      %606 = vmatprep.subr.bf16.mxu0 0
      %607 = vmatpush1.bf16.xpose.msra.mxu0 0
      %608 = vmatprep.subr.bf16.mxu0 0
      %609 = vmatpush1.bf16.xpose.msra.mxu0 %v592
      %610 = vmatprep.subr.bf16.mxu0 0
      %611 = vmatpush2.bf16.xpose.msra.mxu0 0
      %612 = vmatprep.subr.bf16.mxu0 0
      %613 = vmatpush2.bf16.xpose.msra.mxu0 0
      %614 = vmatprep.subr.bf16.mxu0 0
      %615 = vmatpush2.bf16.xpose.msra.mxu0 0
      %616 = vmatprep.subr.bf16.mxu0 0
      %617 = vmatpush2.bf16.xpose.msra.mxu0 0
      %618 = vmatprep.subr.bf16.mxu0 0
      %619 = vmatpush2.bf16.xpose.msra.mxu0 0
      %620 = vmatprep.subr.bf16.mxu0 0
      %621 = vmatpush2.bf16.xpose.msra.mxu0 0
      %622 = vmatprep.subr.bf16.mxu0 0
      %623 = vmatpush2.bf16.xpose.msra.mxu0 0
      %624 = vmatprep.subr.bf16.mxu0 0
      %625 = vmatpush2.bf16.xpose.msra.mxu0 0
      %626 = vmatprep.mubr.bf16.mxu0 0
      %627 = vmatmul.mubr.bf16.gmra.mxu0 %v589
      %v628 = vpop.f32.mrf.mxu0
      %v629 = vadd.f32 %v227, %v628
      %v630 = vpop.f32.mrf.mxu0
      %v631 = vpop.f32.mrf.mxu0
      %v632 = vpop.f32.mrf.mxu0
      %633 = vdwg.mxu0
      %v634 = vsel %vm228, %v629, -inf
      %635 = vmax.xlane.f32.xlu0 %v634
      %v636 = vpop.xlane.xlu0 %635
      %v637 = vsub.f32 %v629, %v636
      %v638 = vmul.f32 %v637, 1.442695
      %v639 = vpow.pop %v638
      %v640 = vsel %vm228, %v639, 0.0
      %641 = vadd.xlane.f32.xlu0 %v640
      %v642 = vpop.xlane.xlu0 %641
      %v643 = vrcp.pop %v642
      %v644 = vmul.f32 %v639, %v643
      %v645 = vpack.c.bf16 %v644, %v644
      %646 = vrot.lane.b32.xlu0 %v407, 104
      %v647 = vpop.permute.xlu0 %646
      %v649 = vsel %vm228, %v645, 0
      %v652 = vsel %vm290, %v647, 0
      %654 = vmatprep.subr.bf16.mxu0 0
      %655 = vmatpush1.bf16.msra.mxu0 0
      %656 = vmatprep.subr.bf16.mxu0 0
      %657 = vmatpush1.bf16.msra.mxu0 0
      %658 = vmatprep.subr.bf16.mxu0 0
      %659 = vmatpush1.bf16.msra.mxu0 0
      %660 = vmatprep.subr.bf16.mxu0 0
      %661 = vmatpush1.bf16.msra.mxu0 0
      %662 = vmatprep.subr.bf16.mxu0 0
      %663 = vmatpush1.bf16.msra.mxu0 0
      %664 = vmatprep.subr.bf16.mxu0 0
      %665 = vmatpush1.bf16.msra.mxu0 0
      %666 = vmatprep.subr.bf16.mxu0 0
      %667 = vmatpush1.bf16.msra.mxu0 0
      %668 = vmatprep.subr.bf16.mxu0 0
      %669 = vmatpush1.bf16.msra.mxu0 %v652
      %670 = vmatprep.subr.bf16.mxu0 0
      %671 = vmatpush2.bf16.msra.mxu0 0
      %672 = vmatprep.subr.bf16.mxu0 0
      %673 = vmatpush2.bf16.msra.mxu0 0
      %674 = vmatprep.subr.bf16.mxu0 0
      %675 = vmatpush2.bf16.msra.mxu0 0
      %676 = vmatprep.subr.bf16.mxu0 0
      %677 = vmatpush2.bf16.msra.mxu0 0
      %678 = vmatprep.subr.bf16.mxu0 0
      %679 = vmatpush2.bf16.msra.mxu0 0
      %680 = vmatprep.subr.bf16.mxu0 0
      %681 = vmatpush2.bf16.msra.mxu0 0
      %682 = vmatprep.subr.bf16.mxu0 0
      %683 = vmatpush2.bf16.msra.mxu0 0
      %684 = vmatprep.subr.bf16.mxu0 0
      %685 = vmatpush2.bf16.msra.mxu0 0
      %686 = vmatprep.mubr.bf16.mxu0 0
      %687 = vmatmul.mubr.bf16.gmra.mxu0 %v649
      %v688 = vpop.f32.mrf.mxu0
      %v689 = vadd.f32 0.0, %v688
      %v690 = vpop.f32.mrf.mxu0
      %v691 = vpop.f32.mrf.mxu0
      %v692 = vpop.f32.mrf.mxu0
      %693 = vdwg.mxu0
      %v694 = vpack.c.bf16 %v689, %v689
      %v696 = vunpack.c.l.b16 %v694
      %v697 = vpack.c.b16 %v696, %v696
      %698 = vrot.lane.b32.xlu0 %v697, 24
      %v699 = vpop.permute.xlu0 %698
      %vm701 = vcmask 257216
      %702 = vst.msk [vmem:[%s219] sm:$0xf] %vm701, %v699
      %p703 = scmp.lt.s32.totalorder %s18, 1
      %s704 = scalar_select %p703, %s18, 1
      %p705 = scmp.lt.s32.totalorder %s19, 0
      %s706 = scalar_select %p705, %s19, 0
      %s707 = sadd.s32 %s706, %s704
      %s708 = smul.addr %s707, 4
      %s709 = scalar_lea.vmem %s3, %s708
      // Predicated region
      $region33: #{visual_transformer_forward.15} parent=31 // pred_check
        %p710 = pneg %p124
      $region34: #{visual_transformer_forward.15} parent=31 // pred_check_branch
        %712 = sbr.rel (%p710) target = $region36
      $region35: #{visual_transformer_forward.15} parent=31 // pred_region
        _
      $region36: #{visual_transformer_forward.15} parent=31 // pred_fallthru
        _
    $region32: #{visual_transformer_forward.15} parent=5 // pred_fallthru
      _
    %p713 = scmp.le.s32.totalorder 2, %s9
    // Predicated region
    $region37: #{visual_transformer_forward.15} parent=5 // pred_check
      %p714 = pneg %p713
    $region38: #{visual_transformer_forward.15} parent=5 // pred_check_branch
      %716 = sbr.rel (%p714) target = $region40
    $region39: #{visual_transformer_forward.15} parent=5 // pred_region
      %s717 = ssub.s32 %s9, 2
      // Predicated region
      $region41: #{visual_transformer_forward.15} parent=39 // pred_check
        %p718 = pneg %p130
      $region42: #{visual_transformer_forward.15} parent=39 // pred_check_branch
        %720 = sbr.rel (%p718) target = $region44
      $region43: #{visual_transformer_forward.15} parent=39 // pred_region
        %p721 = scmp.lt.s32.totalorder %s20, 1
        %s722 = scalar_select %p721, %s20, 1
        %p723 = scmp.lt.s32.totalorder %s21, 0
        %s724 = scalar_select %p723, %s21, 0
        %s725 = sadd.s32 %s724, %s722
        %s726 = smul.addr %s725, 4
        %s727 = scalar_lea.vmem %s3, %s726
      $region44: #{visual_transformer_forward.15} parent=39 // pred_fallthru
        _
    $region40: #{visual_transformer_forward.15} parent=5 // pred_fallthru
      _
  $region6: #{visual_transformer_forward.15} parent=0 // loop_footer
    %s13 = sadd.s32 1, %s9
  $region7: #{visual_transformer_forward.15} parent=0 // loop_footer_branch
    %8 = sbr.rel target = $region3
  $region8: #{visual_transformer_forward.15} parent=0 // loop_exit
    _

// kernel: visual_transformer_forward.17
$region0: #{visual_transformer_forward.17}
  #allocation0 [shape = 'u32[]', space=smem, size = 0x4, offset = 0x4, fixed_abs, tag = 'smem constant byte address 0x4 - core index']
  #allocation1 [shape = 'u32[144,128]{1,0:T(1,128)}', space=vmem, size = 0x12000, scoped, tag = 'internal scratch']
  %s0 = inlined_call_operand.vmem [shape: bf16[16,32], index: 0, kind: input, shape index: {}]
  %s1 = inlined_call_operand.vmem [shape: bf16[32,128], index: 1, kind: input, shape index: {}]
  %s2 = inlined_call_operand.vmem [shape: f32[1,128], index: 2, kind: input, shape index: {}]
  %s3 = inlined_call_operand.vmem [shape: bf16[16,128], index: 3, kind: output, shape index: {}]
  %s4 = sld [smem:[#allocation0]]
  $region22: #{visual_transformer_forward.17} parent=0
    _
  %s6 = ssub.s32 1, %s4
  %s7 = scalar_select 0, %s6, %s4
  // Predicated region
  $region2: #{visual_transformer_forward.17} parent=0 // pred_check
    _
  $region3: #{visual_transformer_forward.17} parent=0 // pred_check_branch
    %9 = sbr.rel (0) target = $region5
  $region4: #{visual_transformer_forward.17} parent=0 // pred_region
    _
  $region5: #{visual_transformer_forward.17} parent=0 // pred_fallthru
    _
  // Predicated region
  $region6: #{visual_transformer_forward.17} parent=0 // pred_check
    _
  $region7: #{visual_transformer_forward.17} parent=0 // pred_check_branch
    %11 = sbr.rel (0) target = $region9
  $region8: #{visual_transformer_forward.17} parent=0 // pred_region
    _
  $region9: #{visual_transformer_forward.17} parent=0 // pred_fallthru
    _
  // Predicated region
  $region10: #{visual_transformer_forward.17} parent=0 // pred_check
    _
  $region11: #{visual_transformer_forward.17} parent=0 // pred_check_branch
    %13 = sbr.rel (0) target = $region13
  $region12: #{visual_transformer_forward.17} parent=0 // pred_region
    _
  $region13: #{visual_transformer_forward.17} parent=0 // pred_fallthru
    _
  %v15 = vld [vmem:[%s0] sm:$0xf]
  %v16 = vld [vmem:[%s0 + $0x4] sm:$0xf]
  %v17 = vld [vmem:[%s1] sm:$0xf]
  %v18 = vld [vmem:[%s1 + $0x4] sm:$0xf]
  %v19 = vld [vmem:[%s1 + $0x8] sm:$0xf]
  %v20 = vld [vmem:[%s1 + $0xc] sm:$0xf]
  %v21 = vld [vmem:[%s2] sm:$0x1]
  %v23 = vlaneseq
  %v24 = vshrl.u32 %v23, 7
  %v25 = vsub.s32 0, %v24
  %v26 = vrot.slane %v21, %v25
  %v30 = vunpack.c.l.b16 %v15
  %v31 = vunpack.c.l.b16 %v16
  %v32 = vpack.c.b16 %v31, %v30
  %v37 = vunpack.c.l.b16 %v17
  %v38 = vunpack.c.l.b16 %v18
  %v39 = vunpack.c.l.b16 %v19
  %v40 = vunpack.c.l.b16 %v20
  %v41 = vpack.c.b16 %v38, %v37
  %v42 = vpack.c.b16 %v40, %v39
  %vm45 = vcmask 261120
  %v47 = vsel %vm45, %v32, 0
  %49 = vmatprep.subr.bf16.mxu0 0
  %50 = vmatpush1.bf16.msra.mxu0 0
  %51 = vmatprep.subr.bf16.mxu0 0
  %52 = vmatpush1.bf16.msra.mxu0 0
  %53 = vmatprep.subr.bf16.mxu0 0
  %54 = vmatpush1.bf16.msra.mxu0 0
  %55 = vmatprep.subr.bf16.mxu0 0
  %56 = vmatpush1.bf16.msra.mxu0 0
  %57 = vmatprep.subr.bf16.mxu0 0
  %58 = vmatpush1.bf16.msra.mxu0 0
  %59 = vmatprep.subr.bf16.mxu0 0
  %60 = vmatpush1.bf16.msra.mxu0 0
  %61 = vmatprep.subr.bf16.mxu0 0
  %62 = vmatpush1.bf16.msra.mxu0 %v42
  %63 = vmatprep.subr.bf16.mxu0 0
  %64 = vmatpush1.bf16.msra.mxu0 %v41
  %65 = vmatprep.subr.bf16.mxu0 0
  %66 = vmatpush2.bf16.msra.mxu0 0
  %67 = vmatprep.subr.bf16.mxu0 0
  %68 = vmatpush2.bf16.msra.mxu0 0
  %69 = vmatprep.subr.bf16.mxu0 0
  %70 = vmatpush2.bf16.msra.mxu0 0
  %71 = vmatprep.subr.bf16.mxu0 0
  %72 = vmatpush2.bf16.msra.mxu0 0
  %73 = vmatprep.subr.bf16.mxu0 0
  %74 = vmatpush2.bf16.msra.mxu0 0
  %75 = vmatprep.subr.bf16.mxu0 0
  %76 = vmatpush2.bf16.msra.mxu0 0
  %77 = vmatprep.subr.bf16.mxu0 0
  %78 = vmatpush2.bf16.msra.mxu0 0
  %79 = vmatprep.subr.bf16.mxu0 0
  %80 = vmatpush2.bf16.msra.mxu0 0
  %81 = vmatprep.mubr.bf16.mxu0 0
  %82 = vmatmul.mubr.bf16.gmra.mxu0 %v47
  %v83 = vpop.f32.mrf.mxu0
  %v84 = vadd.f32 %v26, %v83
  %v85 = vpop.f32.mrf.mxu0
  %v86 = vpop.f32.mrf.mxu0
  %v87 = vadd.f32 %v26, %v86
  %v88 = vpop.f32.mrf.mxu0
  %89 = vdwg.mxu0
  %v90 = vmul.f32 %v84, 1.702
  %v91 = vmul.f32 %v87, 1.702
  %v92 = vxor.u32 %v90, 2147483648
  %v93 = vxor.u32 %v91, 2147483648
  %v94 = vmul.f32 %v92, 1.442695
  %v95 = vpow.pop %v94
  %v96 = vmul.f32 %v93, 1.442695
  %v97 = vpow.pop %v96
  %v98 = vadd.f32 %v95, 1.0
  %v99 = vadd.f32 %v97, 1.0
  %v100 = vrcp.pop %v98
  %v101 = vmul.f32 1.0, %v100
  %v102 = vrcp.pop %v99
  %v103 = vmul.f32 1.0, %v102
  %v104 = vmul.f32 %v84, %v101
  %v105 = vmul.f32 %v87, %v103
  %v106 = vpack.c.bf16 %v105, %v104
  %v108 = vunpack.c.l.b16 %v106
  %v109 = vunpack.c.h.b16 %v106
  %v110 = vpack.c.b16 %v108, %v108
  %v111 = vpack.c.b16 %v109, %v109
  %114 = vst [vmem:[%s3] sm:$0xf] %v110
  %115 = vst [vmem:[%s3 + $0x4] sm:$0xf] %v111
  // Predicated region
  $region14: #{visual_transformer_forward.17} parent=0 // pred_check
    _
  $region15: #{visual_transformer_forward.17} parent=0 // pred_check_branch
    %117 = sbr.rel (0) target = $region17
  $region16: #{visual_transformer_forward.17} parent=0 // pred_region
    _
  $region17: #{visual_transformer_forward.17} parent=0 // pred_fallthru
    _
  // Predicated region
  $region18: #{visual_transformer_forward.17} parent=0 // pred_check
    _
  $region19: #{visual_transformer_forward.17} parent=0 // pred_check_branch
    %119 = sbr.rel (0) target = $region21
  $region20: #{visual_transformer_forward.17} parent=0 // pred_region
    _
  $region21: #{visual_transformer_forward.17} parent=0 // pred_fallthru
    _

// kernel: visual_transformer_forward.18
$region0: #{visual_transformer_forward.18}
  #allocation0 [shape = 'u32[]', space=smem, size = 0x4, offset = 0x4, fixed_abs, tag = 'smem constant byte address 0x4 - core index']
  #allocation1 [shape = 'u32[144,128]{1,0:T(1,128)}', space=vmem, size = 0x12000, scoped, tag = 'internal scratch']
  %s0 = inlined_call_operand.vmem [shape: bf16[16,128], index: 0, kind: input, shape index: {}]
  %s1 = inlined_call_operand.vmem [shape: bf16[128,32], index: 1, kind: input, shape index: {}]
  %s2 = inlined_call_operand.vmem [shape: f32[1,32], index: 2, kind: input, shape index: {}]
  %s3 = inlined_call_operand.vmem [shape: bf16[16,32], index: 3, kind: input, shape index: {}]
  %s4 = inlined_call_operand.vmem [shape: f32[1,32], index: 4, kind: input, shape index: {}]
  %s5 = inlined_call_operand.vmem [shape: f32[1,32], index: 5, kind: input, shape index: {}]
  %s6 = inlined_call_operand.vmem [shape: bf16[16,32], index: 6, kind: output, shape index: {0}]
  %s7 = inlined_call_operand.vmem [shape: bf16[16,32], index: 7, kind: output, shape index: {1}]
  %8 = xla_tuple %s6, %s7
  %s9 = sld [smem:[#allocation0]]
  $region42: #{visual_transformer_forward.18} parent=0
    _
  %s11 = ssub.s32 1, %s9
  %s12 = scalar_select 0, %s11, %s9
  // Predicated region
  $region2: #{visual_transformer_forward.18} parent=0 // pred_check
    _
  $region3: #{visual_transformer_forward.18} parent=0 // pred_check_branch
    %14 = sbr.rel (0) target = $region5
  $region4: #{visual_transformer_forward.18} parent=0 // pred_region
    _
  $region5: #{visual_transformer_forward.18} parent=0 // pred_fallthru
    _
  // Predicated region
  $region6: #{visual_transformer_forward.18} parent=0 // pred_check
    _
  $region7: #{visual_transformer_forward.18} parent=0 // pred_check_branch
    %16 = sbr.rel (0) target = $region9
  $region8: #{visual_transformer_forward.18} parent=0 // pred_region
    _
  $region9: #{visual_transformer_forward.18} parent=0 // pred_fallthru
    _
  // Predicated region
  $region10: #{visual_transformer_forward.18} parent=0 // pred_check
    _
  $region11: #{visual_transformer_forward.18} parent=0 // pred_check_branch
    %18 = sbr.rel (0) target = $region13
  $region12: #{visual_transformer_forward.18} parent=0 // pred_region
    _
  $region13: #{visual_transformer_forward.18} parent=0 // pred_fallthru
    _
  // Predicated region
  $region14: #{visual_transformer_forward.18} parent=0 // pred_check
    _
  $region15: #{visual_transformer_forward.18} parent=0 // pred_check_branch
    %20 = sbr.rel (0) target = $region17
  $region16: #{visual_transformer_forward.18} parent=0 // pred_region
    _
  $region17: #{visual_transformer_forward.18} parent=0 // pred_fallthru
    _
  // Predicated region
  $region18: #{visual_transformer_forward.18} parent=0 // pred_check
    _
  $region19: #{visual_transformer_forward.18} parent=0 // pred_check_branch
    %22 = sbr.rel (0) target = $region21
  $region20: #{visual_transformer_forward.18} parent=0 // pred_region
    _
  $region21: #{visual_transformer_forward.18} parent=0 // pred_fallthru
    _
  // Predicated region
  $region22: #{visual_transformer_forward.18} parent=0 // pred_check
    _
  $region23: #{visual_transformer_forward.18} parent=0 // pred_check_branch
    %24 = sbr.rel (0) target = $region25
  $region24: #{visual_transformer_forward.18} parent=0 // pred_region
    _
  $region25: #{visual_transformer_forward.18} parent=0 // pred_fallthru
    _
  %v26 = vld [vmem:[%s0] sm:$0xf]
  %v27 = vld [vmem:[%s0 + $0x4] sm:$0xf]
  %v28 = vld [vmem:[%s1] sm:$0xf]
  %v29 = vld [vmem:[%s1 + $0x4] sm:$0xf]
  %v30 = vld [vmem:[%s1 + $0x8] sm:$0xf]
  %v31 = vld [vmem:[%s1 + $0xc] sm:$0xf]
  %v32 = vld [vmem:[%s1 + $0x10] sm:$0xf]
  %v33 = vld [vmem:[%s1 + $0x14] sm:$0xf]
  %v34 = vld [vmem:[%s1 + $0x18] sm:$0xf]
  %v35 = vld [vmem:[%s1 + $0x1c] sm:$0xf]
  %v36 = vld [vmem:[%s1 + $0x20] sm:$0xf]
  %v37 = vld [vmem:[%s1 + $0x24] sm:$0xf]
  %v38 = vld [vmem:[%s1 + $0x28] sm:$0xf]
  %v39 = vld [vmem:[%s1 + $0x2c] sm:$0xf]
  %v40 = vld [vmem:[%s1 + $0x30] sm:$0xf]
  %v41 = vld [vmem:[%s1 + $0x34] sm:$0xf]
  %v42 = vld [vmem:[%s1 + $0x38] sm:$0xf]
  %v43 = vld [vmem:[%s1 + $0x3c] sm:$0xf]
  %v44 = vld [vmem:[%s2] sm:$0x1]
  %v46 = vlaneseq
  %v47 = vshrl.u32 %v46, 7
  %v48 = vsub.s32 0, %v47
  %v49 = vrot.slane %v44, %v48
  %v53 = vunpack.c.l.b16 %v26
  %v54 = vunpack.c.l.b16 %v27
  %v55 = vpack.c.b16 %v54, %v53
  %v73 = vunpack.c.l.b16 %v28
  %v74 = vunpack.c.l.b16 %v29
  %v75 = vunpack.c.l.b16 %v30
  %v76 = vunpack.c.l.b16 %v31
  %v77 = vunpack.c.l.b16 %v32
  %v78 = vunpack.c.l.b16 %v33
  %v79 = vunpack.c.l.b16 %v34
  %v80 = vunpack.c.l.b16 %v35
  %v81 = vunpack.c.l.b16 %v36
  %v82 = vunpack.c.l.b16 %v37
  %v83 = vunpack.c.l.b16 %v38
  %v84 = vunpack.c.l.b16 %v39
  %v85 = vunpack.c.l.b16 %v40
  %v86 = vunpack.c.l.b16 %v41
  %v87 = vunpack.c.l.b16 %v42
  %v88 = vunpack.c.l.b16 %v43
  %v89 = vpack.c.b16 %v74, %v73
  %v90 = vpack.c.b16 %v76, %v75
  %v91 = vpack.c.b16 %v78, %v77
  %v92 = vpack.c.b16 %v80, %v79
  %v93 = vpack.c.b16 %v82, %v81
  %v94 = vpack.c.b16 %v84, %v83
  %v95 = vpack.c.b16 %v86, %v85
  %v96 = vpack.c.b16 %v88, %v87
  %105 = vmatprep.subr.bf16.mxu0 0
  %106 = vmatpush1.bf16.msra.mxu0 %v96
  %107 = vmatprep.subr.bf16.mxu0 0
  %108 = vmatpush1.bf16.msra.mxu0 %v95
  %109 = vmatprep.subr.bf16.mxu0 0
  %110 = vmatpush1.bf16.msra.mxu0 %v94
  %111 = vmatprep.subr.bf16.mxu0 0
  %112 = vmatpush1.bf16.msra.mxu0 %v93
  %113 = vmatprep.subr.bf16.mxu0 0
  %114 = vmatpush1.bf16.msra.mxu0 %v92
  %115 = vmatprep.subr.bf16.mxu0 0
  %116 = vmatpush1.bf16.msra.mxu0 %v91
  %117 = vmatprep.subr.bf16.mxu0 0
  %118 = vmatpush1.bf16.msra.mxu0 %v90
  %119 = vmatprep.subr.bf16.mxu0 0
  %120 = vmatpush1.bf16.msra.mxu0 %v89
  %121 = vmatprep.subr.bf16.mxu0 0
  %122 = vmatpush2.bf16.msra.mxu0 0
  %123 = vmatprep.subr.bf16.mxu0 0
  %124 = vmatpush2.bf16.msra.mxu0 0
  %125 = vmatprep.subr.bf16.mxu0 0
  %126 = vmatpush2.bf16.msra.mxu0 0
  %127 = vmatprep.subr.bf16.mxu0 0
  %128 = vmatpush2.bf16.msra.mxu0 0
  %129 = vmatprep.subr.bf16.mxu0 0
  %130 = vmatpush2.bf16.msra.mxu0 0
  %131 = vmatprep.subr.bf16.mxu0 0
  %132 = vmatpush2.bf16.msra.mxu0 0
  %133 = vmatprep.subr.bf16.mxu0 0
  %134 = vmatpush2.bf16.msra.mxu0 0
  %135 = vmatprep.subr.bf16.mxu0 0
  %136 = vmatpush2.bf16.msra.mxu0 0
  %137 = vmatprep.mubr.bf16.mxu0 0
  %138 = vmatmul.mubr.bf16.gmra.mxu0 %v55
  %v139 = vpop.f32.mrf.mxu0
  %v140 = vadd.f32 %v49, %v139
  %v141 = vpop.f32.mrf.mxu0
  %v142 = vpop.f32.mrf.mxu0
  %v143 = vadd.f32 %v49, %v142
  %v144 = vpop.f32.mrf.mxu0
  %145 = vdwg.mxu0
  %v146 = vld [vmem:[%s3] sm:$0xf]
  %v147 = vld [vmem:[%s3 + $0x4] sm:$0xf]
  %v148 = vunpack.c.l.bf16 %v146
  %v149 = vunpack.c.l.bf16 %v147
  %v150 = vadd.f32 %v140, %v148
  %v151 = vadd.f32 %v143, %v149
  %v152 = vpack.c.bf16 %v151, %v150
  %v154 = vunpack.c.l.b16 %v152
  %v155 = vunpack.c.h.b16 %v152
  %v156 = vpack.c.b16 %v154, %v154
  %v157 = vpack.c.b16 %v155, %v155
  %vm160 = vcmask 257024
  %161 = vst.msk [vmem:[%s6] sm:$0xf] %vm160, %v156
  %162 = vst.msk [vmem:[%s6 + $0x4] sm:$0xf] %vm160, %v157
  %vm163 = vcmask 261120
  %v164 = vsel %vm163, %v150, 0.0
  %165 = vadd.xlane.f32.xlu0 %v164
  %v166 = vpop.xlane.xlu0 %165
  %v167 = vsel %vm163, %v151, 0.0
  %168 = vadd.xlane.f32.xlu0 %v167
  %v169 = vpop.xlane.xlu0 %168
  %v170 = vrcp.pop 32.0
  %v171 = vmul.f32 %v166, %v170
  %v172 = vmul.f32 %v169, %v170
  %v173 = vsub.f32 %v150, %v171
  %v174 = vsub.f32 %v151, %v172
  %v175 = vmul.f32 %v173, %v173
  %v176 = vmul.f32 %v174, %v174
  %v177 = vsel %vm163, %v175, 0.0
  %178 = vadd.xlane.f32.xlu0 %v177
  %v179 = vpop.xlane.xlu0 %178
  %v180 = vsel %vm163, %v176, 0.0
  %181 = vadd.xlane.f32.xlu0 %v180
  %v182 = vpop.xlane.xlu0 %181
  %v183 = vmul.f32 %v179, %v170
  %v184 = vmul.f32 %v182, %v170
  %v185 = vadd.f32 %v183, 1e-05
  %v186 = vadd.f32 %v184, 1e-05
  %v187 = vrsqrt.pop %v185
  %v188 = vrsqrt.pop %v186
  %v189 = vmul.f32 %v173, %v187
  %v190 = vmul.f32 %v174, %v188
  %v191 = vld [vmem:[%s4] sm:$0x1]
  %v193 = vlaneseq
  %v194 = vshrl.u32 %v193, 7
  %v195 = vsub.s32 0, %v194
  %v196 = vrot.slane %v191, %v195
  %v198 = vmul.f32 %v189, %v196
  %v199 = vmul.f32 %v190, %v196
  %v200 = vld [vmem:[%s5] sm:$0x1]
  %v202 = vlaneseq
  %v203 = vshrl.u32 %v202, 7
  %v204 = vsub.s32 0, %v203
  %v205 = vrot.slane %v200, %v204
  %v207 = vadd.f32 %v198, %v205
  %v208 = vadd.f32 %v199, %v205
  %v209 = vpack.c.bf16 %v208, %v207
  %v211 = vunpack.c.l.b16 %v209
  %v212 = vunpack.c.h.b16 %v209
  %v213 = vpack.c.b16 %v211, %v211
  %v214 = vpack.c.b16 %v212, %v212
  %217 = vst.msk [vmem:[%s7] sm:$0xf] %vm160, %v213
  %218 = vst.msk [vmem:[%s7 + $0x4] sm:$0xf] %vm160, %v214
  // Predicated region
  $region26: #{visual_transformer_forward.18} parent=0 // pred_check
    _
  $region27: #{visual_transformer_forward.18} parent=0 // pred_check_branch
    %220 = sbr.rel (0) target = $region29
  $region28: #{visual_transformer_forward.18} parent=0 // pred_region
    _
  $region29: #{visual_transformer_forward.18} parent=0 // pred_fallthru
    _
  // Predicated region
  $region30: #{visual_transformer_forward.18} parent=0 // pred_check
    _
  $region31: #{visual_transformer_forward.18} parent=0 // pred_check_branch
    %222 = sbr.rel (0) target = $region33
  $region32: #{visual_transformer_forward.18} parent=0 // pred_region
    _
  $region33: #{visual_transformer_forward.18} parent=0 // pred_fallthru
    _
  // Predicated region
  $region34: #{visual_transformer_forward.18} parent=0 // pred_check
    _
  $region35: #{visual_transformer_forward.18} parent=0 // pred_check_branch
    %224 = sbr.rel (0) target = $region37
  $region36: #{visual_transformer_forward.18} parent=0 // pred_region
    _
  $region37: #{visual_transformer_forward.18} parent=0 // pred_fallthru
    _
  // Predicated region
  $region38: #{visual_transformer_forward.18} parent=0 // pred_check
    _
  $region39: #{visual_transformer_forward.18} parent=0 // pred_check_branch
    %226 = sbr.rel (0) target = $region41
  $region40: #{visual_transformer_forward.18} parent=0 // pred_region
    _
  $region41: #{visual_transformer_forward.18} parent=0 // pred_fallthru
    _

// kernel: visual_transformer_forward.23
$region0: #{visual_transformer_forward.23}
  #allocation0 [shape = 'u32[]', space=smem, size = 0x4, offset = 0x4, fixed_abs, tag = 'smem constant byte address 0x4 - core index']
  #allocation1 [shape = 'u32[144,128]{1,0:T(1,128)}', space=vmem, size = 0x12000, scoped, tag = 'internal scratch']
  %s0 = inlined_call_operand.vmem [shape: bf16[16,128], index: 0, kind: input, shape index: {}]
  %s1 = inlined_call_operand.vmem [shape: bf16[128,32], index: 1, kind: input, shape index: {}]
  %s2 = inlined_call_operand.vmem [shape: f32[1,32], index: 2, kind: input, shape index: {}]
  %s3 = inlined_call_operand.vmem [shape: bf16[16,32], index: 3, kind: input, shape index: {}]
  %s4 = inlined_call_operand.vmem [shape: f32[1,32], index: 4, kind: input, shape index: {}]
  %s5 = inlined_call_operand.vmem [shape: f32[1,32], index: 5, kind: input, shape index: {}]
  %s6 = inlined_call_operand.hbm [shape: bf16[16,32], index: 6, kind: output, shape index: {0}]
  %s7 = inlined_call_operand.vmem [shape: f32[16,32], index: 7, kind: output, shape index: {1}]
  %8 = xla_tuple %s6, %s7
  %s9 = sld [smem:[#allocation0]]
  $region42: #{visual_transformer_forward.23} parent=0
    _
  %s11 = ssub.s32 1, %s9
  %s12 = scalar_select 0, %s11, %s9
  $region1: #{visual_transformer_forward.23} parent=0
    #allocation2 [shape = 'u8[4096]{0}', space=vmem, size = 0x1000, scoped, tag = 'output window, operand 0, single buffered']
    #allocation3 [shape = 's32[1]{0}', space=sflag, size = 0x4, scoped, tag = 'scoped memory for visual_transformer_forward.23']
    %13 = vsyncpa [#allocation3], 0
    // Predicated region
    $region2: #{visual_transformer_forward.23} parent=1 // pred_check
      _
    $region3: #{visual_transformer_forward.23} parent=1 // pred_check_branch
      %15 = sbr.rel (0) target = $region5
    $region4: #{visual_transformer_forward.23} parent=1 // pred_region
      _
    $region5: #{visual_transformer_forward.23} parent=1 // pred_fallthru
      _
    // Predicated region
    $region6: #{visual_transformer_forward.23} parent=1 // pred_check
      _
    $region7: #{visual_transformer_forward.23} parent=1 // pred_check_branch
      %17 = sbr.rel (0) target = $region9
    $region8: #{visual_transformer_forward.23} parent=1 // pred_region
      _
    $region9: #{visual_transformer_forward.23} parent=1 // pred_fallthru
      _
    // Predicated region
    $region10: #{visual_transformer_forward.23} parent=1 // pred_check
      _
    $region11: #{visual_transformer_forward.23} parent=1 // pred_check_branch
      %19 = sbr.rel (0) target = $region13
    $region12: #{visual_transformer_forward.23} parent=1 // pred_region
      _
    $region13: #{visual_transformer_forward.23} parent=1 // pred_fallthru
      _
    // Predicated region
    $region14: #{visual_transformer_forward.23} parent=1 // pred_check
      _
    $region15: #{visual_transformer_forward.23} parent=1 // pred_check_branch
      %21 = sbr.rel (0) target = $region17
    $region16: #{visual_transformer_forward.23} parent=1 // pred_region
      _
    $region17: #{visual_transformer_forward.23} parent=1 // pred_fallthru
      _
    // Predicated region
    $region18: #{visual_transformer_forward.23} parent=1 // pred_check
      _
    $region19: #{visual_transformer_forward.23} parent=1 // pred_check_branch
      %23 = sbr.rel (0) target = $region21
    $region20: #{visual_transformer_forward.23} parent=1 // pred_region
      _
    $region21: #{visual_transformer_forward.23} parent=1 // pred_fallthru
      _
    // Predicated region
    $region22: #{visual_transformer_forward.23} parent=1 // pred_check
      _
    $region23: #{visual_transformer_forward.23} parent=1 // pred_check_branch
      %25 = sbr.rel (0) target = $region25
    $region24: #{visual_transformer_forward.23} parent=1 // pred_region
      _
    $region25: #{visual_transformer_forward.23} parent=1 // pred_fallthru
      _
    %v27 = vld [vmem:[%s0] sm:$0xf]
    %v28 = vld [vmem:[%s0 + $0x4] sm:$0xf]
    %v29 = vld [vmem:[%s1] sm:$0xf]
    %v30 = vld [vmem:[%s1 + $0x4] sm:$0xf]
    %v31 = vld [vmem:[%s1 + $0x8] sm:$0xf]
    %v32 = vld [vmem:[%s1 + $0xc] sm:$0xf]
    %v33 = vld [vmem:[%s1 + $0x10] sm:$0xf]
    %v34 = vld [vmem:[%s1 + $0x14] sm:$0xf]
    %v35 = vld [vmem:[%s1 + $0x18] sm:$0xf]
    %v36 = vld [vmem:[%s1 + $0x1c] sm:$0xf]
    %v37 = vld [vmem:[%s1 + $0x20] sm:$0xf]
    %v38 = vld [vmem:[%s1 + $0x24] sm:$0xf]
    %v39 = vld [vmem:[%s1 + $0x28] sm:$0xf]
    %v40 = vld [vmem:[%s1 + $0x2c] sm:$0xf]
    %v41 = vld [vmem:[%s1 + $0x30] sm:$0xf]
    %v42 = vld [vmem:[%s1 + $0x34] sm:$0xf]
    %v43 = vld [vmem:[%s1 + $0x38] sm:$0xf]
    %v44 = vld [vmem:[%s1 + $0x3c] sm:$0xf]
    %v45 = vld [vmem:[%s2] sm:$0x1]
    %v47 = vlaneseq
    %v48 = vshrl.u32 %v47, 7
    %v49 = vsub.s32 0, %v48
    %v50 = vrot.slane %v45, %v49
    %v54 = vunpack.c.l.b16 %v27
    %v55 = vunpack.c.l.b16 %v28
    %v56 = vpack.c.b16 %v55, %v54
    %v74 = vunpack.c.l.b16 %v29
    %v75 = vunpack.c.l.b16 %v30
    %v76 = vunpack.c.l.b16 %v31
    %v77 = vunpack.c.l.b16 %v32
    %v78 = vunpack.c.l.b16 %v33
    %v79 = vunpack.c.l.b16 %v34
    %v80 = vunpack.c.l.b16 %v35
    %v81 = vunpack.c.l.b16 %v36
    %v82 = vunpack.c.l.b16 %v37
    %v83 = vunpack.c.l.b16 %v38
    %v84 = vunpack.c.l.b16 %v39
    %v85 = vunpack.c.l.b16 %v40
    %v86 = vunpack.c.l.b16 %v41
    %v87 = vunpack.c.l.b16 %v42
    %v88 = vunpack.c.l.b16 %v43
    %v89 = vunpack.c.l.b16 %v44
    %v90 = vpack.c.b16 %v75, %v74
    %v91 = vpack.c.b16 %v77, %v76
    %v92 = vpack.c.b16 %v79, %v78
    %v93 = vpack.c.b16 %v81, %v80
    %v94 = vpack.c.b16 %v83, %v82
    %v95 = vpack.c.b16 %v85, %v84
    %v96 = vpack.c.b16 %v87, %v86
    %v97 = vpack.c.b16 %v89, %v88
    %106 = vmatprep.subr.bf16.mxu0 0
    %107 = vmatpush1.bf16.msra.mxu0 %v97
    %108 = vmatprep.subr.bf16.mxu0 0
    %109 = vmatpush1.bf16.msra.mxu0 %v96
    %110 = vmatprep.subr.bf16.mxu0 0
    %111 = vmatpush1.bf16.msra.mxu0 %v95
    %112 = vmatprep.subr.bf16.mxu0 0
    %113 = vmatpush1.bf16.msra.mxu0 %v94
    %114 = vmatprep.subr.bf16.mxu0 0
    %115 = vmatpush1.bf16.msra.mxu0 %v93
    %116 = vmatprep.subr.bf16.mxu0 0
    %117 = vmatpush1.bf16.msra.mxu0 %v92
    %118 = vmatprep.subr.bf16.mxu0 0
    %119 = vmatpush1.bf16.msra.mxu0 %v91
    %120 = vmatprep.subr.bf16.mxu0 0
    %121 = vmatpush1.bf16.msra.mxu0 %v90
    %122 = vmatprep.subr.bf16.mxu0 0
    %123 = vmatpush2.bf16.msra.mxu0 0
    %124 = vmatprep.subr.bf16.mxu0 0
    %125 = vmatpush2.bf16.msra.mxu0 0
    %126 = vmatprep.subr.bf16.mxu0 0
    %127 = vmatpush2.bf16.msra.mxu0 0
    %128 = vmatprep.subr.bf16.mxu0 0
    %129 = vmatpush2.bf16.msra.mxu0 0
    %130 = vmatprep.subr.bf16.mxu0 0
    %131 = vmatpush2.bf16.msra.mxu0 0
    %132 = vmatprep.subr.bf16.mxu0 0
    %133 = vmatpush2.bf16.msra.mxu0 0
    %134 = vmatprep.subr.bf16.mxu0 0
    %135 = vmatpush2.bf16.msra.mxu0 0
    %136 = vmatprep.subr.bf16.mxu0 0
    %137 = vmatpush2.bf16.msra.mxu0 0
    %138 = vmatprep.mubr.bf16.mxu0 0
    %139 = vmatmul.mubr.bf16.gmra.mxu0 %v56
    %v140 = vpop.f32.mrf.mxu0
    %v141 = vadd.f32 %v50, %v140
    %v142 = vpop.f32.mrf.mxu0
    %v143 = vpop.f32.mrf.mxu0
    %v144 = vadd.f32 %v50, %v143
    %v145 = vpop.f32.mrf.mxu0
    %146 = vdwg.mxu0
    %v147 = vld [vmem:[%s3] sm:$0xf]
    %v148 = vld [vmem:[%s3 + $0x4] sm:$0xf]
    %v149 = vunpack.c.l.bf16 %v147
    %v150 = vunpack.c.l.bf16 %v148
    %v151 = vadd.f32 %v141, %v149
    %v152 = vadd.f32 %v144, %v150
    %v153 = vpack.c.bf16 %v152, %v151
    %v155 = vunpack.c.l.b16 %v153
    %v156 = vunpack.c.h.b16 %v153
    %v157 = vpack.c.b16 %v155, %v155
    %v158 = vpack.c.b16 %v156, %v156
    %vm161 = vcmask 257024
    %162 = vst.msk [vmem:[#allocation2] sm:$0xf] %vm161, %v157
    %163 = vst.msk [vmem:[#allocation2 + $0x4] sm:$0xf] %vm161, %v158
    %vm164 = vcmask 261120
    %v165 = vsel %vm164, %v151, 0.0
    %166 = vadd.xlane.f32.xlu0 %v165
    %v167 = vpop.xlane.xlu0 %166
    %v168 = vsel %vm164, %v152, 0.0
    %169 = vadd.xlane.f32.xlu0 %v168
    %v170 = vpop.xlane.xlu0 %169
    %v171 = vrcp.pop 32.0
    %v172 = vmul.f32 %v167, %v171
    %v173 = vmul.f32 %v170, %v171
    %v174 = vsub.f32 %v151, %v172
    %v175 = vsub.f32 %v152, %v173
    %v176 = vmul.f32 %v174, %v174
    %v177 = vmul.f32 %v175, %v175
    %v178 = vsel %vm164, %v176, 0.0
    %179 = vadd.xlane.f32.xlu0 %v178
    %v180 = vpop.xlane.xlu0 %179
    %v181 = vsel %vm164, %v177, 0.0
    %182 = vadd.xlane.f32.xlu0 %v181
    %v183 = vpop.xlane.xlu0 %182
    %v184 = vmul.f32 %v180, %v171
    %v185 = vmul.f32 %v183, %v171
    %v186 = vadd.f32 %v184, 1e-05
    %v187 = vadd.f32 %v185, 1e-05
    %v188 = vrsqrt.pop %v186
    %v189 = vrsqrt.pop %v187
    %v190 = vmul.f32 %v174, %v188
    %v191 = vmul.f32 %v175, %v189
    %v192 = vld [vmem:[%s4] sm:$0x1]
    %v194 = vlaneseq
    %v195 = vshrl.u32 %v194, 7
    %v196 = vsub.s32 0, %v195
    %v197 = vrot.slane %v192, %v196
    %v199 = vmul.f32 %v190, %v197
    %v200 = vmul.f32 %v191, %v197
    %v201 = vld [vmem:[%s5] sm:$0x1]
    %v203 = vlaneseq
    %v204 = vshrl.u32 %v203, 7
    %v205 = vsub.s32 0, %v204
    %v206 = vrot.slane %v201, %v205
    %v208 = vadd.f32 %v199, %v206
    %v209 = vadd.f32 %v200, %v206
    %210 = vst.msk [vmem:[%s7] sm:$0xff] %vm164, %v208
    %211 = vst.msk [vmem:[%s7 + $0x8] sm:$0xff] %vm164, %v209
    // Predicated region
    $region26: #{visual_transformer_forward.23} parent=1 // pred_check
      _
    $region27: #{visual_transformer_forward.23} parent=1 // pred_check_branch
      %213 = sbr.rel (0) target = $region29
    $region28: #{visual_transformer_forward.23} parent=1 // pred_region
      %s215 = ssub.s32 128, 128
      %216 = vsyncadd [#allocation3], %s215
      %s217 = sshll.u32 [#allocation2], 4
      %s218 = int_to_ptr.vmem [resolvable:$true] %s217
      %223 = dma.vmem_to_hbm [thread:$0]  %s218, 128, %s6, [#allocation3], 64, 64, 4
    $region29: #{visual_transformer_forward.23} parent=1 // pred_fallthru
      _
    // Predicated region
    $region30: #{visual_transformer_forward.23} parent=1 // pred_check
      _
    $region31: #{visual_transformer_forward.23} parent=1 // pred_check_branch
      %225 = sbr.rel (0) target = $region33
    $region32: #{visual_transformer_forward.23} parent=1 // pred_region
      _
    $region33: #{visual_transformer_forward.23} parent=1 // pred_fallthru
      _
    // Predicated region
    $region34: #{visual_transformer_forward.23} parent=1 // pred_check
      _
    $region35: #{visual_transformer_forward.23} parent=1 // pred_check_branch
      %227 = sbr.rel (0) target = $region37
    $region36: #{visual_transformer_forward.23} parent=1 // pred_region
      %228 = dma.done [#allocation3], 128
    $region37: #{visual_transformer_forward.23} parent=1 // pred_fallthru
      _
    // Predicated region
    $region38: #{visual_transformer_forward.23} parent=1 // pred_check
      _
    $region39: #{visual_transformer_forward.23} parent=1 // pred_check_branch
      %230 = sbr.rel (0) target = $region41
    $region40: #{visual_transformer_forward.23} parent=1 // pred_region
      _
    $region41: #{visual_transformer_forward.23} parent=1 // pred_fallthru
      _
    %231 = vsyncpa [#allocation3], 1

</llo_original>
